<compile_context>
chip_gen: v6e
topology: v6e:2x2x1
jax: 0.10.0
libtpu: 0.0.40
codegen_flags: <defaults>
</compile_context>

<pallas_src>
import math

import jax
import jax.numpy as jnp
from jax.experimental import pallas as pl
from jax.experimental.pallas import tpu as pltpu

EPS = 1e-5


def _round_up(x, m):
    return ((x + m - 1) // m) * m


def _pick_row_tile(H, W, target_rows=2048):
    """Pick TILE_H (a divisor of H) so that TILE_H * W output pixels <= ~target_rows."""
    th = H
    while th % 2 == 0 and th * W > target_rows:
        th //= 2
    return th


def attention_refinement(x_nchw, w_conv, gamma1, beta1, w_atten, gamma2, beta2):
    f32 = jnp.float32
    N, Cin, H, W = x_nchw.shape
    Cout = w_conv.shape[0]
    Cin_p = _round_up(max(Cin, 8), 8)      # pad contraction dim to sublane multiple
    Cp = _round_up(Cout, 128)              # pad channels to lane-dense 128 multiple

    TH = _pick_row_tile(H, W)
    T = H // TH
    MT = TH * W                            # output pixels per grid step

    # ----------------- glue: layout & padding (no im2col materialization) ------
    x_nhwc = jnp.transpose(x_nchw, (0, 2, 3, 1)).astype(f32)
    xp = jnp.pad(x_nhwc, ((0, 0), (1, 1), (1, 1), (0, Cin_p - Cin)))   # (N,H+2,W+2,Cin_p)
    # Three kh-shifted row views: row-tile i of x_sh[kh] holds exactly the rows the
    # vertical tap kh needs for output rows [i*TH, (i+1)*TH)  -> plain Blocked specs.
    x_sh = [xp[:, kh:kh + H, :, :] for kh in range(3)]                 # (N,H,W+2,Cin_p)

    # conv weight (Cout, Cin, 3, 3) -> (9, Cin_p, Cp), zero padded
    wk = jnp.transpose(w_conv.astype(f32), (2, 3, 1, 0)).reshape(9, Cin, Cout)
    wk = jnp.pad(wk, ((0, 0), (0, Cin_p - Cin), (0, Cp - Cout)))

    # ----------------- pass 1: conv (9 MXU matmuls) + per-tile BN partial sums --
    def conv_stats_kernel(x0_ref, x1_ref, x2_ref, w_ref, y_ref, st_ref):
        xrefs = (x0_ref, x1_ref, x2_ref)
        acc = jnp.zeros((MT, Cp), jnp.float32)
        for kh in range(3):
            for kw in range(3):
                tap = xrefs[kh][0, :, kw:kw + W, :].reshape(MT, Cin_p)
                acc = acc + jnp.dot(tap, w_ref[kh * 3 + kw],
                                    preferred_element_type=jnp.float32)
        y_ref[0] = acc.reshape(TH, W, Cp)
        # Row reduction on the MXU (ones-row matmul) instead of an XLU axis-0 sweep.
        ones_r = jnp.ones((1, MT), jnp.float32)
        s = jnp.dot(ones_r, acc, preferred_element_type=jnp.float32)          # (1, Cp)
        ss = jnp.dot(ones_r, acc * acc, preferred_element_type=jnp.float32)   # (1, Cp)
        st_ref[0, 0] = jnp.concatenate([s, ss], axis=0)                       # (2, Cp)

    y4, stats = pl.pallas_call(
        conv_stats_kernel,
        out_shape=(jax.ShapeDtypeStruct((N, H, W, Cp), f32),
                   jax.ShapeDtypeStruct((N, T, 2, Cp), f32)),
        grid=(N, T),
        in_specs=[
            pl.BlockSpec((1, TH, W + 2, Cin_p), lambda n, i: (n, i, 0, 0)),
            pl.BlockSpec((1, TH, W + 2, Cin_p), lambda n, i: (n, i, 0, 0)),
            pl.BlockSpec((1, TH, W + 2, Cin_p), lambda n, i: (n, i, 0, 0)),
            pl.BlockSpec((9, Cin_p, Cp), lambda n, i: (0, 0, 0)),
        ],
        out_specs=(
            pl.BlockSpec((1, TH, W, Cp), lambda n, i: (n, i, 0, 0)),
            pl.BlockSpec((1, 1, 2, Cp), lambda n, i: (n, i, 0, 0)),
        ),
        compiler_params=pltpu.CompilerParams(
            dimension_semantics=("parallel", "parallel")),
    )(x_sh[0], x_sh[1], x_sh[2], wk)

    # ----------------- tiny per-channel folding of BN1 (O(Cp) glue) -------------
    cnt = float(N * H * W)
    tot = jnp.sum(stats, axis=(0, 1))                         # (2, Cp)
    mean1 = tot[0] / cnt
    var1 = jnp.maximum(tot[1] / cnt - mean1 * mean1, 0.0)     # biased variance (train mode)
    g1 = jnp.pad(gamma1.astype(f32), (0, Cp - Cout))
    b1 = jnp.pad(beta1.astype(f32), (0, Cp - Cout))
    inv1 = g1 * jax.lax.rsqrt(var1 + EPS)
    scale1 = inv1.reshape(1, Cp)
    shift1 = (b1 - mean1 * inv1).reshape(1, Cp)

    # ----------------- pass 2: fused BN+ReLU, write feat, pooled partial sums ---
    def bn_relu_pool_kernel(y_ref, sc_ref, sh_ref, feat_ref, pool_ref):
        y = y_ref[0].reshape(MT, Cp)
        f = jnp.maximum(y * sc_ref[...] + sh_ref[...], 0.0)
        feat_ref[0] = f.reshape(TH, W, Cp)
        ones_r = jnp.ones((1, MT), jnp.float32)
        pool_ref[0, 0] = jnp.dot(ones_r, f, preferred_element_type=jnp.float32)

    feat4, pool_parts = pl.pallas_call(
        bn_relu_pool_kernel,
        out_shape=(jax.ShapeDtypeStruct((N, H, W, Cp), f32),
                   jax.ShapeDtypeStruct((N, T, 1, Cp), f32)),
        grid=(N, T),
        in_specs=[
            pl.BlockSpec((1, TH, W, Cp), lambda n, i: (n, i, 0, 0)),
            pl.BlockSpec((1, Cp), lambda n, i: (0, 0)),
            pl.BlockSpec((1, Cp), lambda n, i: (0, 0)),
        ],
        out_specs=(
            pl.BlockSpec((1, TH, W, Cp), lambda n, i: (n, i, 0, 0)),
            pl.BlockSpec((1, 1, 1, Cp), lambda n, i: (n, i, 0, 0)),
        ),
        compiler_params=pltpu.CompilerParams(
            dimension_semantics=("parallel", "parallel")),
    )(y4, scale1, shift1)

    pooled = jnp.sum(pool_parts, axis=1)[:, 0, :] / float(H * W)     # (N, Cp)

    # ----------------- attention branch: 1x1 conv + BN(batch) + sigmoid ---------
    wa2 = jnp.pad(jnp.transpose(w_atten[:, :, 0, 0].astype(f32), (1, 0)),
                  ((0, Cp - Cout), (0, Cp - Cout)))                   # (Cp, Cp)
    g2 = jnp.pad(gamma2.astype(f32), (0, Cp - Cout)).reshape(1, Cp)
    b2 = jnp.pad(beta2.astype(f32), (0, Cp - Cout)).reshape(1, Cp)

    def atten_kernel(p_ref, w_ref, g_ref, b_ref, a_ref):
        pre = jnp.dot(p_ref[...], w_ref[...], preferred_element_type=jnp.float32)
        mu = jnp.mean(pre, axis=0, keepdims=True)
        var = jnp.mean(jnp.square(pre - mu), axis=0, keepdims=True)
        z = (pre - mu) * jax.lax.rsqrt(var + EPS) * g_ref[...] + b_ref[...]
        a_ref[...] = 1.0 / (1.0 + jnp.exp(-z))

    atten = pl.pallas_call(
        atten_kernel,
        out_shape=jax.ShapeDtypeStruct((N, Cp), f32),
        in_specs=[pl.BlockSpec((N, Cp), lambda: (0, 0)),
                  pl.BlockSpec((Cp, Cp), lambda: (0, 0)),
                  pl.BlockSpec((1, Cp), lambda: (0, 0)),
                  pl.BlockSpec((1, Cp), lambda: (0, 0))],
        out_specs=pl.BlockSpec((N, Cp), lambda: (0, 0)),
    )(pooled, wa2, g2, b2)

    # ----------------- pass 3: out = feat * atten (broadcast over H, W) ---------
    def scale_kernel(feat_ref, a_ref, o_ref):
        o_ref[0] = feat_ref[0] * a_ref[0]

    out4 = pl.pallas_call(
        scale_kernel,
        out_shape=jax.ShapeDtypeStruct((N, H, W, Cp), f32),
        grid=(N, T),
        in_specs=[
            pl.BlockSpec((1, TH, W, Cp), lambda n, i: (n, i, 0, 0)),
            pl.BlockSpec((1, 1, Cp), lambda n, i: (n, 0, 0)),
        ],
        out_specs=pl.BlockSpec((1, TH, W, Cp), lambda n, i: (n, i, 0, 0)),
        compiler_params=pltpu.CompilerParams(
            dimension_semantics=("parallel", "parallel")),
    )(feat4, atten.reshape(N, 1, Cp))

    # ----------------- glue: back to NCHW, drop channel padding -----------------
    return jnp.transpose(out4[:, :, :, :Cout], (0, 3, 1, 2))


def reference(x, w_conv, gamma1, beta1, w_atten, gamma2, beta2):
    """Pure-JAX reference matching PyTorch AttentionRefinementModule (training-mode BN)."""
    y = jax.lax.conv_general_dilated(
        x, w_conv, (1, 1), ((1, 1), (1, 1)),
        dimension_numbers=("NCHW", "OIHW", "NCHW"))
    m = jnp.mean(y, axis=(0, 2, 3), keepdims=True)
    v = jnp.mean(jnp.square(y - m), axis=(0, 2, 3), keepdims=True)
    feat = (y - m) * jax.lax.rsqrt(v + EPS) * gamma1.reshape(1, -1, 1, 1) + beta1.reshape(1, -1, 1, 1)
    feat = jnp.maximum(feat, 0.0)
    att = jnp.mean(feat, axis=(2, 3), keepdims=True)                   # global avg pool
    att = jax.lax.conv_general_dilated(
        att, w_atten, (1, 1), ((0, 0), (0, 0)),
        dimension_numbers=("NCHW", "OIHW", "NCHW"))
    m2 = jnp.mean(att, axis=(0, 2, 3), keepdims=True)
    v2 = jnp.mean(jnp.square(att - m2), axis=(0, 2, 3), keepdims=True)
    att = (att - m2) * jax.lax.rsqrt(v2 + EPS) * gamma2.reshape(1, -1, 1, 1) + beta2.reshape(1, -1, 1, 1)
    att = jax.nn.sigmoid(att)
    return feat * att


if __name__ == "__main__":
    key = jax.random.PRNGKey(0)
    kx, kw1, kw2 = jax.random.split(key, 3)

    N, Cin, Cout, H, W = 2, 4, 8, 16, 16

    x = jax.random.normal(kx, (N, Cin, H, W), dtype=jnp.float32)

    # kaiming_normal_(a=1): gain = sqrt(2/(1+1^2)) = 1, std = gain / sqrt(fan_in)
    std1 = 1.0 / math.sqrt(Cin * 3 * 3)
    w_conv = jax.random.normal(kw1, (Cout, Cin, 3, 3), dtype=jnp.float32) * std1
    std2 = 1.0 / math.sqrt(Cout * 1 * 1)
    w_att = jax.random.normal(kw2, (Cout, Cout, 1, 1), dtype=jnp.float32) * std2

    gamma1 = jnp.ones((Cout,), jnp.float32)   # BatchNorm2d default weight
    beta1 = jnp.zeros((Cout,), jnp.float32)   # BatchNorm2d default bias
    gamma2 = jnp.ones((Cout,), jnp.float32)
    beta2 = jnp.zeros((Cout,), jnp.float32)

    out = jax.block_until_ready(
        jax.jit(attention_refinement)(x, w_conv, gamma1, beta1, w_att, gamma2, beta2))
    ref = jax.block_until_ready(
        reference(x, w_conv, gamma1, beta1, w_att, gamma2, beta2))

    assert out.shape == (N, Cout, H, W), out.shape
    err = float(jnp.max(jnp.abs(out - ref)))
    # Batch-stat BN over only N=2 samples in the attention branch amplifies fp rounding
    # when the two samples are nearly equal, hence the slightly relaxed tolerance.
    assert jnp.allclose(out, ref, atol=2e-3, rtol=2e-3), err

    print("KERNEL_OK")
</pallas_src>

<mosaic_0001>
module attributes {stable_mosaic.version = 11 : i64} {
  func.func @conv_stats_kernel(%arg0: i32, %arg1: i32, %arg2: memref<1x16x18x8xf32, #tpu.memory_space<vmem>>, %arg3: memref<1x16x18x8xf32, #tpu.memory_space<vmem>>, %arg4: memref<1x16x18x8xf32, #tpu.memory_space<vmem>>, %arg5: memref<9x8x128xf32, #tpu.memory_space<vmem>>, %arg6: memref<1x16x16x128xf32, #tpu.memory_space<vmem>>, %arg7: memref<1x1x2x128xf32, #tpu.memory_space<vmem>>) attributes {dimension_semantics = [#tpu.dimension_semantics<parallel>, #tpu.dimension_semantics<parallel>], iteration_bounds = array<i64: 2, 1>, scalar_prefetch = 0 : i64, scratch_operands = 0 : i64, tpu.core_type = #tpu.core_type<tc>, window_params = [{transform_indices = @transform_0, window_bounds = array<i64: 1, 16, 18, 8>}, {transform_indices = @transform_1, window_bounds = array<i64: 1, 16, 18, 8>}, {transform_indices = @transform_2, window_bounds = array<i64: 1, 16, 18, 8>}, {pipeline_mode = #tpu.pipeline_mode<synchronous>, transform_indices = @transform_3, window_bounds = array<i64: 9, 8, 128>}, {transform_indices = @transform_4, window_bounds = array<i64: 1, 16, 16, 128>}, {transform_indices = @transform_5, window_bounds = array<i64: 1, 1, 2, 128>}]} {
    %cst = arith.constant 0.000000e+00 : f32
    %0 = vector.broadcast %cst : f32 to vector<256x128xf32>
    %c0 = arith.constant 0 : index
    %c0_0 = arith.constant 0 : index
    %c0_1 = arith.constant 0 : index
    %c0_2 = arith.constant 0 : index
    %1 = vector.load %arg2[%c0, %c0_0, %c0_1, %c0_2] : memref<1x16x18x8xf32, #tpu.memory_space<vmem>>, vector<1x16x16x8xf32>
    %2 = vector.shape_cast %1 : vector<1x16x16x8xf32> to vector<16x16x8xf32>
    %3 = vector.shape_cast %2 : vector<16x16x8xf32> to vector<256x8xf32>
    %c0_3 = arith.constant 0 : index
    %c0_4 = arith.constant 0 : index
    %c0_5 = arith.constant 0 : index
    %4 = vector.load %arg5[%c0_3, %c0_4, %c0_5] : memref<9x8x128xf32, #tpu.memory_space<vmem>>, vector<1x8x128xf32>
    %5 = vector.shape_cast %4 : vector<1x8x128xf32> to vector<8x128xf32>
    %cst_6 = arith.constant dense<0.000000e+00> : vector<256x128xf32>
    %6 = tpu.matmul %3, %5, %cst_6 {dimension_numbers = #tpu.dot_dimension_numbers<[1], [0], [0], [1], [0, 0, 1, 1], [], []>} : vector<256x8xf32>, vector<8x128xf32>, vector<256x128xf32> -> vector<256x128xf32>
    %7 = arith.addf %0, %6 : vector<256x128xf32>
    %c0_7 = arith.constant 0 : index
    %c0_8 = arith.constant 0 : index
    %c1 = arith.constant 1 : index
    %c0_9 = arith.constant 0 : index
    %8 = vector.load %arg2[%c0_7, %c0_8, %c1, %c0_9] : memref<1x16x18x8xf32, #tpu.memory_space<vmem>>, vector<1x16x16x8xf32>
    %9 = vector.shape_cast %8 : vector<1x16x16x8xf32> to vector<16x16x8xf32>
    %10 = vector.shape_cast %9 : vector<16x16x8xf32> to vector<256x8xf32>
    %c1_10 = arith.constant 1 : index
    %c0_11 = arith.constant 0 : index
    %c0_12 = arith.constant 0 : index
    %11 = vector.load %arg5[%c1_10, %c0_11, %c0_12] : memref<9x8x128xf32, #tpu.memory_space<vmem>>, vector<1x8x128xf32>
    %12 = vector.shape_cast %11 : vector<1x8x128xf32> to vector<8x128xf32>
    %cst_13 = arith.constant dense<0.000000e+00> : vector<256x128xf32>
    %13 = tpu.matmul %10, %12, %cst_13 {dimension_numbers = #tpu.dot_dimension_numbers<[1], [0], [0], [1], [0, 0, 1, 1], [], []>} : vector<256x8xf32>, vector<8x128xf32>, vector<256x128xf32> -> vector<256x128xf32>
    %14 = arith.addf %7, %13 : vector<256x128xf32>
    %c0_14 = arith.constant 0 : index
    %c0_15 = arith.constant 0 : index
    %c2 = arith.constant 2 : index
    %c0_16 = arith.constant 0 : index
    %15 = vector.load %arg2[%c0_14, %c0_15, %c2, %c0_16] : memref<1x16x18x8xf32, #tpu.memory_space<vmem>>, vector<1x16x16x8xf32>
    %16 = vector.shape_cast %15 : vector<1x16x16x8xf32> to vector<16x16x8xf32>
    %17 = vector.shape_cast %16 : vector<16x16x8xf32> to vector<256x8xf32>
    %c2_17 = arith.constant 2 : index
    %c0_18 = arith.constant 0 : index
    %c0_19 = arith.constant 0 : index
    %18 = vector.load %arg5[%c2_17, %c0_18, %c0_19] : memref<9x8x128xf32, #tpu.memory_space<vmem>>, vector<1x8x128xf32>
    %19 = vector.shape_cast %18 : vector<1x8x128xf32> to vector<8x128xf32>
    %cst_20 = arith.constant dense<0.000000e+00> : vector<256x128xf32>
    %20 = tpu.matmul %17, %19, %cst_20 {dimension_numbers = #tpu.dot_dimension_numbers<[1], [0], [0], [1], [0, 0, 1, 1], [], []>} : vector<256x8xf32>, vector<8x128xf32>, vector<256x128xf32> -> vector<256x128xf32>
    %21 = arith.addf %14, %20 : vector<256x128xf32>
    %c0_21 = arith.constant 0 : index
    %c0_22 = arith.constant 0 : index
    %c0_23 = arith.constant 0 : index
    %c0_24 = arith.constant 0 : index
    %22 = vector.load %arg3[%c0_21, %c0_22, %c0_23, %c0_24] : memref<1x16x18x8xf32, #tpu.memory_space<vmem>>, vector<1x16x16x8xf32>
    %23 = vector.shape_cast %22 : vector<1x16x16x8xf32> to vector<16x16x8xf32>
    %24 = vector.shape_cast %23 : vector<16x16x8xf32> to vector<256x8xf32>
    %c3 = arith.constant 3 : index
    %c0_25 = arith.constant 0 : index
    %c0_26 = arith.constant 0 : index
    %25 = vector.load %arg5[%c3, %c0_25, %c0_26] : memref<9x8x128xf32, #tpu.memory_space<vmem>>, vector<1x8x128xf32>
    %26 = vector.shape_cast %25 : vector<1x8x128xf32> to vector<8x128xf32>
    %cst_27 = arith.constant dense<0.000000e+00> : vector<256x128xf32>
    %27 = tpu.matmul %24, %26, %cst_27 {dimension_numbers = #tpu.dot_dimension_numbers<[1], [0], [0], [1], [0, 0, 1, 1], [], []>} : vector<256x8xf32>, vector<8x128xf32>, vector<256x128xf32> -> vector<256x128xf32>
    %28 = arith.addf %21, %27 : vector<256x128xf32>
    %c0_28 = arith.constant 0 : index
    %c0_29 = arith.constant 0 : index
    %c1_30 = arith.constant 1 : index
    %c0_31 = arith.constant 0 : index
    %29 = vector.load %arg3[%c0_28, %c0_29, %c1_30, %c0_31] : memref<1x16x18x8xf32, #tpu.memory_space<vmem>>, vector<1x16x16x8xf32>
    %30 = vector.shape_cast %29 : vector<1x16x16x8xf32> to vector<16x16x8xf32>
    %31 = vector.shape_cast %30 : vector<16x16x8xf32> to vector<256x8xf32>
    %c4 = arith.constant 4 : index
    %c0_32 = arith.constant 0 : index
    %c0_33 = arith.constant 0 : index
    %32 = vector.load %arg5[%c4, %c0_32, %c0_33] : memref<9x8x128xf32, #tpu.memory_space<vmem>>, vector<1x8x128xf32>
    %33 = vector.shape_cast %32 : vector<1x8x128xf32> to vector<8x128xf32>
    %cst_34 = arith.constant dense<0.000000e+00> : vector<256x128xf32>
    %34 = tpu.matmul %31, %33, %cst_34 {dimension_numbers = #tpu.dot_dimension_numbers<[1], [0], [0], [1], [0, 0, 1, 1], [], []>} : vector<256x8xf32>, vector<8x128xf32>, vector<256x128xf32> -> vector<256x128xf32>
    %35 = arith.addf %28, %34 : vector<256x128xf32>
    %c0_35 = arith.constant 0 : index
    %c0_36 = arith.constant 0 : index
    %c2_37 = arith.constant 2 : index
    %c0_38 = arith.constant 0 : index
    %36 = vector.load %arg3[%c0_35, %c0_36, %c2_37, %c0_38] : memref<1x16x18x8xf32, #tpu.memory_space<vmem>>, vector<1x16x16x8xf32>
    %37 = vector.shape_cast %36 : vector<1x16x16x8xf32> to vector<16x16x8xf32>
    %38 = vector.shape_cast %37 : vector<16x16x8xf32> to vector<256x8xf32>
    %c5 = arith.constant 5 : index
    %c0_39 = arith.constant 0 : index
    %c0_40 = arith.constant 0 : index
    %39 = vector.load %arg5[%c5, %c0_39, %c0_40] : memref<9x8x128xf32, #tpu.memory_space<vmem>>, vector<1x8x128xf32>
    %40 = vector.shape_cast %39 : vector<1x8x128xf32> to vector<8x128xf32>
    %cst_41 = arith.constant dense<0.000000e+00> : vector<256x128xf32>
    %41 = tpu.matmul %38, %40, %cst_41 {dimension_numbers = #tpu.dot_dimension_numbers<[1], [0], [0], [1], [0, 0, 1, 1], [], []>} : vector<256x8xf32>, vector<8x128xf32>, vector<256x128xf32> -> vector<256x128xf32>
    %42 = arith.addf %35, %41 : vector<256x128xf32>
    %c0_42 = arith.constant 0 : index
    %c0_43 = arith.constant 0 : index
    %c0_44 = arith.constant 0 : index
    %c0_45 = arith.constant 0 : index
    %43 = vector.load %arg4[%c0_42, %c0_43, %c0_44, %c0_45] : memref<1x16x18x8xf32, #tpu.memory_space<vmem>>, vector<1x16x16x8xf32>
    %44 = vector.shape_cast %43 : vector<1x16x16x8xf32> to vector<16x16x8xf32>
    %45 = vector.shape_cast %44 : vector<16x16x8xf32> to vector<256x8xf32>
    %c6 = arith.constant 6 : index
    %c0_46 = arith.constant 0 : index
    %c0_47 = arith.constant 0 : index
    %46 = vector.load %arg5[%c6, %c0_46, %c0_47] : memref<9x8x128xf32, #tpu.memory_space<vmem>>, vector<1x8x128xf32>
    %47 = vector.shape_cast %46 : vector<1x8x128xf32> to vector<8x128xf32>
    %cst_48 = arith.constant dense<0.000000e+00> : vector<256x128xf32>
    %48 = tpu.matmul %45, %47, %cst_48 {dimension_numbers = #tpu.dot_dimension_numbers<[1], [0], [0], [1], [0, 0, 1, 1], [], []>} : vector<256x8xf32>, vector<8x128xf32>, vector<256x128xf32> -> vector<256x128xf32>
    %49 = arith.addf %42, %48 : vector<256x128xf32>
    %c0_49 = arith.constant 0 : index
    %c0_50 = arith.constant 0 : index
    %c1_51 = arith.constant 1 : index
    %c0_52 = arith.constant 0 : index
    %50 = vector.load %arg4[%c0_49, %c0_50, %c1_51, %c0_52] : memref<1x16x18x8xf32, #tpu.memory_space<vmem>>, vector<1x16x16x8xf32>
    %51 = vector.shape_cast %50 : vector<1x16x16x8xf32> to vector<16x16x8xf32>
    %52 = vector.shape_cast %51 : vector<16x16x8xf32> to vector<256x8xf32>
    %c7 = arith.constant 7 : index
    %c0_53 = arith.constant 0 : index
    %c0_54 = arith.constant 0 : index
    %53 = vector.load %arg5[%c7, %c0_53, %c0_54] : memref<9x8x128xf32, #tpu.memory_space<vmem>>, vector<1x8x128xf32>
    %54 = vector.shape_cast %53 : vector<1x8x128xf32> to vector<8x128xf32>
    %cst_55 = arith.constant dense<0.000000e+00> : vector<256x128xf32>
    %55 = tpu.matmul %52, %54, %cst_55 {dimension_numbers = #tpu.dot_dimension_numbers<[1], [0], [0], [1], [0, 0, 1, 1], [], []>} : vector<256x8xf32>, vector<8x128xf32>, vector<256x128xf32> -> vector<256x128xf32>
    %56 = arith.addf %49, %55 : vector<256x128xf32>
    %c0_56 = arith.constant 0 : index
    %c0_57 = arith.constant 0 : index
    %c2_58 = arith.constant 2 : index
    %c0_59 = arith.constant 0 : index
    %57 = vector.load %arg4[%c0_56, %c0_57, %c2_58, %c0_59] : memref<1x16x18x8xf32, #tpu.memory_space<vmem>>, vector<1x16x16x8xf32>
    %58 = vector.shape_cast %57 : vector<1x16x16x8xf32> to vector<16x16x8xf32>
    %59 = vector.shape_cast %58 : vector<16x16x8xf32> to vector<256x8xf32>
    %c8 = arith.constant 8 : index
    %c0_60 = arith.constant 0 : index
    %c0_61 = arith.constant 0 : index
    %60 = vector.load %arg5[%c8, %c0_60, %c0_61] : memref<9x8x128xf32, #tpu.memory_space<vmem>>, vector<1x8x128xf32>
    %61 = vector.shape_cast %60 : vector<1x8x128xf32> to vector<8x128xf32>
    %cst_62 = arith.constant dense<0.000000e+00> : vector<256x128xf32>
    %62 = tpu.matmul %59, %61, %cst_62 {dimension_numbers = #tpu.dot_dimension_numbers<[1], [0], [0], [1], [0, 0, 1, 1], [], []>} : vector<256x8xf32>, vector<8x128xf32>, vector<256x128xf32> -> vector<256x128xf32>
    %63 = arith.addf %56, %62 : vector<256x128xf32>
    %64 = vector.shape_cast %63 : vector<256x128xf32> to vector<16x16x128xf32>
    %c0_63 = arith.constant 0 : index
    %c0_64 = arith.constant 0 : index
    %c0_65 = arith.constant 0 : index
    %c0_66 = arith.constant 0 : index
    %65 = vector.load %arg6[%c0_63, %c0_64, %c0_65, %c0_66] : memref<1x16x16x128xf32, #tpu.memory_space<vmem>>, vector<1x16x16x128xf32>
    %66 = vector.shape_cast %65 : vector<1x16x16x128xf32> to vector<16x16x128xf32>
    %67 = vector.shape_cast %64 : vector<16x16x128xf32> to vector<1x16x16x128xf32>
    tpu.vector_store %arg6[%c0_63, %c0_64, %c0_65, %c0_66], %67 {strides = array<i32>} : memref<1x16x16x128xf32, #tpu.memory_space<vmem>>, vector<1x16x16x128xf32>,
    %cst_67 = arith.constant 1.000000e+00 : f32
    %68 = vector.broadcast %cst_67 : f32 to vector<1x256xf32>
    %cst_68 = arith.constant dense<0.000000e+00> : vector<1x128xf32>
    %69 = tpu.matmul %68, %63, %cst_68 {dimension_numbers = #tpu.dot_dimension_numbers<[1], [0], [0], [1], [0, 0, 1, 1], [], []>} : vector<1x256xf32>, vector<256x128xf32>, vector<1x128xf32> -> vector<1x128xf32>
    %70 = arith.mulf %63, %63 : vector<256x128xf32>
    %cst_69 = arith.constant dense<0.000000e+00> : vector<1x128xf32>
    %71 = tpu.matmul %68, %70, %cst_69 {dimension_numbers = #tpu.dot_dimension_numbers<[1], [0], [0], [1], [0, 0, 1, 1], [], []>} : vector<1x256xf32>, vector<256x128xf32>, vector<1x128xf32> -> vector<1x128xf32>
    %72 = tpu.concatenate %69, %71 in 0 : vector<1x128xf32>, vector<1x128xf32> -> vector<2x128xf32>
    %c0_70 = arith.constant 0 : index
    %c0_71 = arith.constant 0 : index
    %c0_72 = arith.constant 0 : index
    %c0_73 = arith.constant 0 : index
    %73 = vector.load %arg7[%c0_70, %c0_71, %c0_72, %c0_73] : memref<1x1x2x128xf32, #tpu.memory_space<vmem>>, vector<1x1x2x128xf32>
    %74 = vector.shape_cast %73 : vector<1x1x2x128xf32> to vector<2x128xf32>
    %75 = vector.shape_cast %72 : vector<2x128xf32> to vector<1x1x2x128xf32>
    tpu.vector_store %arg7[%c0_70, %c0_71, %c0_72, %c0_73], %75 {strides = array<i32>} : memref<1x1x2x128xf32, #tpu.memory_space<vmem>>, vector<1x1x2x128xf32>,
    return
  }
  func.func @transform_0(%arg0: i32, %arg1: i32) -> (i32, i32, i32, i32) {
    %c0_i32 = arith.constant 0 : i32
    %c0_i32_0 = arith.constant 0 : i32
    %c0_i32_1 = arith.constant 0 : i32
    return %arg0, %arg1, %c0_i32, %c0_i32_0 : i32, i32, i32, i32
  }
  func.func @transform_1(%arg0: i32, %arg1: i32) -> (i32, i32, i32, i32) {
    %c0_i32 = arith.constant 0 : i32
    %c0_i32_0 = arith.constant 0 : i32
    %c0_i32_1 = arith.constant 0 : i32
    return %arg0, %arg1, %c0_i32, %c0_i32_0 : i32, i32, i32, i32
  }
  func.func @transform_2(%arg0: i32, %arg1: i32) -> (i32, i32, i32, i32) {
    %c0_i32 = arith.constant 0 : i32
    %c0_i32_0 = arith.constant 0 : i32
    %c0_i32_1 = arith.constant 0 : i32
    return %arg0, %arg1, %c0_i32, %c0_i32_0 : i32, i32, i32, i32
  }
  func.func @transform_3(%arg0: i32, %arg1: i32) -> (i32, i32, i32) {
    %c0_i32 = arith.constant 0 : i32
    %c0_i32_0 = arith.constant 0 : i32
    %c0_i32_1 = arith.constant 0 : i32
    %c0_i32_2 = arith.constant 0 : i32
    return %c0_i32, %c0_i32_0, %c0_i32_1 : i32, i32, i32
  }
  func.func @transform_4(%arg0: i32, %arg1: i32) -> (i32, i32, i32, i32) {
    %c0_i32 = arith.constant 0 : i32
    %c0_i32_0 = arith.constant 0 : i32
    %c0_i32_1 = arith.constant 0 : i32
    return %arg0, %arg1, %c0_i32, %c0_i32_0 : i32, i32, i32, i32
  }
  func.func @transform_5(%arg0: i32, %arg1: i32) -> (i32, i32, i32, i32) {
    %c0_i32 = arith.constant 0 : i32
    %c0_i32_0 = arith.constant 0 : i32
    %c0_i32_1 = arith.constant 0 : i32
    return %arg0, %arg1, %c0_i32, %c0_i32_0 : i32, i32, i32, i32
  }
}

module attributes {stable_mosaic.version = 11 : i64} {
  func.func @bn_relu_pool_kernel(%arg0: i32, %arg1: i32, %arg2: memref<1x16x16x128xf32, #tpu.memory_space<vmem>>, %arg3: memref<1x128xf32, #tpu.memory_space<vmem>>, %arg4: memref<1x128xf32, #tpu.memory_space<vmem>>, %arg5: memref<1x16x16x128xf32, #tpu.memory_space<vmem>>, %arg6: memref<1x1x1x128xf32, #tpu.memory_space<vmem>>) attributes {dimension_semantics = [#tpu.dimension_semantics<parallel>, #tpu.dimension_semantics<parallel>], iteration_bounds = array<i64: 2, 1>, scalar_prefetch = 0 : i64, scratch_operands = 0 : i64, tpu.core_type = #tpu.core_type<tc>, window_params = [{transform_indices = @transform_0, window_bounds = array<i64: 1, 16, 16, 128>}, {pipeline_mode = #tpu.pipeline_mode<synchronous>, transform_indices = @transform_1, window_bounds = array<i64: 1, 128>}, {pipeline_mode = #tpu.pipeline_mode<synchronous>, transform_indices = @transform_2, window_bounds = array<i64: 1, 128>}, {transform_indices = @transform_3, window_bounds = array<i64: 1, 16, 16, 128>}, {transform_indices = @transform_4, window_bounds = array<i64: 1, 1, 1, 128>}]} {
    %c0 = arith.constant 0 : index
    %c0_0 = arith.constant 0 : index
    %c0_1 = arith.constant 0 : index
    %c0_2 = arith.constant 0 : index
    %0 = vector.load %arg2[%c0, %c0_0, %c0_1, %c0_2] : memref<1x16x16x128xf32, #tpu.memory_space<vmem>>, vector<1x16x16x128xf32>
    %1 = vector.shape_cast %0 : vector<1x16x16x128xf32> to vector<16x16x128xf32>
    %2 = vector.shape_cast %1 : vector<16x16x128xf32> to vector<256x128xf32>
    %c0_3 = arith.constant 0 : index
    %c0_4 = arith.constant 0 : index
    %3 = vector.load %arg3[%c0_3, %c0_4] : memref<1x128xf32, #tpu.memory_space<vmem>>, vector<1x128xf32>
    %4 = vector.broadcast %3 : vector<1x128xf32> to vector<256x128xf32>
    %5 = arith.mulf %2, %4 : vector<256x128xf32>
    %c0_5 = arith.constant 0 : index
    %c0_6 = arith.constant 0 : index
    %6 = vector.load %arg4[%c0_5, %c0_6] : memref<1x128xf32, #tpu.memory_space<vmem>>, vector<1x128xf32>
    %7 = vector.broadcast %6 : vector<1x128xf32> to vector<256x128xf32>
    %8 = arith.addf %5, %7 : vector<256x128xf32>
    %cst = arith.constant 0.000000e+00 : f32
    %9 = vector.broadcast %cst : f32 to vector<256x128xf32>
    %10 = arith.maximumf %8, %9 : vector<256x128xf32>
    %11 = vector.shape_cast %10 : vector<256x128xf32> to vector<16x16x128xf32>
    %c0_7 = arith.constant 0 : index
    %c0_8 = arith.constant 0 : index
    %c0_9 = arith.constant 0 : index
    %c0_10 = arith.constant 0 : index
    %12 = vector.load %arg5[%c0_7, %c0_8, %c0_9, %c0_10] : memref<1x16x16x128xf32, #tpu.memory_space<vmem>>, vector<1x16x16x128xf32>
    %13 = vector.shape_cast %12 : vector<1x16x16x128xf32> to vector<16x16x128xf32>
    %14 = vector.shape_cast %11 : vector<16x16x128xf32> to vector<1x16x16x128xf32>
    tpu.vector_store %arg5[%c0_7, %c0_8, %c0_9, %c0_10], %14 {strides = array<i32>} : memref<1x16x16x128xf32, #tpu.memory_space<vmem>>, vector<1x16x16x128xf32>,
    %cst_11 = arith.constant 1.000000e+00 : f32
    %15 = vector.broadcast %cst_11 : f32 to vector<1x256xf32>
    %cst_12 = arith.constant dense<0.000000e+00> : vector<1x128xf32>
    %16 = tpu.matmul %15, %10, %cst_12 {dimension_numbers = #tpu.dot_dimension_numbers<[1], [0], [0], [1], [0, 0, 1, 1], [], []>} : vector<1x256xf32>, vector<256x128xf32>, vector<1x128xf32> -> vector<1x128xf32>
    %c0_13 = arith.constant 0 : index
    %c0_14 = arith.constant 0 : index
    %c0_15 = arith.constant 0 : index
    %c0_16 = arith.constant 0 : index
    %17 = vector.load %arg6[%c0_13, %c0_14, %c0_15, %c0_16] : memref<1x1x1x128xf32, #tpu.memory_space<vmem>>, vector<1x1x1x128xf32>
    %18 = vector.shape_cast %17 : vector<1x1x1x128xf32> to vector<1x128xf32>
    %19 = vector.shape_cast %16 : vector<1x128xf32> to vector<1x1x1x128xf32>
    tpu.vector_store %arg6[%c0_13, %c0_14, %c0_15, %c0_16], %19 {strides = array<i32>} : memref<1x1x1x128xf32, #tpu.memory_space<vmem>>, vector<1x1x1x128xf32>,
    return
  }
  func.func @transform_0(%arg0: i32, %arg1: i32) -> (i32, i32, i32, i32) {
    %c0_i32 = arith.constant 0 : i32
    %c0_i32_0 = arith.constant 0 : i32
    %c0_i32_1 = arith.constant 0 : i32
    return %arg0, %arg1, %c0_i32, %c0_i32_0 : i32, i32, i32, i32
  }
  func.func @transform_1(%arg0: i32, %arg1: i32) -> (i32, i32) {
    %c0_i32 = arith.constant 0 : i32
    %c0_i32_0 = arith.constant 0 : i32
    %c0_i32_1 = arith.constant 0 : i32
    return %c0_i32, %c0_i32_0 : i32, i32
  }
  func.func @transform_2(%arg0: i32, %arg1: i32) -> (i32, i32) {
    %c0_i32 = arith.constant 0 : i32
    %c0_i32_0 = arith.constant 0 : i32
    %c0_i32_1 = arith.constant 0 : i32
    return %c0_i32, %c0_i32_0 : i32, i32
  }
  func.func @transform_3(%arg0: i32, %arg1: i32) -> (i32, i32, i32, i32) {
    %c0_i32 = arith.constant 0 : i32
    %c0_i32_0 = arith.constant 0 : i32
    %c0_i32_1 = arith.constant 0 : i32
    return %arg0, %arg1, %c0_i32, %c0_i32_0 : i32, i32, i32, i32
  }
  func.func @transform_4(%arg0: i32, %arg1: i32) -> (i32, i32, i32, i32) {
    %c0_i32 = arith.constant 0 : i32
    %c0_i32_0 = arith.constant 0 : i32
    %c0_i32_1 = arith.constant 0 : i32
    return %arg0, %arg1, %c0_i32, %c0_i32_0 : i32, i32, i32, i32
  }
}

module attributes {stable_mosaic.version = 11 : i64} {
  func.func @atten_kernel(%arg0: memref<2x128xf32, #tpu.memory_space<vmem>>, %arg1: memref<128x128xf32, #tpu.memory_space<vmem>>, %arg2: memref<1x128xf32, #tpu.memory_space<vmem>>, %arg3: memref<1x128xf32, #tpu.memory_space<vmem>>, %arg4: memref<2x128xf32, #tpu.memory_space<vmem>>) attributes {dimension_semantics = [], scalar_prefetch = 0 : i64, scratch_operands = 0 : i64, tpu.core_type = #tpu.core_type<tc>} {
    %c0 = arith.constant 0 : index
    %c0_0 = arith.constant 0 : index
    %0 = vector.load %arg0[%c0, %c0_0] : memref<2x128xf32, #tpu.memory_space<vmem>>, vector<2x128xf32>
    %c0_1 = arith.constant 0 : index
    %c0_2 = arith.constant 0 : index
    %1 = vector.load %arg1[%c0_1, %c0_2] : memref<128x128xf32, #tpu.memory_space<vmem>>, vector<128x128xf32>
    %cst = arith.constant dense<0.000000e+00> : vector<2x128xf32>
    %2 = tpu.matmul %0, %1, %cst {dimension_numbers = #tpu.dot_dimension_numbers<[1], [0], [0], [1], [0, 0, 1, 1], [], []>} : vector<2x128xf32>, vector<128x128xf32>, vector<2x128xf32> -> vector<2x128xf32>
    %cst_3 = arith.constant dense<0.000000e+00> : vector<128xf32>
    %3 = vector.multi_reduction <add>, %2, %cst_3 [0] : vector<2x128xf32> to vector<128xf32>
    %4 = vector.shape_cast %3 : vector<128xf32> to vector<1x128xf32>
    %cst_4 = arith.constant 2.000000e+00 : f32
    %5 = vector.broadcast %cst_4 : f32 to vector<1x128xf32>
    %6 = arith.divf %4, %5 : vector<1x128xf32>
    %7 = vector.broadcast %6 : vector<1x128xf32> to vector<2x128xf32>
    %8 = arith.subf %2, %7 : vector<2x128xf32>
    %9 = arith.mulf %8, %8 : vector<2x128xf32>
    %cst_5 = arith.constant dense<0.000000e+00> : vector<128xf32>
    %10 = vector.multi_reduction <add>, %9, %cst_5 [0] : vector<2x128xf32> to vector<128xf32>
    %11 = vector.shape_cast %10 : vector<128xf32> to vector<1x128xf32>
    %cst_6 = arith.constant 2.000000e+00 : f32
    %12 = vector.broadcast %cst_6 : f32 to vector<1x128xf32>
    %13 = arith.divf %11, %12 : vector<1x128xf32>
    %14 = vector.broadcast %6 : vector<1x128xf32> to vector<2x128xf32>
    %15 = arith.subf %2, %14 : vector<2x128xf32>
    %cst_7 = arith.constant 9.99999974E-6 : f32
    %16 = vector.broadcast %cst_7 : f32 to vector<1x128xf32>
    %17 = arith.addf %13, %16 : vector<1x128xf32>
    %18 = math.rsqrt %17 : vector<1x128xf32>
    %19 = vector.broadcast %18 : vector<1x128xf32> to vector<2x128xf32>
    %20 = arith.mulf %15, %19 : vector<2x128xf32>
    %c0_8 = arith.constant 0 : index
    %c0_9 = arith.constant 0 : index
    %21 = vector.load %arg2[%c0_8, %c0_9] : memref<1x128xf32, #tpu.memory_space<vmem>>, vector<1x128xf32>
    %22 = vector.broadcast %21 : vector<1x128xf32> to vector<2x128xf32>
    %23 = arith.mulf %20, %22 : vector<2x128xf32>
    %c0_10 = arith.constant 0 : index
    %c0_11 = arith.constant 0 : index
    %24 = vector.load %arg3[%c0_10, %c0_11] : memref<1x128xf32, #tpu.memory_space<vmem>>, vector<1x128xf32>
    %25 = vector.broadcast %24 : vector<1x128xf32> to vector<2x128xf32>
    %26 = arith.addf %23, %25 : vector<2x128xf32>
    %cst_12 = arith.constant 0.000000e+00 : f32
    %27 = vector.broadcast %cst_12 : f32 to vector<2x128xf32>
    %28 = arith.subf %27, %26 : vector<2x128xf32>
    %29 = math.exp %28 : vector<2x128xf32>
    %cst_13 = arith.constant 1.000000e+00 : f32
    %30 = vector.broadcast %cst_13 : f32 to vector<2x128xf32>
    %31 = arith.addf %30, %29 : vector<2x128xf32>
    %cst_14 = arith.constant 1.000000e+00 : f32
    %32 = vector.broadcast %cst_14 : f32 to vector<2x128xf32>
    %33 = arith.divf %32, %31 : vector<2x128xf32>
    %c0_15 = arith.constant 0 : index
    %c0_16 = arith.constant 0 : index
    %34 = vector.load %arg4[%c0_15, %c0_16] : memref<2x128xf32, #tpu.memory_space<vmem>>, vector<2x128xf32>
    tpu.vector_store %arg4[%c0_15, %c0_16], %33 {strides = array<i32>} : memref<2x128xf32, #tpu.memory_space<vmem>>, vector<2x128xf32>,
    return
  }
}

module attributes {stable_mosaic.version = 11 : i64} {
  func.func @scale_kernel(%arg0: i32, %arg1: i32, %arg2: memref<1x16x16x128xf32, #tpu.memory_space<vmem>>, %arg3: memref<1x1x128xf32, #tpu.memory_space<vmem>>, %arg4: memref<1x16x16x128xf32, #tpu.memory_space<vmem>>) attributes {dimension_semantics = [#tpu.dimension_semantics<parallel>, #tpu.dimension_semantics<parallel>], iteration_bounds = array<i64: 2, 1>, scalar_prefetch = 0 : i64, scratch_operands = 0 : i64, tpu.core_type = #tpu.core_type<tc>, window_params = [{transform_indices = @transform_0, window_bounds = array<i64: 1, 16, 16, 128>}, {transform_indices = @transform_1, window_bounds = array<i64: 1, 1, 128>}, {transform_indices = @transform_2, window_bounds = array<i64: 1, 16, 16, 128>}]} {
    %c0 = arith.constant 0 : index
    %c0_0 = arith.constant 0 : index
    %c0_1 = arith.constant 0 : index
    %c0_2 = arith.constant 0 : index
    %0 = vector.load %arg2[%c0, %c0_0, %c0_1, %c0_2] : memref<1x16x16x128xf32, #tpu.memory_space<vmem>>, vector<1x16x16x128xf32>
    %1 = vector.shape_cast %0 : vector<1x16x16x128xf32> to vector<16x16x128xf32>
    %c0_3 = arith.constant 0 : index
    %c0_4 = arith.constant 0 : index
    %c0_5 = arith.constant 0 : index
    %2 = vector.load %arg3[%c0_3, %c0_4, %c0_5] : memref<1x1x128xf32, #tpu.memory_space<vmem>>, vector<1x1x128xf32>
    %3 = vector.shape_cast %2 : vector<1x1x128xf32> to vector<1x128xf32>
    %4 = vector.shape_cast %3 : vector<1x128xf32> to vector<1x1x128xf32>
    %5 = vector.broadcast %4 : vector<1x1x128xf32> to vector<16x16x128xf32>
    %6 = arith.mulf %1, %5 : vector<16x16x128xf32>
    %c0_6 = arith.constant 0 : index
    %c0_7 = arith.constant 0 : index
    %c0_8 = arith.constant 0 : index
    %c0_9 = arith.constant 0 : index
    %7 = vector.load %arg4[%c0_6, %c0_7, %c0_8, %c0_9] : memref<1x16x16x128xf32, #tpu.memory_space<vmem>>, vector<1x16x16x128xf32>
    %8 = vector.shape_cast %7 : vector<1x16x16x128xf32> to vector<16x16x128xf32>
    %9 = vector.shape_cast %6 : vector<16x16x128xf32> to vector<1x16x16x128xf32>
    tpu.vector_store %arg4[%c0_6, %c0_7, %c0_8, %c0_9], %9 {strides = array<i32>} : memref<1x16x16x128xf32, #tpu.memory_space<vmem>>, vector<1x16x16x128xf32>,
    return
  }
  func.func @transform_0(%arg0: i32, %arg1: i32) -> (i32, i32, i32, i32) {
    %c0_i32 = arith.constant 0 : i32
    %c0_i32_0 = arith.constant 0 : i32
    %c0_i32_1 = arith.constant 0 : i32
    return %arg0, %arg1, %c0_i32, %c0_i32_0 : i32, i32, i32, i32
  }
  func.func @transform_1(%arg0: i32, %arg1: i32) -> (i32, i32, i32) {
    %c0_i32 = arith.constant 0 : i32
    %c0_i32_0 = arith.constant 0 : i32
    %c0_i32_1 = arith.constant 0 : i32
    return %arg0, %c0_i32, %c0_i32_0 : i32, i32, i32
  }
  func.func @transform_2(%arg0: i32, %arg1: i32) -> (i32, i32, i32, i32) {
    %c0_i32 = arith.constant 0 : i32
    %c0_i32_0 = arith.constant 0 : i32
    %c0_i32_1 = arith.constant 0 : i32
    return %arg0, %arg1, %c0_i32, %c0_i32_0 : i32, i32, i32, i32
  }
}

</mosaic_0001>

<llo_original>
// kernel: attention_refinement.6
$region0: #{attention_refinement.6}
  #allocation0 [shape = 'u32[]', space=smem, size = 0x4, offset = 0x4, fixed_abs, tag = 'smem constant byte address 0x4 - core index']
  #allocation1 [shape = 'u32[144,128]{1,0:T(1,128)}', space=vmem, size = 0x12000, scoped, tag = 'internal scratch']
  %s0 = inlined_call_operand.vmem [shape: f32[2,128], index: 0, kind: input, shape index: {}]
  %s1 = inlined_call_operand.vmem [shape: f32[128,128], index: 1, kind: input, shape index: {}]
  %s2 = inlined_call_operand.vmem [shape: f32[1,128], index: 2, kind: input, shape index: {}]
  %s3 = inlined_call_operand.vmem [shape: f32[1,128], index: 3, kind: input, shape index: {}]
  %s4 = inlined_call_operand.vmem [shape: f32[2,128], index: 4, kind: output, shape index: {}]
  %s5 = sld [smem:[#allocation0]]
  $region26: #{attention_refinement.6} parent=0
    _
  %s7 = ssub.s32 1, %s5
  %s8 = scalar_select 0, %s7, %s5
  // Predicated region
  $region2: #{attention_refinement.6} parent=0 // pred_check
    _
  $region3: #{attention_refinement.6} parent=0 // pred_check_branch
    %10 = sbr.rel (0) target = $region5
  $region4: #{attention_refinement.6} parent=0 // pred_region
    _
  $region5: #{attention_refinement.6} parent=0 // pred_fallthru
    _
  // Predicated region
  $region6: #{attention_refinement.6} parent=0 // pred_check
    _
  $region7: #{attention_refinement.6} parent=0 // pred_check_branch
    %12 = sbr.rel (0) target = $region9
  $region8: #{attention_refinement.6} parent=0 // pred_region
    _
  $region9: #{attention_refinement.6} parent=0 // pred_fallthru
    _
  // Predicated region
  $region10: #{attention_refinement.6} parent=0 // pred_check
    _
  $region11: #{attention_refinement.6} parent=0 // pred_check_branch
    %14 = sbr.rel (0) target = $region13
  $region12: #{attention_refinement.6} parent=0 // pred_region
    _
  $region13: #{attention_refinement.6} parent=0 // pred_fallthru
    _
  // Predicated region
  $region14: #{attention_refinement.6} parent=0 // pred_check
    _
  $region15: #{attention_refinement.6} parent=0 // pred_check_branch
    %16 = sbr.rel (0) target = $region17
  $region16: #{attention_refinement.6} parent=0 // pred_region
    _
  $region17: #{attention_refinement.6} parent=0 // pred_fallthru
    _
  %v17 = vld [vmem:[%s0] sm:$0x3]
  %v18 = vld [vmem:[%s1] sm:$0xff]
  %v19 = vld [vmem:[%s1 + $0x8] sm:$0xff]
  %v20 = vld [vmem:[%s1 + $0x10] sm:$0xff]
  %v21 = vld [vmem:[%s1 + $0x18] sm:$0xff]
  %v22 = vld [vmem:[%s1 + $0x20] sm:$0xff]
  %v23 = vld [vmem:[%s1 + $0x28] sm:$0xff]
  %v24 = vld [vmem:[%s1 + $0x30] sm:$0xff]
  %v25 = vld [vmem:[%s1 + $0x38] sm:$0xff]
  %v26 = vld [vmem:[%s1 + $0x40] sm:$0xff]
  %v27 = vld [vmem:[%s1 + $0x48] sm:$0xff]
  %v28 = vld [vmem:[%s1 + $0x50] sm:$0xff]
  %v29 = vld [vmem:[%s1 + $0x58] sm:$0xff]
  %v30 = vld [vmem:[%s1 + $0x60] sm:$0xff]
  %v31 = vld [vmem:[%s1 + $0x68] sm:$0xff]
  %v32 = vld [vmem:[%s1 + $0x70] sm:$0xff]
  %v33 = vld [vmem:[%s1 + $0x78] sm:$0xff]
  %34 = vmatprep.subr.mxu0 0.0
  %35 = vmatpush1.msra.mxu0 %v33
  %36 = vmatprep.subr.mxu0 0.0
  %37 = vmatpush1.msra.mxu0 %v32
  %38 = vmatprep.subr.mxu0 0.0
  %39 = vmatpush1.msra.mxu0 %v31
  %40 = vmatprep.subr.mxu0 0.0
  %41 = vmatpush1.msra.mxu0 %v30
  %42 = vmatprep.subr.mxu0 0.0
  %43 = vmatpush1.msra.mxu0 %v29
  %44 = vmatprep.subr.mxu0 0.0
  %45 = vmatpush1.msra.mxu0 %v28
  %46 = vmatprep.subr.mxu0 0.0
  %47 = vmatpush1.msra.mxu0 %v27
  %48 = vmatprep.subr.mxu0 0.0
  %49 = vmatpush1.msra.mxu0 %v26
  %50 = vmatprep.subr.mxu0 0.0
  %51 = vmatpush1.msra.mxu0 %v25
  %52 = vmatprep.subr.mxu0 0.0
  %53 = vmatpush1.msra.mxu0 %v24
  %54 = vmatprep.subr.mxu0 0.0
  %55 = vmatpush1.msra.mxu0 %v23
  %56 = vmatprep.subr.mxu0 0.0
  %57 = vmatpush1.msra.mxu0 %v22
  %58 = vmatprep.subr.mxu0 0.0
  %59 = vmatpush1.msra.mxu0 %v21
  %60 = vmatprep.subr.mxu0 0.0
  %61 = vmatpush1.msra.mxu0 %v20
  %62 = vmatprep.subr.mxu0 0.0
  %63 = vmatpush1.msra.mxu0 %v19
  %64 = vmatprep.subr.mxu0 0.0
  %65 = vmatpush1.msra.mxu0 %v18
  %66 = vmatprep.subr.mxu0 0.0
  %67 = vmatpush2.msra.mxu0 0.0
  %68 = vmatprep.subr.mxu0 0.0
  %69 = vmatpush2.msra.mxu0 0.0
  %70 = vmatprep.subr.mxu0 0.0
  %71 = vmatpush2.msra.mxu0 0.0
  %72 = vmatprep.subr.mxu0 0.0
  %73 = vmatpush2.msra.mxu0 0.0
  %74 = vmatprep.subr.mxu0 0.0
  %75 = vmatpush2.msra.mxu0 0.0
  %76 = vmatprep.subr.mxu0 0.0
  %77 = vmatpush2.msra.mxu0 0.0
  %78 = vmatprep.subr.mxu0 0.0
  %79 = vmatpush2.msra.mxu0 0.0
  %80 = vmatprep.subr.mxu0 0.0
  %81 = vmatpush2.msra.mxu0 0.0
  %82 = vmatprep.subr.mxu0 0.0
  %83 = vmatpush2.msra.mxu0 0.0
  %84 = vmatprep.subr.mxu0 0.0
  %85 = vmatpush2.msra.mxu0 0.0
  %86 = vmatprep.subr.mxu0 0.0
  %87 = vmatpush2.msra.mxu0 0.0
  %88 = vmatprep.subr.mxu0 0.0
  %89 = vmatpush2.msra.mxu0 0.0
  %90 = vmatprep.subr.mxu0 0.0
  %91 = vmatpush2.msra.mxu0 0.0
  %92 = vmatprep.subr.mxu0 0.0
  %93 = vmatpush2.msra.mxu0 0.0
  %94 = vmatprep.subr.mxu0 0.0
  %95 = vmatpush2.msra.mxu0 0.0
  %96 = vmatprep.subr.mxu0 0.0
  %97 = vmatpush2.msra.mxu0 0.0
  %98 = vmatprep.mubr.f32.mxu0 0.0
  %99 = vmatmul.mubr.f32.gmra.mxu0 %v17
  %v100 = vpop.f32.mrf.mxu0
  %v101 = vadd.f32 0.0, %v100
  %v102 = vpop.f32.mrf.mxu0
  %103 = vdwg.mxu0
  %vm104 = vcmask 1041408
  %v105 = vsel %vm104, %v101, 0.0
  %v106 = vrot.slane %v105, 4
  %v107 = vadd.f32 %v105, %v106
  %v108 = vrot.slane %v107, 2
  %v109 = vadd.f32 %v107, %v108
  %v110 = vrot.slane %v109, 1
  %v111 = vadd.f32 %v109, %v110
  %v112 = vrcp.pop 2.0
  %v113 = vmul.f32 %v111, %v112
  %v114 = vsub.f32 %v101, %v113
  %v115 = vmul.f32 %v114, %v114
  %v116 = vsel %vm104, %v115, 0.0
  %v117 = vrot.slane %v116, 4
  %v118 = vadd.f32 %v116, %v117
  %v119 = vrot.slane %v118, 2
  %v120 = vadd.f32 %v118, %v119
  %v121 = vrot.slane %v120, 1
  %v122 = vadd.f32 %v120, %v121
  %v123 = vmul.f32 %v122, %v112
  %v124 = vadd.f32 %v123, 1e-05
  %v125 = vrsqrt.pop %v124
  %v126 = vmul.f32 %v114, %v125
  %v127 = vld [vmem:[%s2] sm:$0x1]
  %v129 = vlaneseq
  %v130 = vshrl.u32 %v129, 7
  %v131 = vsub.s32 0, %v130
  %v132 = vrot.slane %v127, %v131
  %v134 = vmul.f32 %v126, %v132
  %v135 = vld [vmem:[%s3] sm:$0x1]
  %v137 = vlaneseq
  %v138 = vshrl.u32 %v137, 7
  %v139 = vsub.s32 0, %v138
  %v140 = vrot.slane %v135, %v139
  %v142 = vadd.f32 %v134, %v140
  %v143 = vsub.f32 0.0, %v142
  %v144 = vmul.f32 %v143, 1.442695
  %v145 = vpow.pop %v144
  %v146 = vadd.f32 %v145, 1.0
  %v147 = vrcp.pop %v146
  %v148 = vmul.f32 1.0, %v147
  %149 = vst [vmem:[%s4] sm:$0x3] %v148
  // Predicated region
  $region18: #{attention_refinement.6} parent=0 // pred_check
    _
  $region19: #{attention_refinement.6} parent=0 // pred_check_branch
    %151 = sbr.rel (0) target = $region21
  $region20: #{attention_refinement.6} parent=0 // pred_region
    _
  $region21: #{attention_refinement.6} parent=0 // pred_fallthru
    _
  // Predicated region
  $region22: #{attention_refinement.6} parent=0 // pred_check
    _
  $region23: #{attention_refinement.6} parent=0 // pred_check_branch
    %153 = sbr.rel (0) target = $region25
  $region24: #{attention_refinement.6} parent=0 // pred_region
    _
  $region25: #{attention_refinement.6} parent=0 // pred_fallthru
    _

// kernel: attention_refinement.5
$region0: #{attention_refinement.5}
  #allocation0 [shape = 'u32[]', space=smem, size = 0x4, offset = 0x4, fixed_abs, tag = 'smem constant byte address 0x4 - core index']
  #allocation1 [shape = 'u32[144,128]{1,0:T(1,128)}', space=vmem, size = 0x12000, scoped, tag = 'internal scratch']
  %s0 = inlined_call_operand.vmem [shape: f32[2,16,16,128], index: 0, kind: input, shape index: {}]
  %s1 = inlined_call_operand.vmem [shape: f32[1,128], index: 1, kind: input, shape index: {}]
  %s2 = inlined_call_operand.vmem [shape: f32[1,128], index: 2, kind: input, shape index: {}]
  %s3 = inlined_call_operand.vmem [shape: f32[2,16,16,128], index: 3, kind: output, shape index: {0}]
  %s4 = inlined_call_operand.vmem [shape: f32[2,1,1,128], index: 4, kind: output, shape index: {1}]
  %5 = xla_tuple %s3, %s4
  %s6 = sld [smem:[#allocation0]]
  $region53: #{attention_refinement.5} parent=0
    _
  %s8 = ssub.s32 1, %s6
  %s9 = scalar_select 0, %s8, %s6
  loop: start=0, step=1, limit=4
  $region2: #{attention_refinement.5} parent=0 // loop_pre_header
    _
  $region3: #{attention_refinement.5} parent=0 // loop_header
    %s11 = sphi 0, %s15
    %p12 = scmp.ge.s32.totalorder %s11, 4
    %s18 = sphi 0, %s30
    %s19 = sphi 0, %s26
    %s20 = sphi 0, %s18
    %s21 = sphi 0, %s19
    %s22 = sphi 0, %s20
    %s23 = sphi 0, %s21
    %s35 = sphi 0, %s37
    %s38 = sphi 0, %s35
    %s39 = sphi 0, %s38
    %s55 = sphi 0, %s39
    %s59 = sphi 0, %s59
    %s61 = sphi 0, %s59
    %s62 = sphi 0, %s61
    %s76 = sphi 0, %s62
    %s80 = sphi 0, %s80
    %s82 = sphi 0, %s80
    %s83 = sphi 0, %s82
    %s97 = sphi 0, %s83
    %s105 = sphi 0, %s107
    %s108 = sphi 0, %s105
    %s109 = sphi 0, %s108
    %s125 = sphi 0, %s109
    %s133 = sphi 0, %s135
    %s136 = sphi 0, %s133
    %s137 = sphi 0, %s136
    %s153 = sphi 0, %s137
  $region4: #{attention_refinement.5} parent=0 // loop_header_branch
    %14 = sbr.rel (%p12) target = $region8
  $region5: #{attention_refinement.5} parent=0 // loop_body
    %s16 = ssub.s32 %s11, 1
    %s17 = ssub.s32 %s11, 2
    %s24 = sadd.s32 1, %s19
    %p25 = scmp.ge.s32.totalorder %s24, 1
    %s26 = scalar_select %p25, 0, %s24
    %s27 = sadd.s32 1, %s18
    %s28 = scalar_select %p25, %s27, %s18
    %p29 = scmp.ge.s32.totalorder %s28, 2
    %s30 = scalar_select %p29, 0, %s28
    %s31 = ssub.s32 %s18, %s30
    %s32 = ssub.s32 %s19, %s26
    %s33 = sor.u32 %s31, %s32
    %p34 = scmp.eq.s32.totalorder %s33, 0
    %s36 = sadd.s32 %s35, 1
    %s37 = scalar_select %p34, %s35, %s36
    %p40 = pneg %p34
    %p41 = scmp.eq.s32.totalorder %s11, 1
    %p42 = por %p40, %p41
    %p43 = scmp.ne.s32.totalorder %s35, %s38
    %p44 = scmp.eq.s32.totalorder %s11, 0
    %p45 = por %p43, %p44
    %p46 = scmp.ne.s32.totalorder %s35, %s38
    %p47 = scmp.eq.s32.totalorder %s16, 1
    %p48 = por %p46, %p47
    %p49 = scmp.ne.s32.totalorder %s38, %s39
    %p50 = scmp.eq.s32.totalorder %s16, 0
    %p51 = por %p49, %p50
    %p52 = scmp.ne.s32.totalorder %s38, %s39
    %p53 = scmp.eq.s32.totalorder %s17, 1
    %p54 = por %p52, %p53
    %p56 = scmp.ne.s32.totalorder %s39, %s55
    %p57 = scmp.eq.s32.totalorder %s17, 0
    %p58 = por %p56, %p57
    %s60 = sadd.s32 %s59, 1
    %p63 = scmp.eq.s32.totalorder %s11, 1
    %p64 = scmp.ne.s32.totalorder %s59, %s61
    %p65 = scmp.eq.s32.totalorder %s11, 0
    %p66 = por %p64, %p65
    %p67 = scmp.ne.s32.totalorder %s59, %s61
    %p68 = scmp.eq.s32.totalorder %s16, 1
    %p69 = por %p67, %p68
    %p70 = scmp.ne.s32.totalorder %s61, %s62
    %p71 = scmp.eq.s32.totalorder %s16, 0
    %p72 = por %p70, %p71
    %p73 = scmp.ne.s32.totalorder %s61, %s62
    %p74 = scmp.eq.s32.totalorder %s17, 1
    %p75 = por %p73, %p74
    %p77 = scmp.ne.s32.totalorder %s62, %s76
    %p78 = scmp.eq.s32.totalorder %s17, 0
    %p79 = por %p77, %p78
    %s81 = sadd.s32 %s80, 1
    %p84 = scmp.eq.s32.totalorder %s11, 1
    %p85 = scmp.ne.s32.totalorder %s80, %s82
    %p86 = scmp.eq.s32.totalorder %s11, 0
    %p87 = por %p85, %p86
    %p88 = scmp.ne.s32.totalorder %s80, %s82
    %p89 = scmp.eq.s32.totalorder %s16, 1
    %p90 = por %p88, %p89
    %p91 = scmp.ne.s32.totalorder %s82, %s83
    %p92 = scmp.eq.s32.totalorder %s16, 0
    %p93 = por %p91, %p92
    %p94 = scmp.ne.s32.totalorder %s82, %s83
    %p95 = scmp.eq.s32.totalorder %s17, 1
    %p96 = por %p94, %p95
    %p98 = scmp.ne.s32.totalorder %s83, %s97
    %p99 = scmp.eq.s32.totalorder %s17, 0
    %p100 = por %p98, %p99
    %s101 = ssub.s32 %s18, %s30
    %s102 = ssub.s32 %s19, %s26
    %s103 = sor.u32 %s101, %s102
    %p104 = scmp.eq.s32.totalorder %s103, 0
    %s106 = sadd.s32 %s105, 1
    %s107 = scalar_select %p104, %s105, %s106
    %p110 = pneg %p104
    %p111 = scmp.eq.s32.totalorder %s11, 1
    %p112 = por %p110, %p111
    %p113 = scmp.ne.s32.totalorder %s105, %s108
    %p114 = scmp.eq.s32.totalorder %s11, 0
    %p115 = por %p113, %p114
    %p116 = scmp.ne.s32.totalorder %s105, %s108
    %p117 = scmp.eq.s32.totalorder %s16, 1
    %p118 = por %p116, %p117
    %p119 = scmp.ne.s32.totalorder %s108, %s109
    %p120 = scmp.eq.s32.totalorder %s16, 0
    %p121 = por %p119, %p120
    %p122 = scmp.ne.s32.totalorder %s108, %s109
    %p123 = scmp.eq.s32.totalorder %s17, 1
    %p124 = por %p122, %p123
    %p126 = scmp.ne.s32.totalorder %s109, %s125
    %p127 = scmp.eq.s32.totalorder %s17, 0
    %p128 = por %p126, %p127
    %s129 = ssub.s32 %s18, %s30
    %s130 = ssub.s32 %s19, %s26
    %s131 = sor.u32 %s129, %s130
    %p132 = scmp.eq.s32.totalorder %s131, 0
    %s134 = sadd.s32 %s133, 1
    %s135 = scalar_select %p132, %s133, %s134
    %p138 = pneg %p132
    %p139 = scmp.eq.s32.totalorder %s11, 1
    %p140 = por %p138, %p139
    %p141 = scmp.ne.s32.totalorder %s133, %s136
    %p142 = scmp.eq.s32.totalorder %s11, 0
    %p143 = por %p141, %p142
    %p144 = scmp.ne.s32.totalorder %s133, %s136
    %p145 = scmp.eq.s32.totalorder %s16, 1
    %p146 = por %p144, %p145
    %p147 = scmp.ne.s32.totalorder %s136, %s137
    %p148 = scmp.eq.s32.totalorder %s16, 0
    %p149 = por %p147, %p148
    %p150 = scmp.ne.s32.totalorder %s136, %s137
    %p151 = scmp.eq.s32.totalorder %s17, 1
    %p152 = por %p150, %p151
    %p154 = scmp.ne.s32.totalorder %s137, %s153
    %p155 = scmp.eq.s32.totalorder %s17, 0
    %p156 = por %p154, %p155
    %p157 = scmp.le.s32.totalorder 1, %s11
    %p158 = scmp.lt.s32.totalorder %s11, 3
    %p159 = pnand %p157, %p158
    %p160 = pneg %p159
    // Predicated region
    $region9: #{attention_refinement.5} parent=5 // pred_check
      _
    $region10: #{attention_refinement.5} parent=5 // pred_check_branch
      %162 = sbr.rel (%p159) target = $region12
    $region11: #{attention_refinement.5} parent=5 // pred_region
      %s163 = ssub.s32 %s11, 1
      // Predicated region
      $region13: #{attention_refinement.5} parent=11 // pred_check
        %p164 = pneg %p72
      $region14: #{attention_refinement.5} parent=11 // pred_check_branch
        %166 = sbr.rel (%p164) target = $region16
      $region15: #{attention_refinement.5} parent=11 // pred_region
        _
      $region16: #{attention_refinement.5} parent=11 // pred_fallthru
        _
      // Predicated region
      $region17: #{attention_refinement.5} parent=11 // pred_check
        %p167 = pneg %p93
      $region18: #{attention_refinement.5} parent=11 // pred_check_branch
        %169 = sbr.rel (%p167) target = $region20
      $region19: #{attention_refinement.5} parent=11 // pred_region
        _
      $region20: #{attention_refinement.5} parent=11 // pred_fallthru
        _
    $region12: #{attention_refinement.5} parent=5 // pred_fallthru
      _
    %p170 = scmp.lt.s32.totalorder %s11, 2
    // Predicated region
    $region21: #{attention_refinement.5} parent=5 // pred_check
      %p171 = pneg %p170
    $region22: #{attention_refinement.5} parent=5 // pred_check_branch
      %173 = sbr.rel (%p171) target = $region24
    $region23: #{attention_refinement.5} parent=5 // pred_region
      // Predicated region
      $region25: #{attention_refinement.5} parent=23 // pred_check
        %p174 = pneg %p45
      $region26: #{attention_refinement.5} parent=23 // pred_check_branch
        %176 = sbr.rel (%p174) target = $region28
      $region27: #{attention_refinement.5} parent=23 // pred_region
        %s177 = smul.u32 16, %s19
        %p178 = scmp.lt.s32.totalorder %s18, 1
        %s179 = scalar_select %p178, %s18, 1
        %p180 = scmp.lt.s32.totalorder %s177, 15
        %s181 = scalar_select %p180, %s177, 15
        %s182 = smul.addr %s181, 2
        %s183 = smul.addr %s179, 32
        %s184 = sadd.s32 %s182, %s183
        %s185 = smul.addr %s184, 8
        %s186 = scalar_lea.vmem %s0, %s185
        %s187 = smul.u32 16, %s19
      $region28: #{attention_refinement.5} parent=23 // pred_fallthru
        _
    $region24: #{attention_refinement.5} parent=5 // pred_fallthru
      _
    %p188 = scmp.le.s32.totalorder 1, %s11
    %p189 = scmp.lt.s32.totalorder %s11, 3
    %p190 = pnand %p188, %p189
    %p191 = pneg %p190
    // Predicated region
    $region29: #{attention_refinement.5} parent=5 // pred_check
      _
    $region30: #{attention_refinement.5} parent=5 // pred_check_branch
      %193 = sbr.rel (%p190) target = $region32
    $region31: #{attention_refinement.5} parent=5 // pred_region
      %s194 = ssub.s32 %s11, 1
      %s195 = smul.u32 16, %s21
      %p196 = scmp.lt.s32.totalorder %s20, 1
      %s197 = scalar_select %p196, %s20, 1
      %p198 = scmp.lt.s32.totalorder %s195, 15
      %s199 = scalar_select %p198, %s195, 15
      %s200 = smul.addr %s199, 2
      %s201 = smul.addr %s197, 32
      %s202 = sadd.s32 %s200, %s201
      %s203 = smul.addr %s202, 8
      %s204 = scalar_lea.vmem %s0, %s203
      %p205 = pneg %p51
      %p206 = pneg %p48
      %p207 = pneg %p72
      %p208 = pneg %p69
      %p209 = pneg %p93
      %p210 = pneg %p90
      %p211 = pneg %p121
      %p212 = pneg %p118
      %s213 = smul.u32 16, %s21
      %p214 = scmp.lt.s32.totalorder %s20, 1
      %s215 = scalar_select %p214, %s20, 1
      %p216 = scmp.lt.s32.totalorder %s213, 15
      %s217 = scalar_select %p216, %s213, 15
      %s218 = smul.addr %s217, 2
      %s219 = smul.addr %s215, 32
      %s220 = sadd.s32 %s218, %s219
      %s221 = smul.addr %s220, 8
      %s222 = scalar_lea.vmem %s3, %s221
      %p223 = pneg %p149
      %p224 = pneg %p146
      %p225 = scmp.lt.s32.totalorder %s20, 1
      %s226 = scalar_select %p225, %s20, 1
      %p227 = scmp.lt.s32.totalorder %s21, 0
      %s228 = scalar_select %p227, %s21, 0
      %s229 = sadd.s32 %s228, %s226
      %s230 = scalar_lea.vmem %s4, %s229
      %s231 = smul.u32 16, %s21
      %p232 = scmp.lt.s32.totalorder %s20, 1
      %s233 = scalar_select %p232, %s20, 1
      %p234 = scmp.lt.s32.totalorder %s231, 15
      %s235 = scalar_select %p234, %s231, 15
      %s236 = smul.addr %s235, 2
      %s237 = smul.addr %s233, 32
      %s238 = sadd.s32 %s236, %s237
      %s239 = smul.addr %s238, 8
      %s240 = scalar_lea.vmem %s0, %s239
      %s241 = smul.u32 16, %s21
      %s242 = smul.u32 16, %s21
      %p243 = scmp.lt.s32.totalorder %s20, 1
      %s244 = scalar_select %p243, %s20, 1
      %p245 = scmp.lt.s32.totalorder %s242, 15
      %s246 = scalar_select %p245, %s242, 15
      %s247 = smul.addr %s246, 2
      %s248 = smul.addr %s244, 32
      %s249 = sadd.s32 %s247, %s248
      %s250 = smul.addr %s249, 8
      %s251 = scalar_lea.vmem %s3, %s250
      %s252 = smul.u32 16, %s21
      %p253 = scmp.lt.s32.totalorder %s20, 1
      %s254 = scalar_select %p253, %s20, 1
      %p255 = scmp.lt.s32.totalorder %s21, 0
      %s256 = scalar_select %p255, %s21, 0
      %s257 = sadd.s32 %s256, %s254
      %s258 = scalar_lea.vmem %s4, %s257
      %v259 = vld [vmem:[%s240] sm:$0xff]
      %v260 = vld [vmem:[%s240 + $0x8] sm:$0xff]
      %v261 = vld [vmem:[%s240 + $0x10] sm:$0xff]
      %v262 = vld [vmem:[%s240 + $0x18] sm:$0xff]
      %v263 = vld [vmem:[%s240 + $0x20] sm:$0xff]
      %v264 = vld [vmem:[%s240 + $0x28] sm:$0xff]
      %v265 = vld [vmem:[%s240 + $0x30] sm:$0xff]
      %v266 = vld [vmem:[%s240 + $0x38] sm:$0xff]
      %v267 = vld [vmem:[%s240 + $0x40] sm:$0xff]
      %v268 = vld [vmem:[%s240 + $0x48] sm:$0xff]
      %v269 = vld [vmem:[%s240 + $0x50] sm:$0xff]
      %v270 = vld [vmem:[%s240 + $0x58] sm:$0xff]
      %v271 = vld [vmem:[%s240 + $0x60] sm:$0xff]
      %v272 = vld [vmem:[%s240 + $0x68] sm:$0xff]
      %v273 = vld [vmem:[%s240 + $0x70] sm:$0xff]
      %v274 = vld [vmem:[%s240 + $0x78] sm:$0xff]
      %v275 = vld [vmem:[%s240 + $0x80] sm:$0xff]
      %v276 = vld [vmem:[%s240 + $0x88] sm:$0xff]
      %v277 = vld [vmem:[%s240 + $0x90] sm:$0xff]
      %v278 = vld [vmem:[%s240 + $0x98] sm:$0xff]
      %v279 = vld [vmem:[%s240 + $0xa0] sm:$0xff]
      %v280 = vld [vmem:[%s240 + $0xa8] sm:$0xff]
      %v281 = vld [vmem:[%s240 + $0xb0] sm:$0xff]
      %v282 = vld [vmem:[%s240 + $0xb8] sm:$0xff]
      %v283 = vld [vmem:[%s240 + $0xc0] sm:$0xff]
      %v284 = vld [vmem:[%s240 + $0xc8] sm:$0xff]
      %v285 = vld [vmem:[%s240 + $0xd0] sm:$0xff]
      %v286 = vld [vmem:[%s240 + $0xd8] sm:$0xff]
      %v287 = vld [vmem:[%s240 + $0xe0] sm:$0xff]
      %v288 = vld [vmem:[%s240 + $0xe8] sm:$0xff]
      %v289 = vld [vmem:[%s240 + $0xf0] sm:$0xff]
      %v290 = vld [vmem:[%s240 + $0xf8] sm:$0xff]
      %v291 = vld [vmem:[%s1] sm:$0x1]
      %v293 = vlaneseq
      %v294 = vshrl.u32 %v293, 7
      %v295 = vsub.s32 0, %v294
      %v296 = vrot.slane %v291, %v295
      %v298 = vmul.f32 %v259, %v296
      %v299 = vmul.f32 %v260, %v296
      %v300 = vmul.f32 %v261, %v296
      %v301 = vmul.f32 %v262, %v296
      %v302 = vmul.f32 %v263, %v296
      %v303 = vmul.f32 %v264, %v296
      %v304 = vmul.f32 %v265, %v296
      %v305 = vmul.f32 %v266, %v296
      %v306 = vmul.f32 %v267, %v296
      %v307 = vmul.f32 %v268, %v296
      %v308 = vmul.f32 %v269, %v296
      %v309 = vmul.f32 %v270, %v296
      %v310 = vmul.f32 %v271, %v296
      %v311 = vmul.f32 %v272, %v296
      %v312 = vmul.f32 %v273, %v296
      %v313 = vmul.f32 %v274, %v296
      %v314 = vmul.f32 %v275, %v296
      %v315 = vmul.f32 %v276, %v296
      %v316 = vmul.f32 %v277, %v296
      %v317 = vmul.f32 %v278, %v296
      %v318 = vmul.f32 %v279, %v296
      %v319 = vmul.f32 %v280, %v296
      %v320 = vmul.f32 %v281, %v296
      %v321 = vmul.f32 %v282, %v296
      %v322 = vmul.f32 %v283, %v296
      %v323 = vmul.f32 %v284, %v296
      %v324 = vmul.f32 %v285, %v296
      %v325 = vmul.f32 %v286, %v296
      %v326 = vmul.f32 %v287, %v296
      %v327 = vmul.f32 %v288, %v296
      %v328 = vmul.f32 %v289, %v296
      %v329 = vmul.f32 %v290, %v296
      %v330 = vld [vmem:[%s2] sm:$0x1]
      %v332 = vlaneseq
      %v333 = vshrl.u32 %v332, 7
      %v334 = vsub.s32 0, %v333
      %v335 = vrot.slane %v330, %v334
      %v337 = vadd.f32 %v298, %v335
      %v338 = vadd.f32 %v299, %v335
      %v339 = vadd.f32 %v300, %v335
      %v340 = vadd.f32 %v301, %v335
      %v341 = vadd.f32 %v302, %v335
      %v342 = vadd.f32 %v303, %v335
      %v343 = vadd.f32 %v304, %v335
      %v344 = vadd.f32 %v305, %v335
      %v345 = vadd.f32 %v306, %v335
      %v346 = vadd.f32 %v307, %v335
      %v347 = vadd.f32 %v308, %v335
      %v348 = vadd.f32 %v309, %v335
      %v349 = vadd.f32 %v310, %v335
      %v350 = vadd.f32 %v311, %v335
      %v351 = vadd.f32 %v312, %v335
      %v352 = vadd.f32 %v313, %v335
      %v353 = vadd.f32 %v314, %v335
      %v354 = vadd.f32 %v315, %v335
      %v355 = vadd.f32 %v316, %v335
      %v356 = vadd.f32 %v317, %v335
      %v357 = vadd.f32 %v318, %v335
      %v358 = vadd.f32 %v319, %v335
      %v359 = vadd.f32 %v320, %v335
      %v360 = vadd.f32 %v321, %v335
      %v361 = vadd.f32 %v322, %v335
      %v362 = vadd.f32 %v323, %v335
      %v363 = vadd.f32 %v324, %v335
      %v364 = vadd.f32 %v325, %v335
      %v365 = vadd.f32 %v326, %v335
      %v366 = vadd.f32 %v327, %v335
      %v367 = vadd.f32 %v328, %v335
      %v368 = vadd.f32 %v329, %v335
      %v369 = vmax.f32 %v337, 0.0
      %v370 = vmax.f32 %v338, 0.0
      %v371 = vmax.f32 %v339, 0.0
      %v372 = vmax.f32 %v340, 0.0
      %v373 = vmax.f32 %v341, 0.0
      %v374 = vmax.f32 %v342, 0.0
      %v375 = vmax.f32 %v343, 0.0
      %v376 = vmax.f32 %v344, 0.0
      %v377 = vmax.f32 %v345, 0.0
      %v378 = vmax.f32 %v346, 0.0
      %v379 = vmax.f32 %v347, 0.0
      %v380 = vmax.f32 %v348, 0.0
      %v381 = vmax.f32 %v349, 0.0
      %v382 = vmax.f32 %v350, 0.0
      %v383 = vmax.f32 %v351, 0.0
      %v384 = vmax.f32 %v352, 0.0
      %v385 = vmax.f32 %v353, 0.0
      %v386 = vmax.f32 %v354, 0.0
      %v387 = vmax.f32 %v355, 0.0
      %v388 = vmax.f32 %v356, 0.0
      %v389 = vmax.f32 %v357, 0.0
      %v390 = vmax.f32 %v358, 0.0
      %v391 = vmax.f32 %v359, 0.0
      %v392 = vmax.f32 %v360, 0.0
      %v393 = vmax.f32 %v361, 0.0
      %v394 = vmax.f32 %v362, 0.0
      %v395 = vmax.f32 %v363, 0.0
      %v396 = vmax.f32 %v364, 0.0
      %v397 = vmax.f32 %v365, 0.0
      %v398 = vmax.f32 %v366, 0.0
      %v399 = vmax.f32 %v367, 0.0
      %v400 = vmax.f32 %v368, 0.0
      %401 = vst [vmem:[%s251] sm:$0xff] %v369
      %402 = vst [vmem:[%s251 + $0x8] sm:$0xff] %v370
      %403 = vst [vmem:[%s251 + $0x10] sm:$0xff] %v371
      %404 = vst [vmem:[%s251 + $0x18] sm:$0xff] %v372
      %405 = vst [vmem:[%s251 + $0x20] sm:$0xff] %v373
      %406 = vst [vmem:[%s251 + $0x28] sm:$0xff] %v374
      %407 = vst [vmem:[%s251 + $0x30] sm:$0xff] %v375
      %408 = vst [vmem:[%s251 + $0x38] sm:$0xff] %v376
      %409 = vst [vmem:[%s251 + $0x40] sm:$0xff] %v377
      %410 = vst [vmem:[%s251 + $0x48] sm:$0xff] %v378
      %411 = vst [vmem:[%s251 + $0x50] sm:$0xff] %v379
      %412 = vst [vmem:[%s251 + $0x58] sm:$0xff] %v380
      %413 = vst [vmem:[%s251 + $0x60] sm:$0xff] %v381
      %414 = vst [vmem:[%s251 + $0x68] sm:$0xff] %v382
      %415 = vst [vmem:[%s251 + $0x70] sm:$0xff] %v383
      %416 = vst [vmem:[%s251 + $0x78] sm:$0xff] %v384
      %417 = vst [vmem:[%s251 + $0x80] sm:$0xff] %v385
      %418 = vst [vmem:[%s251 + $0x88] sm:$0xff] %v386
      %419 = vst [vmem:[%s251 + $0x90] sm:$0xff] %v387
      %420 = vst [vmem:[%s251 + $0x98] sm:$0xff] %v388
      %421 = vst [vmem:[%s251 + $0xa0] sm:$0xff] %v389
      %422 = vst [vmem:[%s251 + $0xa8] sm:$0xff] %v390
      %423 = vst [vmem:[%s251 + $0xb0] sm:$0xff] %v391
      %424 = vst [vmem:[%s251 + $0xb8] sm:$0xff] %v392
      %425 = vst [vmem:[%s251 + $0xc0] sm:$0xff] %v393
      %426 = vst [vmem:[%s251 + $0xc8] sm:$0xff] %v394
      %427 = vst [vmem:[%s251 + $0xd0] sm:$0xff] %v395
      %428 = vst [vmem:[%s251 + $0xd8] sm:$0xff] %v396
      %429 = vst [vmem:[%s251 + $0xe0] sm:$0xff] %v397
      %430 = vst [vmem:[%s251 + $0xe8] sm:$0xff] %v398
      %431 = vst [vmem:[%s251 + $0xf0] sm:$0xff] %v399
      %432 = vst [vmem:[%s251 + $0xf8] sm:$0xff] %v400
      %433 = vmatprep.subr.mxu0 0.0
      %434 = vmatpush1.msra.mxu0 %v384
      %435 = vmatprep.subr.mxu0 0.0
      %436 = vmatpush1.msra.mxu0 %v383
      %437 = vmatprep.subr.mxu0 0.0
      %438 = vmatpush1.msra.mxu0 %v382
      %439 = vmatprep.subr.mxu0 0.0
      %440 = vmatpush1.msra.mxu0 %v381
      %441 = vmatprep.subr.mxu0 0.0
      %442 = vmatpush1.msra.mxu0 %v380
      %443 = vmatprep.subr.mxu0 0.0
      %444 = vmatpush1.msra.mxu0 %v379
      %445 = vmatprep.subr.mxu0 0.0
      %446 = vmatpush1.msra.mxu0 %v378
      %447 = vmatprep.subr.mxu0 0.0
      %448 = vmatpush1.msra.mxu0 %v377
      %449 = vmatprep.subr.mxu0 0.0
      %450 = vmatpush1.msra.mxu0 %v376
      %451 = vmatprep.subr.mxu0 0.0
      %452 = vmatpush1.msra.mxu0 %v375
      %453 = vmatprep.subr.mxu0 0.0
      %454 = vmatpush1.msra.mxu0 %v374
      %455 = vmatprep.subr.mxu0 0.0
      %456 = vmatpush1.msra.mxu0 %v373
      %457 = vmatprep.subr.mxu0 0.0
      %458 = vmatpush1.msra.mxu0 %v372
      %459 = vmatprep.subr.mxu0 0.0
      %460 = vmatpush1.msra.mxu0 %v371
      %461 = vmatprep.subr.mxu0 0.0
      %462 = vmatpush1.msra.mxu0 %v370
      %463 = vmatprep.subr.mxu0 0.0
      %464 = vmatpush1.msra.mxu0 %v369
      %465 = vmatprep.subr.mxu0 0.0
      %466 = vmatpush2.msra.mxu0 %v400
      %467 = vmatprep.subr.mxu0 0.0
      %468 = vmatpush2.msra.mxu0 %v399
      %469 = vmatprep.subr.mxu0 0.0
      %470 = vmatpush2.msra.mxu0 %v398
      %471 = vmatprep.subr.mxu0 0.0
      %472 = vmatpush2.msra.mxu0 %v397
      %473 = vmatprep.subr.mxu0 0.0
      %474 = vmatpush2.msra.mxu0 %v396
      %475 = vmatprep.subr.mxu0 0.0
      %476 = vmatpush2.msra.mxu0 %v395
      %477 = vmatprep.subr.mxu0 0.0
      %478 = vmatpush2.msra.mxu0 %v394
      %479 = vmatprep.subr.mxu0 0.0
      %480 = vmatpush2.msra.mxu0 %v393
      %481 = vmatprep.subr.mxu0 0.0
      %482 = vmatpush2.msra.mxu0 %v392
      %483 = vmatprep.subr.mxu0 0.0
      %484 = vmatpush2.msra.mxu0 %v391
      %485 = vmatprep.subr.mxu0 0.0
      %486 = vmatpush2.msra.mxu0 %v390
      %487 = vmatprep.subr.mxu0 0.0
      %488 = vmatpush2.msra.mxu0 %v389
      %489 = vmatprep.subr.mxu0 0.0
      %490 = vmatpush2.msra.mxu0 %v388
      %491 = vmatprep.subr.mxu0 0.0
      %492 = vmatpush2.msra.mxu0 %v387
      %493 = vmatprep.subr.mxu0 0.0
      %494 = vmatpush2.msra.mxu0 %v386
      %495 = vmatprep.subr.mxu0 0.0
      %496 = vmatpush2.msra.mxu0 %v385
      %497 = vmatprep.mubr.f32.mxu0 1.0
      %498 = vmatmul.mubr.f32.gmra.mxu0 1.0
      %v499 = vpop.f32.mrf.mxu0
      %v500 = vadd.f32 0.0, %v499
      %v501 = vpop.f32.mrf.mxu0
      %502 = vdwg.mxu0
      %503 = vst [vmem:[%s258] sm:$0x1] %v500
      %s504 = smul.u32 16, %s21
      %p505 = scmp.lt.s32.totalorder %s20, 1
      %s506 = scalar_select %p505, %s20, 1
      %p507 = scmp.lt.s32.totalorder %s504, 15
      %s508 = scalar_select %p507, %s504, 15
      %s509 = smul.addr %s508, 2
      %s510 = smul.addr %s506, 32
      %s511 = sadd.s32 %s509, %s510
      %s512 = smul.addr %s511, 8
      %s513 = scalar_lea.vmem %s3, %s512
      %p514 = scmp.lt.s32.totalorder %s20, 1
      %s515 = scalar_select %p514, %s20, 1
      %p516 = scmp.lt.s32.totalorder %s21, 0
      %s517 = scalar_select %p516, %s21, 0
      %s518 = sadd.s32 %s517, %s515
      %s519 = scalar_lea.vmem %s4, %s518
      // Predicated region
      $region33: #{attention_refinement.5} parent=31 // pred_check
        %p520 = pneg %p118
      $region34: #{attention_refinement.5} parent=31 // pred_check_branch
        %522 = sbr.rel (%p520) target = $region36
      $region35: #{attention_refinement.5} parent=31 // pred_region
        %s523 = smul.u32 16, %s21
      $region36: #{attention_refinement.5} parent=31 // pred_fallthru
        _
      // Predicated region
      $region37: #{attention_refinement.5} parent=31 // pred_check
        %p524 = pneg %p146
      $region38: #{attention_refinement.5} parent=31 // pred_check_branch
        %526 = sbr.rel (%p524) target = $region40
      $region39: #{attention_refinement.5} parent=31 // pred_region
        _
      $region40: #{attention_refinement.5} parent=31 // pred_fallthru
        _
    $region32: #{attention_refinement.5} parent=5 // pred_fallthru
      _
    %p527 = scmp.le.s32.totalorder 2, %s11
    // Predicated region
    $region41: #{attention_refinement.5} parent=5 // pred_check
      %p528 = pneg %p527
    $region42: #{attention_refinement.5} parent=5 // pred_check_branch
      %530 = sbr.rel (%p528) target = $region44
    $region43: #{attention_refinement.5} parent=5 // pred_region
      %s531 = ssub.s32 %s11, 2
      // Predicated region
      $region45: #{attention_refinement.5} parent=43 // pred_check
        %p532 = pneg %p124
      $region46: #{attention_refinement.5} parent=43 // pred_check_branch
        %534 = sbr.rel (%p532) target = $region48
      $region47: #{attention_refinement.5} parent=43 // pred_region
        %s535 = smul.u32 16, %s23
        %p536 = scmp.lt.s32.totalorder %s22, 1
        %s537 = scalar_select %p536, %s22, 1
        %p538 = scmp.lt.s32.totalorder %s535, 15
        %s539 = scalar_select %p538, %s535, 15
        %s540 = smul.addr %s539, 2
        %s541 = smul.addr %s537, 32
        %s542 = sadd.s32 %s540, %s541
        %s543 = smul.addr %s542, 8
        %s544 = scalar_lea.vmem %s3, %s543
      $region48: #{attention_refinement.5} parent=43 // pred_fallthru
        _
      // Predicated region
      $region49: #{attention_refinement.5} parent=43 // pred_check
        %p545 = pneg %p152
      $region50: #{attention_refinement.5} parent=43 // pred_check_branch
        %547 = sbr.rel (%p545) target = $region52
      $region51: #{attention_refinement.5} parent=43 // pred_region
        %p548 = scmp.lt.s32.totalorder %s22, 1
        %s549 = scalar_select %p548, %s22, 1
        %p550 = scmp.lt.s32.totalorder %s23, 0
        %s551 = scalar_select %p550, %s23, 0
        %s552 = sadd.s32 %s551, %s549
        %s553 = scalar_lea.vmem %s4, %s552
      $region52: #{attention_refinement.5} parent=43 // pred_fallthru
        _
    $region44: #{attention_refinement.5} parent=5 // pred_fallthru
      _
  $region6: #{attention_refinement.5} parent=0 // loop_footer
    %s15 = sadd.s32 1, %s11
  $region7: #{attention_refinement.5} parent=0 // loop_footer_branch
    %10 = sbr.rel target = $region3
  $region8: #{attention_refinement.5} parent=0 // loop_exit
    _

// kernel: attention_refinement.7
$region0: #{attention_refinement.7}
  #allocation0 [shape = 'u32[]', space=smem, size = 0x4, offset = 0x4, fixed_abs, tag = 'smem constant byte address 0x4 - core index']
  #allocation1 [shape = 'u32[144,128]{1,0:T(1,128)}', space=vmem, size = 0x12000, scoped, tag = 'internal scratch']
  %s0 = inlined_call_operand.vmem [shape: f32[2,16,16,128], index: 0, kind: input, shape index: {}]
  %s1 = inlined_call_operand.vmem [shape: f32[2,1,128], index: 1, kind: input, shape index: {}]
  %s2 = inlined_call_operand.vmem [shape: f32[2,16,16,128], index: 2, kind: output, shape index: {}]
  %s3 = sld [smem:[#allocation0]]
  $region41: #{attention_refinement.7} parent=0
    _
  %s5 = ssub.s32 1, %s3
  %s6 = scalar_select 0, %s5, %s3
  loop: start=0, step=1, limit=4
  $region2: #{attention_refinement.7} parent=0 // loop_pre_header
    _
  $region3: #{attention_refinement.7} parent=0 // loop_header
    %s8 = sphi 0, %s12
    %p9 = scmp.ge.s32.totalorder %s8, 4
    %s15 = sphi 0, %s27
    %s16 = sphi 0, %s23
    %s17 = sphi 0, %s15
    %s18 = sphi 0, %s16
    %s19 = sphi 0, %s17
    %s20 = sphi 0, %s18
    %s32 = sphi 0, %s34
    %s35 = sphi 0, %s32
    %s36 = sphi 0, %s35
    %s52 = sphi 0, %s36
    %s58 = sphi 0, %s60
    %s61 = sphi 0, %s58
    %s62 = sphi 0, %s61
    %s78 = sphi 0, %s62
    %s86 = sphi 0, %s88
    %s89 = sphi 0, %s86
    %s90 = sphi 0, %s89
    %s106 = sphi 0, %s90
  $region4: #{attention_refinement.7} parent=0 // loop_header_branch
    %11 = sbr.rel (%p9) target = $region8
  $region5: #{attention_refinement.7} parent=0 // loop_body
    %s13 = ssub.s32 %s8, 1
    %s14 = ssub.s32 %s8, 2
    %s21 = sadd.s32 1, %s16
    %p22 = scmp.ge.s32.totalorder %s21, 1
    %s23 = scalar_select %p22, 0, %s21
    %s24 = sadd.s32 1, %s15
    %s25 = scalar_select %p22, %s24, %s15
    %p26 = scmp.ge.s32.totalorder %s25, 2
    %s27 = scalar_select %p26, 0, %s25
    %s28 = ssub.s32 %s15, %s27
    %s29 = ssub.s32 %s16, %s23
    %s30 = sor.u32 %s28, %s29
    %p31 = scmp.eq.s32.totalorder %s30, 0
    %s33 = sadd.s32 %s32, 1
    %s34 = scalar_select %p31, %s32, %s33
    %p37 = pneg %p31
    %p38 = scmp.eq.s32.totalorder %s8, 1
    %p39 = por %p37, %p38
    %p40 = scmp.ne.s32.totalorder %s32, %s35
    %p41 = scmp.eq.s32.totalorder %s8, 0
    %p42 = por %p40, %p41
    %p43 = scmp.ne.s32.totalorder %s32, %s35
    %p44 = scmp.eq.s32.totalorder %s13, 1
    %p45 = por %p43, %p44
    %p46 = scmp.ne.s32.totalorder %s35, %s36
    %p47 = scmp.eq.s32.totalorder %s13, 0
    %p48 = por %p46, %p47
    %p49 = scmp.ne.s32.totalorder %s35, %s36
    %p50 = scmp.eq.s32.totalorder %s14, 1
    %p51 = por %p49, %p50
    %p53 = scmp.ne.s32.totalorder %s36, %s52
    %p54 = scmp.eq.s32.totalorder %s14, 0
    %p55 = por %p53, %p54
    %s56 = ssub.s32 %s15, %s27
    %p57 = scmp.eq.s32.totalorder %s56, 0
    %s59 = sadd.s32 %s58, 1
    %s60 = scalar_select %p57, %s58, %s59
    %p63 = pneg %p57
    %p64 = scmp.eq.s32.totalorder %s8, 1
    %p65 = por %p63, %p64
    %p66 = scmp.ne.s32.totalorder %s58, %s61
    %p67 = scmp.eq.s32.totalorder %s8, 0
    %p68 = por %p66, %p67
    %p69 = scmp.ne.s32.totalorder %s58, %s61
    %p70 = scmp.eq.s32.totalorder %s13, 1
    %p71 = por %p69, %p70
    %p72 = scmp.ne.s32.totalorder %s61, %s62
    %p73 = scmp.eq.s32.totalorder %s13, 0
    %p74 = por %p72, %p73
    %p75 = scmp.ne.s32.totalorder %s61, %s62
    %p76 = scmp.eq.s32.totalorder %s14, 1
    %p77 = por %p75, %p76
    %p79 = scmp.ne.s32.totalorder %s62, %s78
    %p80 = scmp.eq.s32.totalorder %s14, 0
    %p81 = por %p79, %p80
    %s82 = ssub.s32 %s15, %s27
    %s83 = ssub.s32 %s16, %s23
    %s84 = sor.u32 %s82, %s83
    %p85 = scmp.eq.s32.totalorder %s84, 0
    %s87 = sadd.s32 %s86, 1
    %s88 = scalar_select %p85, %s86, %s87
    %p91 = pneg %p85
    %p92 = scmp.eq.s32.totalorder %s8, 1
    %p93 = por %p91, %p92
    %p94 = scmp.ne.s32.totalorder %s86, %s89
    %p95 = scmp.eq.s32.totalorder %s8, 0
    %p96 = por %p94, %p95
    %p97 = scmp.ne.s32.totalorder %s86, %s89
    %p98 = scmp.eq.s32.totalorder %s13, 1
    %p99 = por %p97, %p98
    %p100 = scmp.ne.s32.totalorder %s89, %s90
    %p101 = scmp.eq.s32.totalorder %s13, 0
    %p102 = por %p100, %p101
    %p103 = scmp.ne.s32.totalorder %s89, %s90
    %p104 = scmp.eq.s32.totalorder %s14, 1
    %p105 = por %p103, %p104
    %p107 = scmp.ne.s32.totalorder %s90, %s106
    %p108 = scmp.eq.s32.totalorder %s14, 0
    %p109 = por %p107, %p108
    %p110 = scmp.le.s32.totalorder 1, %s8
    %p111 = scmp.lt.s32.totalorder %s8, 3
    %p112 = pnand %p110, %p111
    %p113 = pneg %p112
    // Predicated region
    $region9: #{attention_refinement.7} parent=5 // pred_check
      _
    $region10: #{attention_refinement.7} parent=5 // pred_check_branch
      %115 = sbr.rel (%p112) target = $region12
    $region11: #{attention_refinement.7} parent=5 // pred_region
      %s116 = ssub.s32 %s8, 1
    $region12: #{attention_refinement.7} parent=5 // pred_fallthru
      _
    %p117 = scmp.lt.s32.totalorder %s8, 2
    // Predicated region
    $region13: #{attention_refinement.7} parent=5 // pred_check
      %p118 = pneg %p117
    $region14: #{attention_refinement.7} parent=5 // pred_check_branch
      %120 = sbr.rel (%p118) target = $region16
    $region15: #{attention_refinement.7} parent=5 // pred_region
      // Predicated region
      $region17: #{attention_refinement.7} parent=15 // pred_check
        %p121 = pneg %p42
      $region18: #{attention_refinement.7} parent=15 // pred_check_branch
        %123 = sbr.rel (%p121) target = $region20
      $region19: #{attention_refinement.7} parent=15 // pred_region
        %s124 = smul.u32 16, %s16
        %p125 = scmp.lt.s32.totalorder %s15, 1
        %s126 = scalar_select %p125, %s15, 1
        %p127 = scmp.lt.s32.totalorder %s124, 15
        %s128 = scalar_select %p127, %s124, 15
        %s129 = smul.addr %s128, 2
        %s130 = smul.addr %s126, 32
        %s131 = sadd.s32 %s129, %s130
        %s132 = smul.addr %s131, 8
        %s133 = scalar_lea.vmem %s0, %s132
        %s134 = smul.u32 16, %s16
      $region20: #{attention_refinement.7} parent=15 // pred_fallthru
        _
      // Predicated region
      $region21: #{attention_refinement.7} parent=15 // pred_check
        %p135 = pneg %p68
      $region22: #{attention_refinement.7} parent=15 // pred_check_branch
        %137 = sbr.rel (%p135) target = $region24
      $region23: #{attention_refinement.7} parent=15 // pred_region
        %p138 = scmp.lt.s32.totalorder %s15, 1
        %s139 = scalar_select %p138, %s15, 1
        %s140 = scalar_lea.vmem %s1, %s139
      $region24: #{attention_refinement.7} parent=15 // pred_fallthru
        _
    $region16: #{attention_refinement.7} parent=5 // pred_fallthru
      _
    %p141 = scmp.le.s32.totalorder 1, %s8
    %p142 = scmp.lt.s32.totalorder %s8, 3
    %p143 = pnand %p141, %p142
    %p144 = pneg %p143
    // Predicated region
    $region25: #{attention_refinement.7} parent=5 // pred_check
      _
    $region26: #{attention_refinement.7} parent=5 // pred_check_branch
      %146 = sbr.rel (%p143) target = $region28
    $region27: #{attention_refinement.7} parent=5 // pred_region
      %s147 = ssub.s32 %s8, 1
      %s148 = smul.u32 16, %s18
      %p149 = scmp.lt.s32.totalorder %s17, 1
      %s150 = scalar_select %p149, %s17, 1
      %p151 = scmp.lt.s32.totalorder %s148, 15
      %s152 = scalar_select %p151, %s148, 15
      %s153 = smul.addr %s152, 2
      %s154 = smul.addr %s150, 32
      %s155 = sadd.s32 %s153, %s154
      %s156 = smul.addr %s155, 8
      %s157 = scalar_lea.vmem %s0, %s156
      %p158 = pneg %p48
      %p159 = pneg %p45
      %p160 = scmp.lt.s32.totalorder %s17, 1
      %s161 = scalar_select %p160, %s17, 1
      %s162 = scalar_lea.vmem %s1, %s161
      %p163 = pneg %p74
      %p164 = pneg %p71
      %p165 = pneg %p102
      %p166 = pneg %p99
      %s167 = smul.u32 16, %s18
      %p168 = scmp.lt.s32.totalorder %s17, 1
      %s169 = scalar_select %p168, %s17, 1
      %p170 = scmp.lt.s32.totalorder %s167, 15
      %s171 = scalar_select %p170, %s167, 15
      %s172 = smul.addr %s171, 2
      %s173 = smul.addr %s169, 32
      %s174 = sadd.s32 %s172, %s173
      %s175 = smul.addr %s174, 8
      %s176 = scalar_lea.vmem %s2, %s175
      %s177 = smul.u32 16, %s18
      %p178 = scmp.lt.s32.totalorder %s17, 1
      %s179 = scalar_select %p178, %s17, 1
      %p180 = scmp.lt.s32.totalorder %s177, 15
      %s181 = scalar_select %p180, %s177, 15
      %s182 = smul.addr %s181, 2
      %s183 = smul.addr %s179, 32
      %s184 = sadd.s32 %s182, %s183
      %s185 = smul.addr %s184, 8
      %s186 = scalar_lea.vmem %s0, %s185
      %s187 = smul.u32 16, %s18
      %p188 = scmp.lt.s32.totalorder %s17, 1
      %s189 = scalar_select %p188, %s17, 1
      %s190 = scalar_lea.vmem %s1, %s189
      %s191 = smul.u32 16, %s18
      %p192 = scmp.lt.s32.totalorder %s17, 1
      %s193 = scalar_select %p192, %s17, 1
      %p194 = scmp.lt.s32.totalorder %s191, 15
      %s195 = scalar_select %p194, %s191, 15
      %s196 = smul.addr %s195, 2
      %s197 = smul.addr %s193, 32
      %s198 = sadd.s32 %s196, %s197
      %s199 = smul.addr %s198, 8
      %s200 = scalar_lea.vmem %s2, %s199
      %s201 = smul.u32 16, %s18
      %v202 = vld [vmem:[%s186] sm:$0xff]
      %v203 = vld [vmem:[%s186 + $0x8] sm:$0xff]
      %v204 = vld [vmem:[%s186 + $0x10] sm:$0xff]
      %v205 = vld [vmem:[%s186 + $0x18] sm:$0xff]
      %v206 = vld [vmem:[%s186 + $0x20] sm:$0xff]
      %v207 = vld [vmem:[%s186 + $0x28] sm:$0xff]
      %v208 = vld [vmem:[%s186 + $0x30] sm:$0xff]
      %v209 = vld [vmem:[%s186 + $0x38] sm:$0xff]
      %v210 = vld [vmem:[%s186 + $0x40] sm:$0xff]
      %v211 = vld [vmem:[%s186 + $0x48] sm:$0xff]
      %v212 = vld [vmem:[%s186 + $0x50] sm:$0xff]
      %v213 = vld [vmem:[%s186 + $0x58] sm:$0xff]
      %v214 = vld [vmem:[%s186 + $0x60] sm:$0xff]
      %v215 = vld [vmem:[%s186 + $0x68] sm:$0xff]
      %v216 = vld [vmem:[%s186 + $0x70] sm:$0xff]
      %v217 = vld [vmem:[%s186 + $0x78] sm:$0xff]
      %v218 = vld [vmem:[%s186 + $0x80] sm:$0xff]
      %v219 = vld [vmem:[%s186 + $0x88] sm:$0xff]
      %v220 = vld [vmem:[%s186 + $0x90] sm:$0xff]
      %v221 = vld [vmem:[%s186 + $0x98] sm:$0xff]
      %v222 = vld [vmem:[%s186 + $0xa0] sm:$0xff]
      %v223 = vld [vmem:[%s186 + $0xa8] sm:$0xff]
      %v224 = vld [vmem:[%s186 + $0xb0] sm:$0xff]
      %v225 = vld [vmem:[%s186 + $0xb8] sm:$0xff]
      %v226 = vld [vmem:[%s186 + $0xc0] sm:$0xff]
      %v227 = vld [vmem:[%s186 + $0xc8] sm:$0xff]
      %v228 = vld [vmem:[%s186 + $0xd0] sm:$0xff]
      %v229 = vld [vmem:[%s186 + $0xd8] sm:$0xff]
      %v230 = vld [vmem:[%s186 + $0xe0] sm:$0xff]
      %v231 = vld [vmem:[%s186 + $0xe8] sm:$0xff]
      %v232 = vld [vmem:[%s186 + $0xf0] sm:$0xff]
      %v233 = vld [vmem:[%s186 + $0xf8] sm:$0xff]
      %v234 = vld [vmem:[%s190] sm:$0x1]
      %v236 = vlaneseq
      %v237 = vshrl.u32 %v236, 7
      %v238 = vsub.s32 0, %v237
      %v239 = vrot.slane %v234, %v238
      %v241 = vmul.f32 %v202, %v239
      %v242 = vmul.f32 %v203, %v239
      %v243 = vmul.f32 %v204, %v239
      %v244 = vmul.f32 %v205, %v239
      %v245 = vmul.f32 %v206, %v239
      %v246 = vmul.f32 %v207, %v239
      %v247 = vmul.f32 %v208, %v239
      %v248 = vmul.f32 %v209, %v239
      %v249 = vmul.f32 %v210, %v239
      %v250 = vmul.f32 %v211, %v239
      %v251 = vmul.f32 %v212, %v239
      %v252 = vmul.f32 %v213, %v239
      %v253 = vmul.f32 %v214, %v239
      %v254 = vmul.f32 %v215, %v239
      %v255 = vmul.f32 %v216, %v239
      %v256 = vmul.f32 %v217, %v239
      %v257 = vmul.f32 %v218, %v239
      %v258 = vmul.f32 %v219, %v239
      %v259 = vmul.f32 %v220, %v239
      %v260 = vmul.f32 %v221, %v239
      %v261 = vmul.f32 %v222, %v239
      %v262 = vmul.f32 %v223, %v239
      %v263 = vmul.f32 %v224, %v239
      %v264 = vmul.f32 %v225, %v239
      %v265 = vmul.f32 %v226, %v239
      %v266 = vmul.f32 %v227, %v239
      %v267 = vmul.f32 %v228, %v239
      %v268 = vmul.f32 %v229, %v239
      %v269 = vmul.f32 %v230, %v239
      %v270 = vmul.f32 %v231, %v239
      %v271 = vmul.f32 %v232, %v239
      %v272 = vmul.f32 %v233, %v239
      %273 = vst [vmem:[%s200] sm:$0xff] %v241
      %274 = vst [vmem:[%s200 + $0x8] sm:$0xff] %v242
      %275 = vst [vmem:[%s200 + $0x10] sm:$0xff] %v243
      %276 = vst [vmem:[%s200 + $0x18] sm:$0xff] %v244
      %277 = vst [vmem:[%s200 + $0x20] sm:$0xff] %v245
      %278 = vst [vmem:[%s200 + $0x28] sm:$0xff] %v246
      %279 = vst [vmem:[%s200 + $0x30] sm:$0xff] %v247
      %280 = vst [vmem:[%s200 + $0x38] sm:$0xff] %v248
      %281 = vst [vmem:[%s200 + $0x40] sm:$0xff] %v249
      %282 = vst [vmem:[%s200 + $0x48] sm:$0xff] %v250
      %283 = vst [vmem:[%s200 + $0x50] sm:$0xff] %v251
      %284 = vst [vmem:[%s200 + $0x58] sm:$0xff] %v252
      %285 = vst [vmem:[%s200 + $0x60] sm:$0xff] %v253
      %286 = vst [vmem:[%s200 + $0x68] sm:$0xff] %v254
      %287 = vst [vmem:[%s200 + $0x70] sm:$0xff] %v255
      %288 = vst [vmem:[%s200 + $0x78] sm:$0xff] %v256
      %289 = vst [vmem:[%s200 + $0x80] sm:$0xff] %v257
      %290 = vst [vmem:[%s200 + $0x88] sm:$0xff] %v258
      %291 = vst [vmem:[%s200 + $0x90] sm:$0xff] %v259
      %292 = vst [vmem:[%s200 + $0x98] sm:$0xff] %v260
      %293 = vst [vmem:[%s200 + $0xa0] sm:$0xff] %v261
      %294 = vst [vmem:[%s200 + $0xa8] sm:$0xff] %v262
      %295 = vst [vmem:[%s200 + $0xb0] sm:$0xff] %v263
      %296 = vst [vmem:[%s200 + $0xb8] sm:$0xff] %v264
      %297 = vst [vmem:[%s200 + $0xc0] sm:$0xff] %v265
      %298 = vst [vmem:[%s200 + $0xc8] sm:$0xff] %v266
      %299 = vst [vmem:[%s200 + $0xd0] sm:$0xff] %v267
      %300 = vst [vmem:[%s200 + $0xd8] sm:$0xff] %v268
      %301 = vst [vmem:[%s200 + $0xe0] sm:$0xff] %v269
      %302 = vst [vmem:[%s200 + $0xe8] sm:$0xff] %v270
      %303 = vst [vmem:[%s200 + $0xf0] sm:$0xff] %v271
      %304 = vst [vmem:[%s200 + $0xf8] sm:$0xff] %v272
      %s305 = smul.u32 16, %s18
      %p306 = scmp.lt.s32.totalorder %s17, 1
      %s307 = scalar_select %p306, %s17, 1
      %p308 = scmp.lt.s32.totalorder %s305, 15
      %s309 = scalar_select %p308, %s305, 15
      %s310 = smul.addr %s309, 2
      %s311 = smul.addr %s307, 32
      %s312 = sadd.s32 %s310, %s311
      %s313 = smul.addr %s312, 8
      %s314 = scalar_lea.vmem %s2, %s313
      // Predicated region
      $region29: #{attention_refinement.7} parent=27 // pred_check
        %p315 = pneg %p99
      $region30: #{attention_refinement.7} parent=27 // pred_check_branch
        %317 = sbr.rel (%p315) target = $region32
      $region31: #{attention_refinement.7} parent=27 // pred_region
        %s318 = smul.u32 16, %s18
      $region32: #{attention_refinement.7} parent=27 // pred_fallthru
        _
    $region28: #{attention_refinement.7} parent=5 // pred_fallthru
      _
    %p319 = scmp.le.s32.totalorder 2, %s8
    // Predicated region
    $region33: #{attention_refinement.7} parent=5 // pred_check
      %p320 = pneg %p319
    $region34: #{attention_refinement.7} parent=5 // pred_check_branch
      %322 = sbr.rel (%p320) target = $region36
    $region35: #{attention_refinement.7} parent=5 // pred_region
      %s323 = ssub.s32 %s8, 2
      // Predicated region
      $region37: #{attention_refinement.7} parent=35 // pred_check
        %p324 = pneg %p105
      $region38: #{attention_refinement.7} parent=35 // pred_check_branch
        %326 = sbr.rel (%p324) target = $region40
      $region39: #{attention_refinement.7} parent=35 // pred_region
        %s327 = smul.u32 16, %s20
        %p328 = scmp.lt.s32.totalorder %s19, 1
        %s329 = scalar_select %p328, %s19, 1
        %p330 = scmp.lt.s32.totalorder %s327, 15
        %s331 = scalar_select %p330, %s327, 15
        %s332 = smul.addr %s331, 2
        %s333 = smul.addr %s329, 32
        %s334 = sadd.s32 %s332, %s333
        %s335 = smul.addr %s334, 8
        %s336 = scalar_lea.vmem %s2, %s335
      $region40: #{attention_refinement.7} parent=35 // pred_fallthru
        _
    $region36: #{attention_refinement.7} parent=5 // pred_fallthru
      _
  $region6: #{attention_refinement.7} parent=0 // loop_footer
    %s12 = sadd.s32 1, %s8
  $region7: #{attention_refinement.7} parent=0 // loop_footer_branch
    %7 = sbr.rel target = $region3
  $region8: #{attention_refinement.7} parent=0 // loop_exit
    _

// kernel: attention_refinement.4
$region0: #{attention_refinement.4}
  #allocation0 [shape = 'u32[]', space=smem, size = 0x4, offset = 0x4, fixed_abs, tag = 'smem constant byte address 0x4 - core index']
  #allocation1 [shape = 'u32[144,128]{1,0:T(1,128)}', space=vmem, size = 0x12000, scoped, tag = 'internal scratch']
  %s0 = inlined_call_operand.vmem [shape: f32[2,16,18,8], index: 0, kind: input, shape index: {}]
  %s1 = inlined_call_operand.vmem [shape: f32[2,16,18,8], index: 1, kind: input, shape index: {}]
  %s2 = inlined_call_operand.vmem [shape: f32[2,16,18,8], index: 2, kind: input, shape index: {}]
  %s3 = inlined_call_operand.vmem [shape: f32[9,8,128], index: 3, kind: input, shape index: {}]
  %s4 = inlined_call_operand.vmem [shape: f32[2,16,16,128], index: 4, kind: output, shape index: {0}]
  %s5 = inlined_call_operand.vmem [shape: f32[2,1,2,128], index: 5, kind: output, shape index: {1}]
  %6 = xla_tuple %s4, %s5
  %s7 = sld [smem:[#allocation0]]
  $region57: #{attention_refinement.4} parent=0
    _
  %s9 = ssub.s32 1, %s7
  %s10 = scalar_select 0, %s9, %s7
  loop: start=0, step=1, limit=4
  $region2: #{attention_refinement.4} parent=0 // loop_pre_header
    _
  $region3: #{attention_refinement.4} parent=0 // loop_header
    %s12 = sphi 0, %s16
    %p13 = scmp.ge.s32.totalorder %s12, 4
    %s19 = sphi 0, %s31
    %s20 = sphi 0, %s27
    %s21 = sphi 0, %s19
    %s22 = sphi 0, %s20
    %s23 = sphi 0, %s21
    %s24 = sphi 0, %s22
    %s36 = sphi 0, %s38
    %s39 = sphi 0, %s36
    %s40 = sphi 0, %s39
    %s56 = sphi 0, %s40
    %s64 = sphi 0, %s66
    %s67 = sphi 0, %s64
    %s68 = sphi 0, %s67
    %s84 = sphi 0, %s68
    %s92 = sphi 0, %s94
    %s95 = sphi 0, %s92
    %s96 = sphi 0, %s95
    %s112 = sphi 0, %s96
    %s116 = sphi 0, %s116
    %s118 = sphi 0, %s116
    %s119 = sphi 0, %s118
    %s133 = sphi 0, %s119
    %s141 = sphi 0, %s143
    %s144 = sphi 0, %s141
    %s145 = sphi 0, %s144
    %s161 = sphi 0, %s145
    %s169 = sphi 0, %s171
    %s172 = sphi 0, %s169
    %s173 = sphi 0, %s172
    %s189 = sphi 0, %s173
  $region4: #{attention_refinement.4} parent=0 // loop_header_branch
    %15 = sbr.rel (%p13) target = $region8
  $region5: #{attention_refinement.4} parent=0 // loop_body
    %s17 = ssub.s32 %s12, 1
    %s18 = ssub.s32 %s12, 2
    %s25 = sadd.s32 1, %s20
    %p26 = scmp.ge.s32.totalorder %s25, 1
    %s27 = scalar_select %p26, 0, %s25
    %s28 = sadd.s32 1, %s19
    %s29 = scalar_select %p26, %s28, %s19
    %p30 = scmp.ge.s32.totalorder %s29, 2
    %s31 = scalar_select %p30, 0, %s29
    %s32 = ssub.s32 %s19, %s31
    %s33 = ssub.s32 %s20, %s27
    %s34 = sor.u32 %s32, %s33
    %p35 = scmp.eq.s32.totalorder %s34, 0
    %s37 = sadd.s32 %s36, 1
    %s38 = scalar_select %p35, %s36, %s37
    %p41 = pneg %p35
    %p42 = scmp.eq.s32.totalorder %s12, 1
    %p43 = por %p41, %p42
    %p44 = scmp.ne.s32.totalorder %s36, %s39
    %p45 = scmp.eq.s32.totalorder %s12, 0
    %p46 = por %p44, %p45
    %p47 = scmp.ne.s32.totalorder %s36, %s39
    %p48 = scmp.eq.s32.totalorder %s17, 1
    %p49 = por %p47, %p48
    %p50 = scmp.ne.s32.totalorder %s39, %s40
    %p51 = scmp.eq.s32.totalorder %s17, 0
    %p52 = por %p50, %p51
    %p53 = scmp.ne.s32.totalorder %s39, %s40
    %p54 = scmp.eq.s32.totalorder %s18, 1
    %p55 = por %p53, %p54
    %p57 = scmp.ne.s32.totalorder %s40, %s56
    %p58 = scmp.eq.s32.totalorder %s18, 0
    %p59 = por %p57, %p58
    %s60 = ssub.s32 %s19, %s31
    %s61 = ssub.s32 %s20, %s27
    %s62 = sor.u32 %s60, %s61
    %p63 = scmp.eq.s32.totalorder %s62, 0
    %s65 = sadd.s32 %s64, 1
    %s66 = scalar_select %p63, %s64, %s65
    %p69 = pneg %p63
    %p70 = scmp.eq.s32.totalorder %s12, 1
    %p71 = por %p69, %p70
    %p72 = scmp.ne.s32.totalorder %s64, %s67
    %p73 = scmp.eq.s32.totalorder %s12, 0
    %p74 = por %p72, %p73
    %p75 = scmp.ne.s32.totalorder %s64, %s67
    %p76 = scmp.eq.s32.totalorder %s17, 1
    %p77 = por %p75, %p76
    %p78 = scmp.ne.s32.totalorder %s67, %s68
    %p79 = scmp.eq.s32.totalorder %s17, 0
    %p80 = por %p78, %p79
    %p81 = scmp.ne.s32.totalorder %s67, %s68
    %p82 = scmp.eq.s32.totalorder %s18, 1
    %p83 = por %p81, %p82
    %p85 = scmp.ne.s32.totalorder %s68, %s84
    %p86 = scmp.eq.s32.totalorder %s18, 0
    %p87 = por %p85, %p86
    %s88 = ssub.s32 %s19, %s31
    %s89 = ssub.s32 %s20, %s27
    %s90 = sor.u32 %s88, %s89
    %p91 = scmp.eq.s32.totalorder %s90, 0
    %s93 = sadd.s32 %s92, 1
    %s94 = scalar_select %p91, %s92, %s93
    %p97 = pneg %p91
    %p98 = scmp.eq.s32.totalorder %s12, 1
    %p99 = por %p97, %p98
    %p100 = scmp.ne.s32.totalorder %s92, %s95
    %p101 = scmp.eq.s32.totalorder %s12, 0
    %p102 = por %p100, %p101
    %p103 = scmp.ne.s32.totalorder %s92, %s95
    %p104 = scmp.eq.s32.totalorder %s17, 1
    %p105 = por %p103, %p104
    %p106 = scmp.ne.s32.totalorder %s95, %s96
    %p107 = scmp.eq.s32.totalorder %s17, 0
    %p108 = por %p106, %p107
    %p109 = scmp.ne.s32.totalorder %s95, %s96
    %p110 = scmp.eq.s32.totalorder %s18, 1
    %p111 = por %p109, %p110
    %p113 = scmp.ne.s32.totalorder %s96, %s112
    %p114 = scmp.eq.s32.totalorder %s18, 0
    %p115 = por %p113, %p114
    %s117 = sadd.s32 %s116, 1
    %p120 = scmp.eq.s32.totalorder %s12, 1
    %p121 = scmp.ne.s32.totalorder %s116, %s118
    %p122 = scmp.eq.s32.totalorder %s12, 0
    %p123 = por %p121, %p122
    %p124 = scmp.ne.s32.totalorder %s116, %s118
    %p125 = scmp.eq.s32.totalorder %s17, 1
    %p126 = por %p124, %p125
    %p127 = scmp.ne.s32.totalorder %s118, %s119
    %p128 = scmp.eq.s32.totalorder %s17, 0
    %p129 = por %p127, %p128
    %p130 = scmp.ne.s32.totalorder %s118, %s119
    %p131 = scmp.eq.s32.totalorder %s18, 1
    %p132 = por %p130, %p131
    %p134 = scmp.ne.s32.totalorder %s119, %s133
    %p135 = scmp.eq.s32.totalorder %s18, 0
    %p136 = por %p134, %p135
    %s137 = ssub.s32 %s19, %s31
    %s138 = ssub.s32 %s20, %s27
    %s139 = sor.u32 %s137, %s138
    %p140 = scmp.eq.s32.totalorder %s139, 0
    %s142 = sadd.s32 %s141, 1
    %s143 = scalar_select %p140, %s141, %s142
    %p146 = pneg %p140
    %p147 = scmp.eq.s32.totalorder %s12, 1
    %p148 = por %p146, %p147
    %p149 = scmp.ne.s32.totalorder %s141, %s144
    %p150 = scmp.eq.s32.totalorder %s12, 0
    %p151 = por %p149, %p150
    %p152 = scmp.ne.s32.totalorder %s141, %s144
    %p153 = scmp.eq.s32.totalorder %s17, 1
    %p154 = por %p152, %p153
    %p155 = scmp.ne.s32.totalorder %s144, %s145
    %p156 = scmp.eq.s32.totalorder %s17, 0
    %p157 = por %p155, %p156
    %p158 = scmp.ne.s32.totalorder %s144, %s145
    %p159 = scmp.eq.s32.totalorder %s18, 1
    %p160 = por %p158, %p159
    %p162 = scmp.ne.s32.totalorder %s145, %s161
    %p163 = scmp.eq.s32.totalorder %s18, 0
    %p164 = por %p162, %p163
    %s165 = ssub.s32 %s19, %s31
    %s166 = ssub.s32 %s20, %s27
    %s167 = sor.u32 %s165, %s166
    %p168 = scmp.eq.s32.totalorder %s167, 0
    %s170 = sadd.s32 %s169, 1
    %s171 = scalar_select %p168, %s169, %s170
    %p174 = pneg %p168
    %p175 = scmp.eq.s32.totalorder %s12, 1
    %p176 = por %p174, %p175
    %p177 = scmp.ne.s32.totalorder %s169, %s172
    %p178 = scmp.eq.s32.totalorder %s12, 0
    %p179 = por %p177, %p178
    %p180 = scmp.ne.s32.totalorder %s169, %s172
    %p181 = scmp.eq.s32.totalorder %s17, 1
    %p182 = por %p180, %p181
    %p183 = scmp.ne.s32.totalorder %s172, %s173
    %p184 = scmp.eq.s32.totalorder %s17, 0
    %p185 = por %p183, %p184
    %p186 = scmp.ne.s32.totalorder %s172, %s173
    %p187 = scmp.eq.s32.totalorder %s18, 1
    %p188 = por %p186, %p187
    %p190 = scmp.ne.s32.totalorder %s173, %s189
    %p191 = scmp.eq.s32.totalorder %s18, 0
    %p192 = por %p190, %p191
    %p193 = scmp.le.s32.totalorder 1, %s12
    %p194 = scmp.lt.s32.totalorder %s12, 3
    %p195 = pnand %p193, %p194
    %p196 = pneg %p195
    // Predicated region
    $region9: #{attention_refinement.4} parent=5 // pred_check
      _
    $region10: #{attention_refinement.4} parent=5 // pred_check_branch
      %198 = sbr.rel (%p195) target = $region12
    $region11: #{attention_refinement.4} parent=5 // pred_region
      %s199 = ssub.s32 %s12, 1
      // Predicated region
      $region13: #{attention_refinement.4} parent=11 // pred_check
        %p200 = pneg %p129
      $region14: #{attention_refinement.4} parent=11 // pred_check_branch
        %202 = sbr.rel (%p200) target = $region16
      $region15: #{attention_refinement.4} parent=11 // pred_region
        _
      $region16: #{attention_refinement.4} parent=11 // pred_fallthru
        _
    $region12: #{attention_refinement.4} parent=5 // pred_fallthru
      _
    %p203 = scmp.lt.s32.totalorder %s12, 2
    // Predicated region
    $region17: #{attention_refinement.4} parent=5 // pred_check
      %p204 = pneg %p203
    $region18: #{attention_refinement.4} parent=5 // pred_check_branch
      %206 = sbr.rel (%p204) target = $region20
    $region19: #{attention_refinement.4} parent=5 // pred_region
      // Predicated region
      $region21: #{attention_refinement.4} parent=19 // pred_check
        %p207 = pneg %p46
      $region22: #{attention_refinement.4} parent=19 // pred_check_branch
        %209 = sbr.rel (%p207) target = $region24
      $region23: #{attention_refinement.4} parent=19 // pred_region
        %s210 = smul.u32 16, %s20
        %p211 = scmp.lt.s32.totalorder %s19, 1
        %s212 = scalar_select %p211, %s19, 1
        %p213 = scmp.lt.s32.totalorder %s210, 15
        %s214 = scalar_select %p213, %s210, 15
        %s215 = smul.addr %s214, 3
        %s216 = smul.addr %s212, 48
        %s217 = sadd.s32 %s215, %s216
        %s218 = smul.addr %s217, 8
        %s219 = scalar_lea.vmem %s0, %s218
        %s220 = smul.u32 16, %s20
      $region24: #{attention_refinement.4} parent=19 // pred_fallthru
        _
      // Predicated region
      $region25: #{attention_refinement.4} parent=19 // pred_check
        %p221 = pneg %p74
      $region26: #{attention_refinement.4} parent=19 // pred_check_branch
        %223 = sbr.rel (%p221) target = $region28
      $region27: #{attention_refinement.4} parent=19 // pred_region
        %s224 = smul.u32 16, %s20
        %p225 = scmp.lt.s32.totalorder %s19, 1
        %s226 = scalar_select %p225, %s19, 1
        %p227 = scmp.lt.s32.totalorder %s224, 15
        %s228 = scalar_select %p227, %s224, 15
        %s229 = smul.addr %s228, 3
        %s230 = smul.addr %s226, 48
        %s231 = sadd.s32 %s229, %s230
        %s232 = smul.addr %s231, 8
        %s233 = scalar_lea.vmem %s1, %s232
        %s234 = smul.u32 16, %s20
      $region28: #{attention_refinement.4} parent=19 // pred_fallthru
        _
      // Predicated region
      $region29: #{attention_refinement.4} parent=19 // pred_check
        %p235 = pneg %p102
      $region30: #{attention_refinement.4} parent=19 // pred_check_branch
        %237 = sbr.rel (%p235) target = $region32
      $region31: #{attention_refinement.4} parent=19 // pred_region
        %s238 = smul.u32 16, %s20
        %p239 = scmp.lt.s32.totalorder %s19, 1
        %s240 = scalar_select %p239, %s19, 1
        %p241 = scmp.lt.s32.totalorder %s238, 15
        %s242 = scalar_select %p241, %s238, 15
        %s243 = smul.addr %s242, 3
        %s244 = smul.addr %s240, 48
        %s245 = sadd.s32 %s243, %s244
        %s246 = smul.addr %s245, 8
        %s247 = scalar_lea.vmem %s2, %s246
        %s248 = smul.u32 16, %s20
      $region32: #{attention_refinement.4} parent=19 // pred_fallthru
        _
    $region20: #{attention_refinement.4} parent=5 // pred_fallthru
      _
    %p249 = scmp.le.s32.totalorder 1, %s12
    %p250 = scmp.lt.s32.totalorder %s12, 3
    %p251 = pnand %p249, %p250
    %p252 = pneg %p251
    // Predicated region
    $region33: #{attention_refinement.4} parent=5 // pred_check
      _
    $region34: #{attention_refinement.4} parent=5 // pred_check_branch
      %254 = sbr.rel (%p251) target = $region36
    $region35: #{attention_refinement.4} parent=5 // pred_region
      %s255 = ssub.s32 %s12, 1
      %s256 = smul.u32 16, %s22
      %p257 = scmp.lt.s32.totalorder %s21, 1
      %s258 = scalar_select %p257, %s21, 1
      %p259 = scmp.lt.s32.totalorder %s256, 15
      %s260 = scalar_select %p259, %s256, 15
      %s261 = smul.addr %s260, 3
      %s262 = smul.addr %s258, 48
      %s263 = sadd.s32 %s261, %s262
      %s264 = smul.addr %s263, 8
      %s265 = scalar_lea.vmem %s0, %s264
      %p266 = pneg %p52
      %p267 = pneg %p49
      %s268 = smul.u32 16, %s22
      %p269 = scmp.lt.s32.totalorder %s21, 1
      %s270 = scalar_select %p269, %s21, 1
      %p271 = scmp.lt.s32.totalorder %s268, 15
      %s272 = scalar_select %p271, %s268, 15
      %s273 = smul.addr %s272, 3
      %s274 = smul.addr %s270, 48
      %s275 = sadd.s32 %s273, %s274
      %s276 = smul.addr %s275, 8
      %s277 = scalar_lea.vmem %s1, %s276
      %p278 = pneg %p80
      %p279 = pneg %p77
      %s280 = smul.u32 16, %s22
      %p281 = scmp.lt.s32.totalorder %s21, 1
      %s282 = scalar_select %p281, %s21, 1
      %p283 = scmp.lt.s32.totalorder %s280, 15
      %s284 = scalar_select %p283, %s280, 15
      %s285 = smul.addr %s284, 3
      %s286 = smul.addr %s282, 48
      %s287 = sadd.s32 %s285, %s286
      %s288 = smul.addr %s287, 8
      %s289 = scalar_lea.vmem %s2, %s288
      %p290 = pneg %p108
      %p291 = pneg %p105
      %p292 = pneg %p129
      %p293 = pneg %p126
      %p294 = pneg %p157
      %p295 = pneg %p154
      %s296 = smul.u32 16, %s22
      %p297 = scmp.lt.s32.totalorder %s21, 1
      %s298 = scalar_select %p297, %s21, 1
      %p299 = scmp.lt.s32.totalorder %s296, 15
      %s300 = scalar_select %p299, %s296, 15
      %s301 = smul.addr %s300, 2
      %s302 = smul.addr %s298, 32
      %s303 = sadd.s32 %s301, %s302
      %s304 = smul.addr %s303, 8
      %s305 = scalar_lea.vmem %s4, %s304
      %p306 = pneg %p185
      %p307 = pneg %p182
      %p308 = scmp.lt.s32.totalorder %s21, 1
      %s309 = scalar_select %p308, %s21, 1
      %p310 = scmp.lt.s32.totalorder %s22, 0
      %s311 = scalar_select %p310, %s22, 0
      %s312 = sadd.s32 %s311, %s309
      %s313 = smul.addr %s312, 2
      %s314 = scalar_lea.vmem %s5, %s313
      %s315 = smul.u32 16, %s22
      %p316 = scmp.lt.s32.totalorder %s21, 1
      %s317 = scalar_select %p316, %s21, 1
      %p318 = scmp.lt.s32.totalorder %s315, 15
      %s319 = scalar_select %p318, %s315, 15
      %s320 = smul.addr %s319, 3
      %s321 = smul.addr %s317, 48
      %s322 = sadd.s32 %s320, %s321
      %s323 = smul.addr %s322, 8
      %s324 = scalar_lea.vmem %s0, %s323
      %s325 = smul.u32 16, %s22
      %s326 = smul.u32 16, %s22
      %p327 = scmp.lt.s32.totalorder %s21, 1
      %s328 = scalar_select %p327, %s21, 1
      %p329 = scmp.lt.s32.totalorder %s326, 15
      %s330 = scalar_select %p329, %s326, 15
      %s331 = smul.addr %s330, 3
      %s332 = smul.addr %s328, 48
      %s333 = sadd.s32 %s331, %s332
      %s334 = smul.addr %s333, 8
      %s335 = scalar_lea.vmem %s1, %s334
      %s336 = smul.u32 16, %s22
      %s337 = smul.u32 16, %s22
      %p338 = scmp.lt.s32.totalorder %s21, 1
      %s339 = scalar_select %p338, %s21, 1
      %p340 = scmp.lt.s32.totalorder %s337, 15
      %s341 = scalar_select %p340, %s337, 15
      %s342 = smul.addr %s341, 3
      %s343 = smul.addr %s339, 48
      %s344 = sadd.s32 %s342, %s343
      %s345 = smul.addr %s344, 8
      %s346 = scalar_lea.vmem %s2, %s345
      %s347 = smul.u32 16, %s22
      %s348 = smul.u32 16, %s22
      %p349 = scmp.lt.s32.totalorder %s21, 1
      %s350 = scalar_select %p349, %s21, 1
      %p351 = scmp.lt.s32.totalorder %s348, 15
      %s352 = scalar_select %p351, %s348, 15
      %s353 = smul.addr %s352, 2
      %s354 = smul.addr %s350, 32
      %s355 = sadd.s32 %s353, %s354
      %s356 = smul.addr %s355, 8
      %s357 = scalar_lea.vmem %s4, %s356
      %s358 = smul.u32 16, %s22
      %p359 = scmp.lt.s32.totalorder %s21, 1
      %s360 = scalar_select %p359, %s21, 1
      %p361 = scmp.lt.s32.totalorder %s22, 0
      %s362 = scalar_select %p361, %s22, 0
      %s363 = sadd.s32 %s362, %s360
      %s364 = smul.addr %s363, 2
      %s365 = scalar_lea.vmem %s5, %s364
      %v366 = vld [vmem:[%s324] sm:$0xff]
      %v367 = vld [vmem:[%s324 + $0x8] sm:$0xff]
      %v368 = vld [vmem:[%s324 + $0x18] sm:$0xff]
      %v369 = vld [vmem:[%s324 + $0x20] sm:$0xff]
      %v370 = vld [vmem:[%s324 + $0x30] sm:$0xff]
      %v371 = vld [vmem:[%s324 + $0x38] sm:$0xff]
      %v372 = vld [vmem:[%s324 + $0x48] sm:$0xff]
      %v373 = vld [vmem:[%s324 + $0x50] sm:$0xff]
      %v374 = vld [vmem:[%s324 + $0x60] sm:$0xff]
      %v375 = vld [vmem:[%s324 + $0x68] sm:$0xff]
      %v376 = vld [vmem:[%s324 + $0x78] sm:$0xff]
      %v377 = vld [vmem:[%s324 + $0x80] sm:$0xff]
      %v378 = vld [vmem:[%s324 + $0x90] sm:$0xff]
      %v379 = vld [vmem:[%s324 + $0x98] sm:$0xff]
      %v380 = vld [vmem:[%s324 + $0xa8] sm:$0xff]
      %v381 = vld [vmem:[%s324 + $0xb0] sm:$0xff]
      %v382 = vld [vmem:[%s324 + $0xc0] sm:$0xff]
      %v383 = vld [vmem:[%s324 + $0xc8] sm:$0xff]
      %v384 = vld [vmem:[%s324 + $0xd8] sm:$0xff]
      %v385 = vld [vmem:[%s324 + $0xe0] sm:$0xff]
      %v386 = vld [vmem:[%s324 + $0xf0] sm:$0xff]
      %v387 = vld [vmem:[%s324 + $0xf8] sm:$0xff]
      %v388 = vld [vmem:[%s324 + $0x108] sm:$0xff]
      %v389 = vld [vmem:[%s324 + $0x110] sm:$0xff]
      %v390 = vld [vmem:[%s324 + $0x120] sm:$0xff]
      %v391 = vld [vmem:[%s324 + $0x128] sm:$0xff]
      %v392 = vld [vmem:[%s324 + $0x138] sm:$0xff]
      %v393 = vld [vmem:[%s324 + $0x140] sm:$0xff]
      %v394 = vld [vmem:[%s324 + $0x150] sm:$0xff]
      %v395 = vld [vmem:[%s324 + $0x158] sm:$0xff]
      %v396 = vld [vmem:[%s324 + $0x168] sm:$0xff]
      %v397 = vld [vmem:[%s324 + $0x170] sm:$0xff]
      %v398 = vld [vmem:[%s3] sm:$0xff]
      %v399 = vld [vmem:[%s324 + $0x1] sm:$0xff]
      %v400 = vld [vmem:[%s324 + $0x9] sm:$0xff]
      %v401 = vld [vmem:[%s324 + $0x19] sm:$0xff]
      %v402 = vld [vmem:[%s324 + $0x21] sm:$0xff]
      %v403 = vld [vmem:[%s324 + $0x31] sm:$0xff]
      %v404 = vld [vmem:[%s324 + $0x39] sm:$0xff]
      %v405 = vld [vmem:[%s324 + $0x49] sm:$0xff]
      %v406 = vld [vmem:[%s324 + $0x51] sm:$0xff]
      %v407 = vld [vmem:[%s324 + $0x61] sm:$0xff]
      %v408 = vld [vmem:[%s324 + $0x69] sm:$0xff]
      %v409 = vld [vmem:[%s324 + $0x79] sm:$0xff]
      %v410 = vld [vmem:[%s324 + $0x81] sm:$0xff]
      %v411 = vld [vmem:[%s324 + $0x91] sm:$0xff]
      %v412 = vld [vmem:[%s324 + $0x99] sm:$0xff]
      %v413 = vld [vmem:[%s324 + $0xa9] sm:$0xff]
      %v414 = vld [vmem:[%s324 + $0xb1] sm:$0xff]
      %v415 = vld [vmem:[%s324 + $0xc1] sm:$0xff]
      %v416 = vld [vmem:[%s324 + $0xc9] sm:$0xff]
      %v417 = vld [vmem:[%s324 + $0xd9] sm:$0xff]
      %v418 = vld [vmem:[%s324 + $0xe1] sm:$0xff]
      %v419 = vld [vmem:[%s324 + $0xf1] sm:$0xff]
      %v420 = vld [vmem:[%s324 + $0xf9] sm:$0xff]
      %v421 = vld [vmem:[%s324 + $0x109] sm:$0xff]
      %v422 = vld [vmem:[%s324 + $0x111] sm:$0xff]
      %v423 = vld [vmem:[%s324 + $0x121] sm:$0xff]
      %v424 = vld [vmem:[%s324 + $0x129] sm:$0xff]
      %v425 = vld [vmem:[%s324 + $0x139] sm:$0xff]
      %v426 = vld [vmem:[%s324 + $0x141] sm:$0xff]
      %v427 = vld [vmem:[%s324 + $0x151] sm:$0xff]
      %v428 = vld [vmem:[%s324 + $0x159] sm:$0xff]
      %v429 = vld [vmem:[%s324 + $0x169] sm:$0xff]
      %v430 = vld [vmem:[%s324 + $0x171] sm:$0xff]
      %s431 = scalar_lea.vmem %s3, 8
      %v432 = vld [vmem:[%s431] sm:$0xff]
      %vm433 = vcmask 64512
      %v435 = vsel %vm433, %v399, 0
      %v438 = vsel %vm433, %v400, 0
      %v441 = vsel %vm433, %v401, 0
      %v444 = vsel %vm433, %v402, 0
      %v447 = vsel %vm433, %v403, 0
      %v450 = vsel %vm433, %v404, 0
      %v453 = vsel %vm433, %v405, 0
      %v456 = vsel %vm433, %v406, 0
      %v459 = vsel %vm433, %v407, 0
      %v462 = vsel %vm433, %v408, 0
      %v465 = vsel %vm433, %v409, 0
      %v468 = vsel %vm433, %v410, 0
      %v471 = vsel %vm433, %v411, 0
      %v474 = vsel %vm433, %v412, 0
      %v477 = vsel %vm433, %v413, 0
      %v480 = vsel %vm433, %v414, 0
      %v483 = vsel %vm433, %v415, 0
      %v486 = vsel %vm433, %v416, 0
      %v489 = vsel %vm433, %v417, 0
      %v492 = vsel %vm433, %v418, 0
      %v495 = vsel %vm433, %v419, 0
      %v498 = vsel %vm433, %v420, 0
      %v501 = vsel %vm433, %v421, 0
      %v504 = vsel %vm433, %v422, 0
      %v507 = vsel %vm433, %v423, 0
      %v510 = vsel %vm433, %v424, 0
      %v513 = vsel %vm433, %v425, 0
      %v516 = vsel %vm433, %v426, 0
      %v519 = vsel %vm433, %v427, 0
      %v522 = vsel %vm433, %v428, 0
      %v525 = vsel %vm433, %v429, 0
      %v528 = vsel %vm433, %v430, 0
      %530 = vmatprep.subr.mxu0 0.0
      %531 = vmatpush1.msra.mxu0 0.0
      %532 = vmatprep.subr.mxu0 0.0
      %533 = vmatpush1.msra.mxu0 0.0
      %534 = vmatprep.subr.mxu0 0.0
      %535 = vmatpush1.msra.mxu0 0.0
      %536 = vmatprep.subr.mxu0 0.0
      %537 = vmatpush1.msra.mxu0 0.0
      %538 = vmatprep.subr.mxu0 0.0
      %539 = vmatpush1.msra.mxu0 0.0
      %540 = vmatprep.subr.mxu0 0.0
      %541 = vmatpush1.msra.mxu0 0.0
      %542 = vmatprep.subr.mxu0 0.0
      %543 = vmatpush1.msra.mxu0 0.0
      %544 = vmatprep.subr.mxu0 0.0
      %545 = vmatpush1.msra.mxu0 0.0
      %546 = vmatprep.subr.mxu0 0.0
      %547 = vmatpush1.msra.mxu0 0.0
      %548 = vmatprep.subr.mxu0 0.0
      %549 = vmatpush1.msra.mxu0 0.0
      %550 = vmatprep.subr.mxu0 0.0
      %551 = vmatpush1.msra.mxu0 0.0
      %552 = vmatprep.subr.mxu0 0.0
      %553 = vmatpush1.msra.mxu0 0.0
      %554 = vmatprep.subr.mxu0 0.0
      %555 = vmatpush1.msra.mxu0 0.0
      %556 = vmatprep.subr.mxu0 0.0
      %557 = vmatpush1.msra.mxu0 0.0
      %558 = vmatprep.subr.mxu0 0.0
      %559 = vmatpush1.msra.mxu0 0.0
      %560 = vmatprep.subr.mxu0 0.0
      %561 = vmatpush1.msra.mxu0 %v432
      %562 = vmatprep.subr.mxu0 0.0
      %563 = vmatpush2.msra.mxu0 0.0
      %564 = vmatprep.subr.mxu0 0.0
      %565 = vmatpush2.msra.mxu0 0.0
      %566 = vmatprep.subr.mxu0 0.0
      %567 = vmatpush2.msra.mxu0 0.0
      %568 = vmatprep.subr.mxu0 0.0
      %569 = vmatpush2.msra.mxu0 0.0
      %570 = vmatprep.subr.mxu0 0.0
      %571 = vmatpush2.msra.mxu0 0.0
      %572 = vmatprep.subr.mxu0 0.0
      %573 = vmatpush2.msra.mxu0 0.0
      %574 = vmatprep.subr.mxu0 0.0
      %575 = vmatpush2.msra.mxu0 0.0
      %576 = vmatprep.subr.mxu0 0.0
      %577 = vmatpush2.msra.mxu0 0.0
      %578 = vmatprep.subr.mxu0 0.0
      %579 = vmatpush2.msra.mxu0 0.0
      %580 = vmatprep.subr.mxu0 0.0
      %581 = vmatpush2.msra.mxu0 0.0
      %582 = vmatprep.subr.mxu0 0.0
      %583 = vmatpush2.msra.mxu0 0.0
      %584 = vmatprep.subr.mxu0 0.0
      %585 = vmatpush2.msra.mxu0 0.0
      %586 = vmatprep.subr.mxu0 0.0
      %587 = vmatpush2.msra.mxu0 0.0
      %588 = vmatprep.subr.mxu0 0.0
      %589 = vmatpush2.msra.mxu0 0.0
      %590 = vmatprep.subr.mxu0 0.0
      %591 = vmatpush2.msra.mxu0 0.0
      %592 = vmatprep.subr.mxu0 0.0
      %593 = vmatpush2.msra.mxu0 0.0
      %594 = vmatprep.mubr.f32.mxu0 0.0
      %595 = vmatmul.mubr.f32.gmra.mxu0 %v435
      %v596 = vpop.f32.mrf.mxu0
      %v597 = vadd.f32 0.0, %v596
      %v598 = vpop.f32.mrf.mxu0
      %599 = vmatprep.mubr.f32.mxu0 0.0
      %600 = vmatmul.mubr.f32.gmra.mxu0 %v438
      %v601 = vpop.f32.mrf.mxu0
      %v602 = vadd.f32 0.0, %v601
      %v603 = vpop.f32.mrf.mxu0
      %604 = vmatprep.mubr.f32.mxu0 0.0
      %605 = vmatmul.mubr.f32.gmra.mxu0 %v441
      %v606 = vpop.f32.mrf.mxu0
      %v607 = vadd.f32 0.0, %v606
      %v608 = vpop.f32.mrf.mxu0
      %609 = vmatprep.mubr.f32.mxu0 0.0
      %610 = vmatmul.mubr.f32.gmra.mxu0 %v444
      %v611 = vpop.f32.mrf.mxu0
      %v612 = vadd.f32 0.0, %v611
      %v613 = vpop.f32.mrf.mxu0
      %614 = vmatprep.mubr.f32.mxu0 0.0
      %615 = vmatmul.mubr.f32.gmra.mxu0 %v447
      %v616 = vpop.f32.mrf.mxu0
      %v617 = vadd.f32 0.0, %v616
      %v618 = vpop.f32.mrf.mxu0
      %619 = vmatprep.mubr.f32.mxu0 0.0
      %620 = vmatmul.mubr.f32.gmra.mxu0 %v450
      %v621 = vpop.f32.mrf.mxu0
      %v622 = vadd.f32 0.0, %v621
      %v623 = vpop.f32.mrf.mxu0
      %624 = vmatprep.mubr.f32.mxu0 0.0
      %625 = vmatmul.mubr.f32.gmra.mxu0 %v453
      %v626 = vpop.f32.mrf.mxu0
      %v627 = vadd.f32 0.0, %v626
      %v628 = vpop.f32.mrf.mxu0
      %629 = vmatprep.mubr.f32.mxu0 0.0
      %630 = vmatmul.mubr.f32.gmra.mxu0 %v456
      %v631 = vpop.f32.mrf.mxu0
      %v632 = vadd.f32 0.0, %v631
      %v633 = vpop.f32.mrf.mxu0
      %634 = vmatprep.mubr.f32.mxu0 0.0
      %635 = vmatmul.mubr.f32.gmra.mxu0 %v459
      %v636 = vpop.f32.mrf.mxu0
      %v637 = vadd.f32 0.0, %v636
      %v638 = vpop.f32.mrf.mxu0
      %639 = vmatprep.mubr.f32.mxu0 0.0
      %640 = vmatmul.mubr.f32.gmra.mxu0 %v462
      %v641 = vpop.f32.mrf.mxu0
      %v642 = vadd.f32 0.0, %v641
      %v643 = vpop.f32.mrf.mxu0
      %644 = vmatprep.mubr.f32.mxu0 0.0
      %645 = vmatmul.mubr.f32.gmra.mxu0 %v465
      %v646 = vpop.f32.mrf.mxu0
      %v647 = vadd.f32 0.0, %v646
      %v648 = vpop.f32.mrf.mxu0
      %649 = vmatprep.mubr.f32.mxu0 0.0
      %650 = vmatmul.mubr.f32.gmra.mxu0 %v468
      %v651 = vpop.f32.mrf.mxu0
      %v652 = vadd.f32 0.0, %v651
      %v653 = vpop.f32.mrf.mxu0
      %654 = vmatprep.mubr.f32.mxu0 0.0
      %655 = vmatmul.mubr.f32.gmra.mxu0 %v471
      %v656 = vpop.f32.mrf.mxu0
      %v657 = vadd.f32 0.0, %v656
      %v658 = vpop.f32.mrf.mxu0
      %659 = vmatprep.mubr.f32.mxu0 0.0
      %660 = vmatmul.mubr.f32.gmra.mxu0 %v474
      %v661 = vpop.f32.mrf.mxu0
      %v662 = vadd.f32 0.0, %v661
      %v663 = vpop.f32.mrf.mxu0
      %664 = vmatprep.mubr.f32.mxu0 0.0
      %665 = vmatmul.mubr.f32.gmra.mxu0 %v477
      %v666 = vpop.f32.mrf.mxu0
      %v667 = vadd.f32 0.0, %v666
      %v668 = vpop.f32.mrf.mxu0
      %669 = vmatprep.mubr.f32.mxu0 0.0
      %670 = vmatmul.mubr.f32.gmra.mxu0 %v480
      %v671 = vpop.f32.mrf.mxu0
      %v672 = vadd.f32 0.0, %v671
      %v673 = vpop.f32.mrf.mxu0
      %674 = vmatprep.mubr.f32.mxu0 0.0
      %675 = vmatmul.mubr.f32.gmra.mxu0 %v483
      %v676 = vpop.f32.mrf.mxu0
      %v677 = vadd.f32 0.0, %v676
      %v678 = vpop.f32.mrf.mxu0
      %679 = vmatprep.mubr.f32.mxu0 0.0
      %680 = vmatmul.mubr.f32.gmra.mxu0 %v486
      %v681 = vpop.f32.mrf.mxu0
      %v682 = vadd.f32 0.0, %v681
      %v683 = vpop.f32.mrf.mxu0
      %684 = vmatprep.mubr.f32.mxu0 0.0
      %685 = vmatmul.mubr.f32.gmra.mxu0 %v489
      %v686 = vpop.f32.mrf.mxu0
      %v687 = vadd.f32 0.0, %v686
      %v688 = vpop.f32.mrf.mxu0
      %689 = vmatprep.mubr.f32.mxu0 0.0
      %690 = vmatmul.mubr.f32.gmra.mxu0 %v492
      %v691 = vpop.f32.mrf.mxu0
      %v692 = vadd.f32 0.0, %v691
      %v693 = vpop.f32.mrf.mxu0
      %694 = vmatprep.mubr.f32.mxu0 0.0
      %695 = vmatmul.mubr.f32.gmra.mxu0 %v495
      %v696 = vpop.f32.mrf.mxu0
      %v697 = vadd.f32 0.0, %v696
      %v698 = vpop.f32.mrf.mxu0
      %699 = vmatprep.mubr.f32.mxu0 0.0
      %700 = vmatmul.mubr.f32.gmra.mxu0 %v498
      %v701 = vpop.f32.mrf.mxu0
      %v702 = vadd.f32 0.0, %v701
      %v703 = vpop.f32.mrf.mxu0
      %704 = vmatprep.mubr.f32.mxu0 0.0
      %705 = vmatmul.mubr.f32.gmra.mxu0 %v501
      %v706 = vpop.f32.mrf.mxu0
      %v707 = vadd.f32 0.0, %v706
      %v708 = vpop.f32.mrf.mxu0
      %709 = vmatprep.mubr.f32.mxu0 0.0
      %710 = vmatmul.mubr.f32.gmra.mxu0 %v504
      %v711 = vpop.f32.mrf.mxu0
      %v712 = vadd.f32 0.0, %v711
      %v713 = vpop.f32.mrf.mxu0
      %714 = vmatprep.mubr.f32.mxu0 0.0
      %715 = vmatmul.mubr.f32.gmra.mxu0 %v507
      %v716 = vpop.f32.mrf.mxu0
      %v717 = vadd.f32 0.0, %v716
      %v718 = vpop.f32.mrf.mxu0
      %719 = vmatprep.mubr.f32.mxu0 0.0
      %720 = vmatmul.mubr.f32.gmra.mxu0 %v510
      %v721 = vpop.f32.mrf.mxu0
      %v722 = vadd.f32 0.0, %v721
      %v723 = vpop.f32.mrf.mxu0
      %724 = vmatprep.mubr.f32.mxu0 0.0
      %725 = vmatmul.mubr.f32.gmra.mxu0 %v513
      %v726 = vpop.f32.mrf.mxu0
      %v727 = vadd.f32 0.0, %v726
      %v728 = vpop.f32.mrf.mxu0
      %729 = vmatprep.mubr.f32.mxu0 0.0
      %730 = vmatmul.mubr.f32.gmra.mxu0 %v516
      %v731 = vpop.f32.mrf.mxu0
      %v732 = vadd.f32 0.0, %v731
      %v733 = vpop.f32.mrf.mxu0
      %734 = vmatprep.mubr.f32.mxu0 0.0
      %735 = vmatmul.mubr.f32.gmra.mxu0 %v519
      %v736 = vpop.f32.mrf.mxu0
      %v737 = vadd.f32 0.0, %v736
      %v738 = vpop.f32.mrf.mxu0
      %739 = vmatprep.mubr.f32.mxu0 0.0
      %740 = vmatmul.mubr.f32.gmra.mxu0 %v522
      %v741 = vpop.f32.mrf.mxu0
      %v742 = vadd.f32 0.0, %v741
      %v743 = vpop.f32.mrf.mxu0
      %744 = vmatprep.mubr.f32.mxu0 0.0
      %745 = vmatmul.mubr.f32.gmra.mxu0 %v525
      %v746 = vpop.f32.mrf.mxu0
      %v747 = vadd.f32 0.0, %v746
      %v748 = vpop.f32.mrf.mxu0
      %749 = vmatprep.mubr.f32.mxu0 0.0
      %750 = vmatmul.mubr.f32.gmra.mxu0 %v528
      %v751 = vpop.f32.mrf.mxu0
      %v752 = vadd.f32 0.0, %v751
      %v753 = vpop.f32.mrf.mxu0
      %754 = vdwg.mxu0
      %v756 = vsel %vm433, %v366, 0
      %v759 = vsel %vm433, %v367, 0
      %v762 = vsel %vm433, %v368, 0
      %v765 = vsel %vm433, %v369, 0
      %v768 = vsel %vm433, %v370, 0
      %v771 = vsel %vm433, %v371, 0
      %v774 = vsel %vm433, %v372, 0
      %v777 = vsel %vm433, %v373, 0
      %v780 = vsel %vm433, %v374, 0
      %v783 = vsel %vm433, %v375, 0
      %v786 = vsel %vm433, %v376, 0
      %v789 = vsel %vm433, %v377, 0
      %v792 = vsel %vm433, %v378, 0
      %v795 = vsel %vm433, %v379, 0
      %v798 = vsel %vm433, %v380, 0
      %v801 = vsel %vm433, %v381, 0
      %v804 = vsel %vm433, %v382, 0
      %v807 = vsel %vm433, %v383, 0
      %v810 = vsel %vm433, %v384, 0
      %v813 = vsel %vm433, %v385, 0
      %v816 = vsel %vm433, %v386, 0
      %v819 = vsel %vm433, %v387, 0
      %v822 = vsel %vm433, %v388, 0
      %v825 = vsel %vm433, %v389, 0
      %v828 = vsel %vm433, %v390, 0
      %v831 = vsel %vm433, %v391, 0
      %v834 = vsel %vm433, %v392, 0
      %v837 = vsel %vm433, %v393, 0
      %v840 = vsel %vm433, %v394, 0
      %v843 = vsel %vm433, %v395, 0
      %v846 = vsel %vm433, %v396, 0
      %v849 = vsel %vm433, %v397, 0
      %851 = vmatprep.subr.mxu0 0.0
      %852 = vmatpush1.msra.mxu0 0.0
      %853 = vmatprep.subr.mxu0 0.0
      %854 = vmatpush1.msra.mxu0 0.0
      %855 = vmatprep.subr.mxu0 0.0
      %856 = vmatpush1.msra.mxu0 0.0
      %857 = vmatprep.subr.mxu0 0.0
      %858 = vmatpush1.msra.mxu0 0.0
      %859 = vmatprep.subr.mxu0 0.0
      %860 = vmatpush1.msra.mxu0 0.0
      %861 = vmatprep.subr.mxu0 0.0
      %862 = vmatpush1.msra.mxu0 0.0
      %863 = vmatprep.subr.mxu0 0.0
      %864 = vmatpush1.msra.mxu0 0.0
      %865 = vmatprep.subr.mxu0 0.0
      %866 = vmatpush1.msra.mxu0 0.0
      %867 = vmatprep.subr.mxu0 0.0
      %868 = vmatpush1.msra.mxu0 0.0
      %869 = vmatprep.subr.mxu0 0.0
      %870 = vmatpush1.msra.mxu0 0.0
      %871 = vmatprep.subr.mxu0 0.0
      %872 = vmatpush1.msra.mxu0 0.0
      %873 = vmatprep.subr.mxu0 0.0
      %874 = vmatpush1.msra.mxu0 0.0
      %875 = vmatprep.subr.mxu0 0.0
      %876 = vmatpush1.msra.mxu0 0.0
      %877 = vmatprep.subr.mxu0 0.0
      %878 = vmatpush1.msra.mxu0 0.0
      %879 = vmatprep.subr.mxu0 0.0
      %880 = vmatpush1.msra.mxu0 0.0
      %881 = vmatprep.subr.mxu0 0.0
      %882 = vmatpush1.msra.mxu0 %v398
      %883 = vmatprep.subr.mxu0 0.0
      %884 = vmatpush2.msra.mxu0 0.0
      %885 = vmatprep.subr.mxu0 0.0
      %886 = vmatpush2.msra.mxu0 0.0
      %887 = vmatprep.subr.mxu0 0.0
      %888 = vmatpush2.msra.mxu0 0.0
      %889 = vmatprep.subr.mxu0 0.0
      %890 = vmatpush2.msra.mxu0 0.0
      %891 = vmatprep.subr.mxu0 0.0
      %892 = vmatpush2.msra.mxu0 0.0
      %893 = vmatprep.subr.mxu0 0.0
      %894 = vmatpush2.msra.mxu0 0.0
      %895 = vmatprep.subr.mxu0 0.0
      %896 = vmatpush2.msra.mxu0 0.0
      %897 = vmatprep.subr.mxu0 0.0
      %898 = vmatpush2.msra.mxu0 0.0
      %899 = vmatprep.subr.mxu0 0.0
      %900 = vmatpush2.msra.mxu0 0.0
      %901 = vmatprep.subr.mxu0 0.0
      %902 = vmatpush2.msra.mxu0 0.0
      %903 = vmatprep.subr.mxu0 0.0
      %904 = vmatpush2.msra.mxu0 0.0
      %905 = vmatprep.subr.mxu0 0.0
      %906 = vmatpush2.msra.mxu0 0.0
      %907 = vmatprep.subr.mxu0 0.0
      %908 = vmatpush2.msra.mxu0 0.0
      %909 = vmatprep.subr.mxu0 0.0
      %910 = vmatpush2.msra.mxu0 0.0
      %911 = vmatprep.subr.mxu0 0.0
      %912 = vmatpush2.msra.mxu0 0.0
      %913 = vmatprep.subr.mxu0 0.0
      %914 = vmatpush2.msra.mxu0 0.0
      %915 = vmatprep.mubr.f32.mxu0 0.0
      %916 = vmatmul.mubr.f32.gmra.mxu0 %v756
      %v917 = vpop.f32.mrf.mxu0
      %v918 = vadd.f32 %v597, %v917
      %v919 = vpop.f32.mrf.mxu0
      %920 = vmatprep.mubr.f32.mxu0 0.0
      %921 = vmatmul.mubr.f32.gmra.mxu0 %v759
      %v922 = vpop.f32.mrf.mxu0
      %v923 = vadd.f32 %v602, %v922
      %v924 = vpop.f32.mrf.mxu0
      %925 = vmatprep.mubr.f32.mxu0 0.0
      %926 = vmatmul.mubr.f32.gmra.mxu0 %v762
      %v927 = vpop.f32.mrf.mxu0
      %v928 = vadd.f32 %v607, %v927
      %v929 = vpop.f32.mrf.mxu0
      %930 = vmatprep.mubr.f32.mxu0 0.0
      %931 = vmatmul.mubr.f32.gmra.mxu0 %v765
      %v932 = vpop.f32.mrf.mxu0
      %v933 = vadd.f32 %v612, %v932
      %v934 = vpop.f32.mrf.mxu0
      %935 = vmatprep.mubr.f32.mxu0 0.0
      %936 = vmatmul.mubr.f32.gmra.mxu0 %v768
      %v937 = vpop.f32.mrf.mxu0
      %v938 = vadd.f32 %v617, %v937
      %v939 = vpop.f32.mrf.mxu0
      %940 = vmatprep.mubr.f32.mxu0 0.0
      %941 = vmatmul.mubr.f32.gmra.mxu0 %v771
      %v942 = vpop.f32.mrf.mxu0
      %v943 = vadd.f32 %v622, %v942
      %v944 = vpop.f32.mrf.mxu0
      %945 = vmatprep.mubr.f32.mxu0 0.0
      %946 = vmatmul.mubr.f32.gmra.mxu0 %v774
      %v947 = vpop.f32.mrf.mxu0
      %v948 = vadd.f32 %v627, %v947
      %v949 = vpop.f32.mrf.mxu0
      %950 = vmatprep.mubr.f32.mxu0 0.0
      %951 = vmatmul.mubr.f32.gmra.mxu0 %v777
      %v952 = vpop.f32.mrf.mxu0
      %v953 = vadd.f32 %v632, %v952
      %v954 = vpop.f32.mrf.mxu0
      %955 = vmatprep.mubr.f32.mxu0 0.0
      %956 = vmatmul.mubr.f32.gmra.mxu0 %v780
      %v957 = vpop.f32.mrf.mxu0
      %v958 = vadd.f32 %v637, %v957
      %v959 = vpop.f32.mrf.mxu0
      %960 = vmatprep.mubr.f32.mxu0 0.0
      %961 = vmatmul.mubr.f32.gmra.mxu0 %v783
      %v962 = vpop.f32.mrf.mxu0
      %v963 = vadd.f32 %v642, %v962
      %v964 = vpop.f32.mrf.mxu0
      %965 = vmatprep.mubr.f32.mxu0 0.0
      %966 = vmatmul.mubr.f32.gmra.mxu0 %v786
      %v967 = vpop.f32.mrf.mxu0
      %v968 = vadd.f32 %v647, %v967
      %v969 = vpop.f32.mrf.mxu0
      %970 = vmatprep.mubr.f32.mxu0 0.0
      %971 = vmatmul.mubr.f32.gmra.mxu0 %v789
      %v972 = vpop.f32.mrf.mxu0
      %v973 = vadd.f32 %v652, %v972
      %v974 = vpop.f32.mrf.mxu0
      %975 = vmatprep.mubr.f32.mxu0 0.0
      %976 = vmatmul.mubr.f32.gmra.mxu0 %v792
      %v977 = vpop.f32.mrf.mxu0
      %v978 = vadd.f32 %v657, %v977
      %v979 = vpop.f32.mrf.mxu0
      %980 = vmatprep.mubr.f32.mxu0 0.0
      %981 = vmatmul.mubr.f32.gmra.mxu0 %v795
      %v982 = vpop.f32.mrf.mxu0
      %v983 = vadd.f32 %v662, %v982
      %v984 = vpop.f32.mrf.mxu0
      %985 = vmatprep.mubr.f32.mxu0 0.0
      %986 = vmatmul.mubr.f32.gmra.mxu0 %v798
      %v987 = vpop.f32.mrf.mxu0
      %v988 = vadd.f32 %v667, %v987
      %v989 = vpop.f32.mrf.mxu0
      %990 = vmatprep.mubr.f32.mxu0 0.0
      %991 = vmatmul.mubr.f32.gmra.mxu0 %v801
      %v992 = vpop.f32.mrf.mxu0
      %v993 = vadd.f32 %v672, %v992
      %v994 = vpop.f32.mrf.mxu0
      %995 = vmatprep.mubr.f32.mxu0 0.0
      %996 = vmatmul.mubr.f32.gmra.mxu0 %v804
      %v997 = vpop.f32.mrf.mxu0
      %v998 = vadd.f32 %v677, %v997
      %v999 = vpop.f32.mrf.mxu0
      %1000 = vmatprep.mubr.f32.mxu0 0.0
      %1001 = vmatmul.mubr.f32.gmra.mxu0 %v807
      %v1002 = vpop.f32.mrf.mxu0
      %v1003 = vadd.f32 %v682, %v1002
      %v1004 = vpop.f32.mrf.mxu0
      %1005 = vmatprep.mubr.f32.mxu0 0.0
      %1006 = vmatmul.mubr.f32.gmra.mxu0 %v810
      %v1007 = vpop.f32.mrf.mxu0
      %v1008 = vadd.f32 %v687, %v1007
      %v1009 = vpop.f32.mrf.mxu0
      %1010 = vmatprep.mubr.f32.mxu0 0.0
      %1011 = vmatmul.mubr.f32.gmra.mxu0 %v813
      %v1012 = vpop.f32.mrf.mxu0
      %v1013 = vadd.f32 %v692, %v1012
      %v1014 = vpop.f32.mrf.mxu0
      %1015 = vmatprep.mubr.f32.mxu0 0.0
      %1016 = vmatmul.mubr.f32.gmra.mxu0 %v816
      %v1017 = vpop.f32.mrf.mxu0
      %v1018 = vadd.f32 %v697, %v1017
      %v1019 = vpop.f32.mrf.mxu0
      %1020 = vmatprep.mubr.f32.mxu0 0.0
      %1021 = vmatmul.mubr.f32.gmra.mxu0 %v819
      %v1022 = vpop.f32.mrf.mxu0
      %v1023 = vadd.f32 %v702, %v1022
      %v1024 = vpop.f32.mrf.mxu0
      %1025 = vmatprep.mubr.f32.mxu0 0.0
      %1026 = vmatmul.mubr.f32.gmra.mxu0 %v822
      %v1027 = vpop.f32.mrf.mxu0
      %v1028 = vadd.f32 %v707, %v1027
      %v1029 = vpop.f32.mrf.mxu0
      %1030 = vmatprep.mubr.f32.mxu0 0.0
      %1031 = vmatmul.mubr.f32.gmra.mxu0 %v825
      %v1032 = vpop.f32.mrf.mxu0
      %v1033 = vadd.f32 %v712, %v1032
      %v1034 = vpop.f32.mrf.mxu0
      %1035 = vmatprep.mubr.f32.mxu0 0.0
      %1036 = vmatmul.mubr.f32.gmra.mxu0 %v828
      %v1037 = vpop.f32.mrf.mxu0
      %v1038 = vadd.f32 %v717, %v1037
      %v1039 = vpop.f32.mrf.mxu0
      %1040 = vmatprep.mubr.f32.mxu0 0.0
      %1041 = vmatmul.mubr.f32.gmra.mxu0 %v831
      %v1042 = vpop.f32.mrf.mxu0
      %v1043 = vadd.f32 %v722, %v1042
      %v1044 = vpop.f32.mrf.mxu0
      %1045 = vmatprep.mubr.f32.mxu0 0.0
      %1046 = vmatmul.mubr.f32.gmra.mxu0 %v834
      %v1047 = vpop.f32.mrf.mxu0
      %v1048 = vadd.f32 %v727, %v1047
      %v1049 = vpop.f32.mrf.mxu0
      %1050 = vmatprep.mubr.f32.mxu0 0.0
      %1051 = vmatmul.mubr.f32.gmra.mxu0 %v837
      %v1052 = vpop.f32.mrf.mxu0
      %v1053 = vadd.f32 %v732, %v1052
      %v1054 = vpop.f32.mrf.mxu0
      %1055 = vmatprep.mubr.f32.mxu0 0.0
      %1056 = vmatmul.mubr.f32.gmra.mxu0 %v840
      %v1057 = vpop.f32.mrf.mxu0
      %v1058 = vadd.f32 %v737, %v1057
      %v1059 = vpop.f32.mrf.mxu0
      %1060 = vmatprep.mubr.f32.mxu0 0.0
      %1061 = vmatmul.mubr.f32.gmra.mxu0 %v843
      %v1062 = vpop.f32.mrf.mxu0
      %v1063 = vadd.f32 %v742, %v1062
      %v1064 = vpop.f32.mrf.mxu0
      %1065 = vmatprep.mubr.f32.mxu0 0.0
      %1066 = vmatmul.mubr.f32.gmra.mxu0 %v846
      %v1067 = vpop.f32.mrf.mxu0
      %v1068 = vadd.f32 %v747, %v1067
      %v1069 = vpop.f32.mrf.mxu0
      %1070 = vmatprep.mubr.f32.mxu0 0.0
      %1071 = vmatmul.mubr.f32.gmra.mxu0 %v849
      %v1072 = vpop.f32.mrf.mxu0
      %v1073 = vadd.f32 %v752, %v1072
      %v1074 = vpop.f32.mrf.mxu0
      %1075 = vdwg.mxu0
      %v1076 = vld [vmem:[%s324 + $0x2] sm:$0xff]
      %v1077 = vld [vmem:[%s324 + $0xa] sm:$0xff]
      %v1078 = vld [vmem:[%s324 + $0x1a] sm:$0xff]
      %v1079 = vld [vmem:[%s324 + $0x22] sm:$0xff]
      %v1080 = vld [vmem:[%s324 + $0x32] sm:$0xff]
      %v1081 = vld [vmem:[%s324 + $0x3a] sm:$0xff]
      %v1082 = vld [vmem:[%s324 + $0x4a] sm:$0xff]
      %v1083 = vld [vmem:[%s324 + $0x52] sm:$0xff]
      %v1084 = vld [vmem:[%s324 + $0x62] sm:$0xff]
      %v1085 = vld [vmem:[%s324 + $0x6a] sm:$0xff]
      %v1086 = vld [vmem:[%s324 + $0x7a] sm:$0xff]
      %v1087 = vld [vmem:[%s324 + $0x82] sm:$0xff]
      %v1088 = vld [vmem:[%s324 + $0x92] sm:$0xff]
      %v1089 = vld [vmem:[%s324 + $0x9a] sm:$0xff]
      %v1090 = vld [vmem:[%s324 + $0xaa] sm:$0xff]
      %v1091 = vld [vmem:[%s324 + $0xb2] sm:$0xff]
      %v1092 = vld [vmem:[%s324 + $0xc2] sm:$0xff]
      %v1093 = vld [vmem:[%s324 + $0xca] sm:$0xff]
      %v1094 = vld [vmem:[%s324 + $0xda] sm:$0xff]
      %v1095 = vld [vmem:[%s324 + $0xe2] sm:$0xff]
      %v1096 = vld [vmem:[%s324 + $0xf2] sm:$0xff]
      %v1097 = vld [vmem:[%s324 + $0xfa] sm:$0xff]
      %v1098 = vld [vmem:[%s324 + $0x10a] sm:$0xff]
      %v1099 = vld [vmem:[%s324 + $0x112] sm:$0xff]
      %v1100 = vld [vmem:[%s324 + $0x122] sm:$0xff]
      %v1101 = vld [vmem:[%s324 + $0x12a] sm:$0xff]
      %v1102 = vld [vmem:[%s324 + $0x13a] sm:$0xff]
      %v1103 = vld [vmem:[%s324 + $0x142] sm:$0xff]
      %v1104 = vld [vmem:[%s324 + $0x152] sm:$0xff]
      %v1105 = vld [vmem:[%s324 + $0x15a] sm:$0xff]
      %v1106 = vld [vmem:[%s324 + $0x16a] sm:$0xff]
      %v1107 = vld [vmem:[%s324 + $0x172] sm:$0xff]
      %s1108 = scalar_lea.vmem %s3, 16
      %v1109 = vld [vmem:[%s1108] sm:$0xff]
      %v1111 = vsel %vm433, %v1076, 0
      %v1114 = vsel %vm433, %v1077, 0
      %v1117 = vsel %vm433, %v1078, 0
      %v1120 = vsel %vm433, %v1079, 0
      %v1123 = vsel %vm433, %v1080, 0
      %v1126 = vsel %vm433, %v1081, 0
      %v1129 = vsel %vm433, %v1082, 0
      %v1132 = vsel %vm433, %v1083, 0
      %v1135 = vsel %vm433, %v1084, 0
      %v1138 = vsel %vm433, %v1085, 0
      %v1141 = vsel %vm433, %v1086, 0
      %v1144 = vsel %vm433, %v1087, 0
      %v1147 = vsel %vm433, %v1088, 0
      %v1150 = vsel %vm433, %v1089, 0
      %v1153 = vsel %vm433, %v1090, 0
      %v1156 = vsel %vm433, %v1091, 0
      %v1159 = vsel %vm433, %v1092, 0
      %v1162 = vsel %vm433, %v1093, 0
      %v1165 = vsel %vm433, %v1094, 0
      %v1168 = vsel %vm433, %v1095, 0
      %v1171 = vsel %vm433, %v1096, 0
      %v1174 = vsel %vm433, %v1097, 0
      %v1177 = vsel %vm433, %v1098, 0
      %v1180 = vsel %vm433, %v1099, 0
      %v1183 = vsel %vm433, %v1100, 0
      %v1186 = vsel %vm433, %v1101, 0
      %v1189 = vsel %vm433, %v1102, 0
      %v1192 = vsel %vm433, %v1103, 0
      %v1195 = vsel %vm433, %v1104, 0
      %v1198 = vsel %vm433, %v1105, 0
      %v1201 = vsel %vm433, %v1106, 0
      %v1204 = vsel %vm433, %v1107, 0
      %1206 = vmatprep.subr.mxu0 0.0
      %1207 = vmatpush1.msra.mxu0 0.0
      %1208 = vmatprep.subr.mxu0 0.0
      %1209 = vmatpush1.msra.mxu0 0.0
      %1210 = vmatprep.subr.mxu0 0.0
      %1211 = vmatpush1.msra.mxu0 0.0
      %1212 = vmatprep.subr.mxu0 0.0
      %1213 = vmatpush1.msra.mxu0 0.0
      %1214 = vmatprep.subr.mxu0 0.0
      %1215 = vmatpush1.msra.mxu0 0.0
      %1216 = vmatprep.subr.mxu0 0.0
      %1217 = vmatpush1.msra.mxu0 0.0
      %1218 = vmatprep.subr.mxu0 0.0
      %1219 = vmatpush1.msra.mxu0 0.0
      %1220 = vmatprep.subr.mxu0 0.0
      %1221 = vmatpush1.msra.mxu0 0.0
      %1222 = vmatprep.subr.mxu0 0.0
      %1223 = vmatpush1.msra.mxu0 0.0
      %1224 = vmatprep.subr.mxu0 0.0
      %1225 = vmatpush1.msra.mxu0 0.0
      %1226 = vmatprep.subr.mxu0 0.0
      %1227 = vmatpush1.msra.mxu0 0.0
      %1228 = vmatprep.subr.mxu0 0.0
      %1229 = vmatpush1.msra.mxu0 0.0
      %1230 = vmatprep.subr.mxu0 0.0
      %1231 = vmatpush1.msra.mxu0 0.0
      %1232 = vmatprep.subr.mxu0 0.0
      %1233 = vmatpush1.msra.mxu0 0.0
      %1234 = vmatprep.subr.mxu0 0.0
      %1235 = vmatpush1.msra.mxu0 0.0
      %1236 = vmatprep.subr.mxu0 0.0
      %1237 = vmatpush1.msra.mxu0 %v1109
      %1238 = vmatprep.subr.mxu0 0.0
      %1239 = vmatpush2.msra.mxu0 0.0
      %1240 = vmatprep.subr.mxu0 0.0
      %1241 = vmatpush2.msra.mxu0 0.0
      %1242 = vmatprep.subr.mxu0 0.0
      %1243 = vmatpush2.msra.mxu0 0.0
      %1244 = vmatprep.subr.mxu0 0.0
      %1245 = vmatpush2.msra.mxu0 0.0
      %1246 = vmatprep.subr.mxu0 0.0
      %1247 = vmatpush2.msra.mxu0 0.0
      %1248 = vmatprep.subr.mxu0 0.0
      %1249 = vmatpush2.msra.mxu0 0.0
      %1250 = vmatprep.subr.mxu0 0.0
      %1251 = vmatpush2.msra.mxu0 0.0
      %1252 = vmatprep.subr.mxu0 0.0
      %1253 = vmatpush2.msra.mxu0 0.0
      %1254 = vmatprep.subr.mxu0 0.0
      %1255 = vmatpush2.msra.mxu0 0.0
      %1256 = vmatprep.subr.mxu0 0.0
      %1257 = vmatpush2.msra.mxu0 0.0
      %1258 = vmatprep.subr.mxu0 0.0
      %1259 = vmatpush2.msra.mxu0 0.0
      %1260 = vmatprep.subr.mxu0 0.0
      %1261 = vmatpush2.msra.mxu0 0.0
      %1262 = vmatprep.subr.mxu0 0.0
      %1263 = vmatpush2.msra.mxu0 0.0
      %1264 = vmatprep.subr.mxu0 0.0
      %1265 = vmatpush2.msra.mxu0 0.0
      %1266 = vmatprep.subr.mxu0 0.0
      %1267 = vmatpush2.msra.mxu0 0.0
      %1268 = vmatprep.subr.mxu0 0.0
      %1269 = vmatpush2.msra.mxu0 0.0
      %1270 = vmatprep.mubr.f32.mxu0 0.0
      %1271 = vmatmul.mubr.f32.gmra.mxu0 %v1111
      %v1272 = vpop.f32.mrf.mxu0
      %v1273 = vadd.f32 0.0, %v1272
      %v1274 = vpop.f32.mrf.mxu0
      %1275 = vmatprep.mubr.f32.mxu0 0.0
      %1276 = vmatmul.mubr.f32.gmra.mxu0 %v1114
      %v1277 = vpop.f32.mrf.mxu0
      %v1278 = vadd.f32 0.0, %v1277
      %v1279 = vpop.f32.mrf.mxu0
      %1280 = vmatprep.mubr.f32.mxu0 0.0
      %1281 = vmatmul.mubr.f32.gmra.mxu0 %v1117
      %v1282 = vpop.f32.mrf.mxu0
      %v1283 = vadd.f32 0.0, %v1282
      %v1284 = vpop.f32.mrf.mxu0
      %1285 = vmatprep.mubr.f32.mxu0 0.0
      %1286 = vmatmul.mubr.f32.gmra.mxu0 %v1120
      %v1287 = vpop.f32.mrf.mxu0
      %v1288 = vadd.f32 0.0, %v1287
      %v1289 = vpop.f32.mrf.mxu0
      %1290 = vmatprep.mubr.f32.mxu0 0.0
      %1291 = vmatmul.mubr.f32.gmra.mxu0 %v1123
      %v1292 = vpop.f32.mrf.mxu0
      %v1293 = vadd.f32 0.0, %v1292
      %v1294 = vpop.f32.mrf.mxu0
      %1295 = vmatprep.mubr.f32.mxu0 0.0
      %1296 = vmatmul.mubr.f32.gmra.mxu0 %v1126
      %v1297 = vpop.f32.mrf.mxu0
      %v1298 = vadd.f32 0.0, %v1297
      %v1299 = vpop.f32.mrf.mxu0
      %1300 = vmatprep.mubr.f32.mxu0 0.0
      %1301 = vmatmul.mubr.f32.gmra.mxu0 %v1129
      %v1302 = vpop.f32.mrf.mxu0
      %v1303 = vadd.f32 0.0, %v1302
      %v1304 = vpop.f32.mrf.mxu0
      %1305 = vmatprep.mubr.f32.mxu0 0.0
      %1306 = vmatmul.mubr.f32.gmra.mxu0 %v1132
      %v1307 = vpop.f32.mrf.mxu0
      %v1308 = vadd.f32 0.0, %v1307
      %v1309 = vpop.f32.mrf.mxu0
      %1310 = vmatprep.mubr.f32.mxu0 0.0
      %1311 = vmatmul.mubr.f32.gmra.mxu0 %v1135
      %v1312 = vpop.f32.mrf.mxu0
      %v1313 = vadd.f32 0.0, %v1312
      %v1314 = vpop.f32.mrf.mxu0
      %1315 = vmatprep.mubr.f32.mxu0 0.0
      %1316 = vmatmul.mubr.f32.gmra.mxu0 %v1138
      %v1317 = vpop.f32.mrf.mxu0
      %v1318 = vadd.f32 0.0, %v1317
      %v1319 = vpop.f32.mrf.mxu0
      %1320 = vmatprep.mubr.f32.mxu0 0.0
      %1321 = vmatmul.mubr.f32.gmra.mxu0 %v1141
      %v1322 = vpop.f32.mrf.mxu0
      %v1323 = vadd.f32 0.0, %v1322
      %v1324 = vpop.f32.mrf.mxu0
      %1325 = vmatprep.mubr.f32.mxu0 0.0
      %1326 = vmatmul.mubr.f32.gmra.mxu0 %v1144
      %v1327 = vpop.f32.mrf.mxu0
      %v1328 = vadd.f32 0.0, %v1327
      %v1329 = vpop.f32.mrf.mxu0
      %1330 = vmatprep.mubr.f32.mxu0 0.0
      %1331 = vmatmul.mubr.f32.gmra.mxu0 %v1147
      %v1332 = vpop.f32.mrf.mxu0
      %v1333 = vadd.f32 0.0, %v1332
      %v1334 = vpop.f32.mrf.mxu0
      %1335 = vmatprep.mubr.f32.mxu0 0.0
      %1336 = vmatmul.mubr.f32.gmra.mxu0 %v1150
      %v1337 = vpop.f32.mrf.mxu0
      %v1338 = vadd.f32 0.0, %v1337
      %v1339 = vpop.f32.mrf.mxu0
      %1340 = vmatprep.mubr.f32.mxu0 0.0
      %1341 = vmatmul.mubr.f32.gmra.mxu0 %v1153
      %v1342 = vpop.f32.mrf.mxu0
      %v1343 = vadd.f32 0.0, %v1342
      %v1344 = vpop.f32.mrf.mxu0
      %1345 = vmatprep.mubr.f32.mxu0 0.0
      %1346 = vmatmul.mubr.f32.gmra.mxu0 %v1156
      %v1347 = vpop.f32.mrf.mxu0
      %v1348 = vadd.f32 0.0, %v1347
      %v1349 = vpop.f32.mrf.mxu0
      %1350 = vmatprep.mubr.f32.mxu0 0.0
      %1351 = vmatmul.mubr.f32.gmra.mxu0 %v1159
      %v1352 = vpop.f32.mrf.mxu0
      %v1353 = vadd.f32 0.0, %v1352
      %v1354 = vpop.f32.mrf.mxu0
      %1355 = vmatprep.mubr.f32.mxu0 0.0
      %1356 = vmatmul.mubr.f32.gmra.mxu0 %v1162
      %v1357 = vpop.f32.mrf.mxu0
      %v1358 = vadd.f32 0.0, %v1357
      %v1359 = vpop.f32.mrf.mxu0
      %1360 = vmatprep.mubr.f32.mxu0 0.0
      %1361 = vmatmul.mubr.f32.gmra.mxu0 %v1165
      %v1362 = vpop.f32.mrf.mxu0
      %v1363 = vadd.f32 0.0, %v1362
      %v1364 = vpop.f32.mrf.mxu0
      %1365 = vmatprep.mubr.f32.mxu0 0.0
      %1366 = vmatmul.mubr.f32.gmra.mxu0 %v1168
      %v1367 = vpop.f32.mrf.mxu0
      %v1368 = vadd.f32 0.0, %v1367
      %v1369 = vpop.f32.mrf.mxu0
      %1370 = vmatprep.mubr.f32.mxu0 0.0
      %1371 = vmatmul.mubr.f32.gmra.mxu0 %v1171
      %v1372 = vpop.f32.mrf.mxu0
      %v1373 = vadd.f32 0.0, %v1372
      %v1374 = vpop.f32.mrf.mxu0
      %1375 = vmatprep.mubr.f32.mxu0 0.0
      %1376 = vmatmul.mubr.f32.gmra.mxu0 %v1174
      %v1377 = vpop.f32.mrf.mxu0
      %v1378 = vadd.f32 0.0, %v1377
      %v1379 = vpop.f32.mrf.mxu0
      %1380 = vmatprep.mubr.f32.mxu0 0.0
      %1381 = vmatmul.mubr.f32.gmra.mxu0 %v1177
      %v1382 = vpop.f32.mrf.mxu0
      %v1383 = vadd.f32 0.0, %v1382
      %v1384 = vpop.f32.mrf.mxu0
      %1385 = vmatprep.mubr.f32.mxu0 0.0
      %1386 = vmatmul.mubr.f32.gmra.mxu0 %v1180
      %v1387 = vpop.f32.mrf.mxu0
      %v1388 = vadd.f32 0.0, %v1387
      %v1389 = vpop.f32.mrf.mxu0
      %1390 = vmatprep.mubr.f32.mxu0 0.0
      %1391 = vmatmul.mubr.f32.gmra.mxu0 %v1183
      %v1392 = vpop.f32.mrf.mxu0
      %v1393 = vadd.f32 0.0, %v1392
      %v1394 = vpop.f32.mrf.mxu0
      %1395 = vmatprep.mubr.f32.mxu0 0.0
      %1396 = vmatmul.mubr.f32.gmra.mxu0 %v1186
      %v1397 = vpop.f32.mrf.mxu0
      %v1398 = vadd.f32 0.0, %v1397
      %v1399 = vpop.f32.mrf.mxu0
      %1400 = vmatprep.mubr.f32.mxu0 0.0
      %1401 = vmatmul.mubr.f32.gmra.mxu0 %v1189
      %v1402 = vpop.f32.mrf.mxu0
      %v1403 = vadd.f32 0.0, %v1402
      %v1404 = vpop.f32.mrf.mxu0
      %1405 = vmatprep.mubr.f32.mxu0 0.0
      %1406 = vmatmul.mubr.f32.gmra.mxu0 %v1192
      %v1407 = vpop.f32.mrf.mxu0
      %v1408 = vadd.f32 0.0, %v1407
      %v1409 = vpop.f32.mrf.mxu0
      %1410 = vmatprep.mubr.f32.mxu0 0.0
      %1411 = vmatmul.mubr.f32.gmra.mxu0 %v1195
      %v1412 = vpop.f32.mrf.mxu0
      %v1413 = vadd.f32 0.0, %v1412
      %v1414 = vpop.f32.mrf.mxu0
      %1415 = vmatprep.mubr.f32.mxu0 0.0
      %1416 = vmatmul.mubr.f32.gmra.mxu0 %v1198
      %v1417 = vpop.f32.mrf.mxu0
      %v1418 = vadd.f32 0.0, %v1417
      %v1419 = vpop.f32.mrf.mxu0
      %1420 = vmatprep.mubr.f32.mxu0 0.0
      %1421 = vmatmul.mubr.f32.gmra.mxu0 %v1201
      %v1422 = vpop.f32.mrf.mxu0
      %v1423 = vadd.f32 0.0, %v1422
      %v1424 = vpop.f32.mrf.mxu0
      %1425 = vmatprep.mubr.f32.mxu0 0.0
      %1426 = vmatmul.mubr.f32.gmra.mxu0 %v1204
      %v1427 = vpop.f32.mrf.mxu0
      %v1428 = vadd.f32 0.0, %v1427
      %v1429 = vpop.f32.mrf.mxu0
      %1430 = vdwg.mxu0
      %v1431 = vadd.f32 %v918, %v1273
      %v1432 = vadd.f32 %v923, %v1278
      %v1433 = vadd.f32 %v928, %v1283
      %v1434 = vadd.f32 %v933, %v1288
      %v1435 = vadd.f32 %v938, %v1293
      %v1436 = vadd.f32 %v943, %v1298
      %v1437 = vadd.f32 %v948, %v1303
      %v1438 = vadd.f32 %v953, %v1308
      %v1439 = vadd.f32 %v958, %v1313
      %v1440 = vadd.f32 %v963, %v1318
      %v1441 = vadd.f32 %v968, %v1323
      %v1442 = vadd.f32 %v973, %v1328
      %v1443 = vadd.f32 %v978, %v1333
      %v1444 = vadd.f32 %v983, %v1338
      %v1445 = vadd.f32 %v988, %v1343
      %v1446 = vadd.f32 %v993, %v1348
      %v1447 = vadd.f32 %v998, %v1353
      %v1448 = vadd.f32 %v1003, %v1358
      %v1449 = vadd.f32 %v1008, %v1363
      %v1450 = vadd.f32 %v1013, %v1368
      %v1451 = vadd.f32 %v1018, %v1373
      %v1452 = vadd.f32 %v1023, %v1378
      %v1453 = vadd.f32 %v1028, %v1383
      %v1454 = vadd.f32 %v1033, %v1388
      %v1455 = vadd.f32 %v1038, %v1393
      %v1456 = vadd.f32 %v1043, %v1398
      %v1457 = vadd.f32 %v1048, %v1403
      %v1458 = vadd.f32 %v1053, %v1408
      %v1459 = vadd.f32 %v1058, %v1413
      %v1460 = vadd.f32 %v1063, %v1418
      %v1461 = vadd.f32 %v1068, %v1423
      %v1462 = vadd.f32 %v1073, %v1428
      %v1463 = vld [vmem:[%s335] sm:$0xff]
      %v1464 = vld [vmem:[%s335 + $0x8] sm:$0xff]
      %v1465 = vld [vmem:[%s335 + $0x18] sm:$0xff]
      %v1466 = vld [vmem:[%s335 + $0x20] sm:$0xff]
      %v1467 = vld [vmem:[%s335 + $0x30] sm:$0xff]
      %v1468 = vld [vmem:[%s335 + $0x38] sm:$0xff]
      %v1469 = vld [vmem:[%s335 + $0x48] sm:$0xff]
      %v1470 = vld [vmem:[%s335 + $0x50] sm:$0xff]
      %v1471 = vld [vmem:[%s335 + $0x60] sm:$0xff]
      %v1472 = vld [vmem:[%s335 + $0x68] sm:$0xff]
      %v1473 = vld [vmem:[%s335 + $0x78] sm:$0xff]
      %v1474 = vld [vmem:[%s335 + $0x80] sm:$0xff]
      %v1475 = vld [vmem:[%s335 + $0x90] sm:$0xff]
      %v1476 = vld [vmem:[%s335 + $0x98] sm:$0xff]
      %v1477 = vld [vmem:[%s335 + $0xa8] sm:$0xff]
      %v1478 = vld [vmem:[%s335 + $0xb0] sm:$0xff]
      %v1479 = vld [vmem:[%s335 + $0xc0] sm:$0xff]
      %v1480 = vld [vmem:[%s335 + $0xc8] sm:$0xff]
      %v1481 = vld [vmem:[%s335 + $0xd8] sm:$0xff]
      %v1482 = vld [vmem:[%s335 + $0xe0] sm:$0xff]
      %v1483 = vld [vmem:[%s335 + $0xf0] sm:$0xff]
      %v1484 = vld [vmem:[%s335 + $0xf8] sm:$0xff]
      %v1485 = vld [vmem:[%s335 + $0x108] sm:$0xff]
      %v1486 = vld [vmem:[%s335 + $0x110] sm:$0xff]
      %v1487 = vld [vmem:[%s335 + $0x120] sm:$0xff]
      %v1488 = vld [vmem:[%s335 + $0x128] sm:$0xff]
      %v1489 = vld [vmem:[%s335 + $0x138] sm:$0xff]
      %v1490 = vld [vmem:[%s335 + $0x140] sm:$0xff]
      %v1491 = vld [vmem:[%s335 + $0x150] sm:$0xff]
      %v1492 = vld [vmem:[%s335 + $0x158] sm:$0xff]
      %v1493 = vld [vmem:[%s335 + $0x168] sm:$0xff]
      %v1494 = vld [vmem:[%s335 + $0x170] sm:$0xff]
      %s1495 = scalar_lea.vmem %s3, 24
      %v1496 = vld [vmem:[%s1495] sm:$0xff]
      %v1498 = vsel %vm433, %v1463, 0
      %v1501 = vsel %vm433, %v1464, 0
      %v1504 = vsel %vm433, %v1465, 0
      %v1507 = vsel %vm433, %v1466, 0
      %v1510 = vsel %vm433, %v1467, 0
      %v1513 = vsel %vm433, %v1468, 0
      %v1516 = vsel %vm433, %v1469, 0
      %v1519 = vsel %vm433, %v1470, 0
      %v1522 = vsel %vm433, %v1471, 0
      %v1525 = vsel %vm433, %v1472, 0
      %v1528 = vsel %vm433, %v1473, 0
      %v1531 = vsel %vm433, %v1474, 0
      %v1534 = vsel %vm433, %v1475, 0
      %v1537 = vsel %vm433, %v1476, 0
      %v1540 = vsel %vm433, %v1477, 0
      %v1543 = vsel %vm433, %v1478, 0
      %v1546 = vsel %vm433, %v1479, 0
      %v1549 = vsel %vm433, %v1480, 0
      %v1552 = vsel %vm433, %v1481, 0
      %v1555 = vsel %vm433, %v1482, 0
      %v1558 = vsel %vm433, %v1483, 0
      %v1561 = vsel %vm433, %v1484, 0
      %v1564 = vsel %vm433, %v1485, 0
      %v1567 = vsel %vm433, %v1486, 0
      %v1570 = vsel %vm433, %v1487, 0
      %v1573 = vsel %vm433, %v1488, 0
      %v1576 = vsel %vm433, %v1489, 0
      %v1579 = vsel %vm433, %v1490, 0
      %v1582 = vsel %vm433, %v1491, 0
      %v1585 = vsel %vm433, %v1492, 0
      %v1588 = vsel %vm433, %v1493, 0
      %v1591 = vsel %vm433, %v1494, 0
      %1593 = vmatprep.subr.mxu0 0.0
      %1594 = vmatpush1.msra.mxu0 0.0
      %1595 = vmatprep.subr.mxu0 0.0
      %1596 = vmatpush1.msra.mxu0 0.0
      %1597 = vmatprep.subr.mxu0 0.0
      %1598 = vmatpush1.msra.mxu0 0.0
      %1599 = vmatprep.subr.mxu0 0.0
      %1600 = vmatpush1.msra.mxu0 0.0
      %1601 = vmatprep.subr.mxu0 0.0
      %1602 = vmatpush1.msra.mxu0 0.0
      %1603 = vmatprep.subr.mxu0 0.0
      %1604 = vmatpush1.msra.mxu0 0.0
      %1605 = vmatprep.subr.mxu0 0.0
      %1606 = vmatpush1.msra.mxu0 0.0
      %1607 = vmatprep.subr.mxu0 0.0
      %1608 = vmatpush1.msra.mxu0 0.0
      %1609 = vmatprep.subr.mxu0 0.0
      %1610 = vmatpush1.msra.mxu0 0.0
      %1611 = vmatprep.subr.mxu0 0.0
      %1612 = vmatpush1.msra.mxu0 0.0
      %1613 = vmatprep.subr.mxu0 0.0
      %1614 = vmatpush1.msra.mxu0 0.0
      %1615 = vmatprep.subr.mxu0 0.0
      %1616 = vmatpush1.msra.mxu0 0.0
      %1617 = vmatprep.subr.mxu0 0.0
      %1618 = vmatpush1.msra.mxu0 0.0
      %1619 = vmatprep.subr.mxu0 0.0
      %1620 = vmatpush1.msra.mxu0 0.0
      %1621 = vmatprep.subr.mxu0 0.0
      %1622 = vmatpush1.msra.mxu0 0.0
      %1623 = vmatprep.subr.mxu0 0.0
      %1624 = vmatpush1.msra.mxu0 %v1496
      %1625 = vmatprep.subr.mxu0 0.0
      %1626 = vmatpush2.msra.mxu0 0.0
      %1627 = vmatprep.subr.mxu0 0.0
      %1628 = vmatpush2.msra.mxu0 0.0
      %1629 = vmatprep.subr.mxu0 0.0
      %1630 = vmatpush2.msra.mxu0 0.0
      %1631 = vmatprep.subr.mxu0 0.0
      %1632 = vmatpush2.msra.mxu0 0.0
      %1633 = vmatprep.subr.mxu0 0.0
      %1634 = vmatpush2.msra.mxu0 0.0
      %1635 = vmatprep.subr.mxu0 0.0
      %1636 = vmatpush2.msra.mxu0 0.0
      %1637 = vmatprep.subr.mxu0 0.0
      %1638 = vmatpush2.msra.mxu0 0.0
      %1639 = vmatprep.subr.mxu0 0.0
      %1640 = vmatpush2.msra.mxu0 0.0
      %1641 = vmatprep.subr.mxu0 0.0
      %1642 = vmatpush2.msra.mxu0 0.0
      %1643 = vmatprep.subr.mxu0 0.0
      %1644 = vmatpush2.msra.mxu0 0.0
      %1645 = vmatprep.subr.mxu0 0.0
      %1646 = vmatpush2.msra.mxu0 0.0
      %1647 = vmatprep.subr.mxu0 0.0
      %1648 = vmatpush2.msra.mxu0 0.0
      %1649 = vmatprep.subr.mxu0 0.0
      %1650 = vmatpush2.msra.mxu0 0.0
      %1651 = vmatprep.subr.mxu0 0.0
      %1652 = vmatpush2.msra.mxu0 0.0
      %1653 = vmatprep.subr.mxu0 0.0
      %1654 = vmatpush2.msra.mxu0 0.0
      %1655 = vmatprep.subr.mxu0 0.0
      %1656 = vmatpush2.msra.mxu0 0.0
      %1657 = vmatprep.mubr.f32.mxu0 0.0
      %1658 = vmatmul.mubr.f32.gmra.mxu0 %v1498
      %v1659 = vpop.f32.mrf.mxu0
      %v1660 = vadd.f32 0.0, %v1659
      %v1661 = vpop.f32.mrf.mxu0
      %1662 = vmatprep.mubr.f32.mxu0 0.0
      %1663 = vmatmul.mubr.f32.gmra.mxu0 %v1501
      %v1664 = vpop.f32.mrf.mxu0
      %v1665 = vadd.f32 0.0, %v1664
      %v1666 = vpop.f32.mrf.mxu0
      %1667 = vmatprep.mubr.f32.mxu0 0.0
      %1668 = vmatmul.mubr.f32.gmra.mxu0 %v1504
      %v1669 = vpop.f32.mrf.mxu0
      %v1670 = vadd.f32 0.0, %v1669
      %v1671 = vpop.f32.mrf.mxu0
      %1672 = vmatprep.mubr.f32.mxu0 0.0
      %1673 = vmatmul.mubr.f32.gmra.mxu0 %v1507
      %v1674 = vpop.f32.mrf.mxu0
      %v1675 = vadd.f32 0.0, %v1674
      %v1676 = vpop.f32.mrf.mxu0
      %1677 = vmatprep.mubr.f32.mxu0 0.0
      %1678 = vmatmul.mubr.f32.gmra.mxu0 %v1510
      %v1679 = vpop.f32.mrf.mxu0
      %v1680 = vadd.f32 0.0, %v1679
      %v1681 = vpop.f32.mrf.mxu0
      %1682 = vmatprep.mubr.f32.mxu0 0.0
      %1683 = vmatmul.mubr.f32.gmra.mxu0 %v1513
      %v1684 = vpop.f32.mrf.mxu0
      %v1685 = vadd.f32 0.0, %v1684
      %v1686 = vpop.f32.mrf.mxu0
      %1687 = vmatprep.mubr.f32.mxu0 0.0
      %1688 = vmatmul.mubr.f32.gmra.mxu0 %v1516
      %v1689 = vpop.f32.mrf.mxu0
      %v1690 = vadd.f32 0.0, %v1689
      %v1691 = vpop.f32.mrf.mxu0
      %1692 = vmatprep.mubr.f32.mxu0 0.0
      %1693 = vmatmul.mubr.f32.gmra.mxu0 %v1519
      %v1694 = vpop.f32.mrf.mxu0
      %v1695 = vadd.f32 0.0, %v1694
      %v1696 = vpop.f32.mrf.mxu0
      %1697 = vmatprep.mubr.f32.mxu0 0.0
      %1698 = vmatmul.mubr.f32.gmra.mxu0 %v1522
      %v1699 = vpop.f32.mrf.mxu0
      %v1700 = vadd.f32 0.0, %v1699
      %v1701 = vpop.f32.mrf.mxu0
      %1702 = vmatprep.mubr.f32.mxu0 0.0
      %1703 = vmatmul.mubr.f32.gmra.mxu0 %v1525
      %v1704 = vpop.f32.mrf.mxu0
      %v1705 = vadd.f32 0.0, %v1704
      %v1706 = vpop.f32.mrf.mxu0
      %1707 = vmatprep.mubr.f32.mxu0 0.0
      %1708 = vmatmul.mubr.f32.gmra.mxu0 %v1528
      %v1709 = vpop.f32.mrf.mxu0
      %v1710 = vadd.f32 0.0, %v1709
      %v1711 = vpop.f32.mrf.mxu0
      %1712 = vmatprep.mubr.f32.mxu0 0.0
      %1713 = vmatmul.mubr.f32.gmra.mxu0 %v1531
      %v1714 = vpop.f32.mrf.mxu0
      %v1715 = vadd.f32 0.0, %v1714
      %v1716 = vpop.f32.mrf.mxu0
      %1717 = vmatprep.mubr.f32.mxu0 0.0
      %1718 = vmatmul.mubr.f32.gmra.mxu0 %v1534
      %v1719 = vpop.f32.mrf.mxu0
      %v1720 = vadd.f32 0.0, %v1719
      %v1721 = vpop.f32.mrf.mxu0
      %1722 = vmatprep.mubr.f32.mxu0 0.0
      %1723 = vmatmul.mubr.f32.gmra.mxu0 %v1537
      %v1724 = vpop.f32.mrf.mxu0
      %v1725 = vadd.f32 0.0, %v1724
      %v1726 = vpop.f32.mrf.mxu0
      %1727 = vmatprep.mubr.f32.mxu0 0.0
      %1728 = vmatmul.mubr.f32.gmra.mxu0 %v1540
      %v1729 = vpop.f32.mrf.mxu0
      %v1730 = vadd.f32 0.0, %v1729
      %v1731 = vpop.f32.mrf.mxu0
      %1732 = vmatprep.mubr.f32.mxu0 0.0
      %1733 = vmatmul.mubr.f32.gmra.mxu0 %v1543
      %v1734 = vpop.f32.mrf.mxu0
      %v1735 = vadd.f32 0.0, %v1734
      %v1736 = vpop.f32.mrf.mxu0
      %1737 = vmatprep.mubr.f32.mxu0 0.0
      %1738 = vmatmul.mubr.f32.gmra.mxu0 %v1546
      %v1739 = vpop.f32.mrf.mxu0
      %v1740 = vadd.f32 0.0, %v1739
      %v1741 = vpop.f32.mrf.mxu0
      %1742 = vmatprep.mubr.f32.mxu0 0.0
      %1743 = vmatmul.mubr.f32.gmra.mxu0 %v1549
      %v1744 = vpop.f32.mrf.mxu0
      %v1745 = vadd.f32 0.0, %v1744
      %v1746 = vpop.f32.mrf.mxu0
      %1747 = vmatprep.mubr.f32.mxu0 0.0
      %1748 = vmatmul.mubr.f32.gmra.mxu0 %v1552
      %v1749 = vpop.f32.mrf.mxu0
      %v1750 = vadd.f32 0.0, %v1749
      %v1751 = vpop.f32.mrf.mxu0
      %1752 = vmatprep.mubr.f32.mxu0 0.0
      %1753 = vmatmul.mubr.f32.gmra.mxu0 %v1555
      %v1754 = vpop.f32.mrf.mxu0
      %v1755 = vadd.f32 0.0, %v1754
      %v1756 = vpop.f32.mrf.mxu0
      %1757 = vmatprep.mubr.f32.mxu0 0.0
      %1758 = vmatmul.mubr.f32.gmra.mxu0 %v1558
      %v1759 = vpop.f32.mrf.mxu0
      %v1760 = vadd.f32 0.0, %v1759
      %v1761 = vpop.f32.mrf.mxu0
      %1762 = vmatprep.mubr.f32.mxu0 0.0
      %1763 = vmatmul.mubr.f32.gmra.mxu0 %v1561
      %v1764 = vpop.f32.mrf.mxu0
      %v1765 = vadd.f32 0.0, %v1764
      %v1766 = vpop.f32.mrf.mxu0
      %1767 = vmatprep.mubr.f32.mxu0 0.0
      %1768 = vmatmul.mubr.f32.gmra.mxu0 %v1564
      %v1769 = vpop.f32.mrf.mxu0
      %v1770 = vadd.f32 0.0, %v1769
      %v1771 = vpop.f32.mrf.mxu0
      %1772 = vmatprep.mubr.f32.mxu0 0.0
      %1773 = vmatmul.mubr.f32.gmra.mxu0 %v1567
      %v1774 = vpop.f32.mrf.mxu0
      %v1775 = vadd.f32 0.0, %v1774
      %v1776 = vpop.f32.mrf.mxu0
      %1777 = vmatprep.mubr.f32.mxu0 0.0
      %1778 = vmatmul.mubr.f32.gmra.mxu0 %v1570
      %v1779 = vpop.f32.mrf.mxu0
      %v1780 = vadd.f32 0.0, %v1779
      %v1781 = vpop.f32.mrf.mxu0
      %1782 = vmatprep.mubr.f32.mxu0 0.0
      %1783 = vmatmul.mubr.f32.gmra.mxu0 %v1573
      %v1784 = vpop.f32.mrf.mxu0
      %v1785 = vadd.f32 0.0, %v1784
      %v1786 = vpop.f32.mrf.mxu0
      %1787 = vmatprep.mubr.f32.mxu0 0.0
      %1788 = vmatmul.mubr.f32.gmra.mxu0 %v1576
      %v1789 = vpop.f32.mrf.mxu0
      %v1790 = vadd.f32 0.0, %v1789
      %v1791 = vpop.f32.mrf.mxu0
      %1792 = vmatprep.mubr.f32.mxu0 0.0
      %1793 = vmatmul.mubr.f32.gmra.mxu0 %v1579
      %v1794 = vpop.f32.mrf.mxu0
      %v1795 = vadd.f32 0.0, %v1794
      %v1796 = vpop.f32.mrf.mxu0
      %1797 = vmatprep.mubr.f32.mxu0 0.0
      %1798 = vmatmul.mubr.f32.gmra.mxu0 %v1582
      %v1799 = vpop.f32.mrf.mxu0
      %v1800 = vadd.f32 0.0, %v1799
      %v1801 = vpop.f32.mrf.mxu0
      %1802 = vmatprep.mubr.f32.mxu0 0.0
      %1803 = vmatmul.mubr.f32.gmra.mxu0 %v1585
      %v1804 = vpop.f32.mrf.mxu0
      %v1805 = vadd.f32 0.0, %v1804
      %v1806 = vpop.f32.mrf.mxu0
      %1807 = vmatprep.mubr.f32.mxu0 0.0
      %1808 = vmatmul.mubr.f32.gmra.mxu0 %v1588
      %v1809 = vpop.f32.mrf.mxu0
      %v1810 = vadd.f32 0.0, %v1809
      %v1811 = vpop.f32.mrf.mxu0
      %1812 = vmatprep.mubr.f32.mxu0 0.0
      %1813 = vmatmul.mubr.f32.gmra.mxu0 %v1591
      %v1814 = vpop.f32.mrf.mxu0
      %v1815 = vadd.f32 0.0, %v1814
      %v1816 = vpop.f32.mrf.mxu0
      %1817 = vdwg.mxu0
      %v1818 = vadd.f32 %v1431, %v1660
      %v1819 = vadd.f32 %v1432, %v1665
      %v1820 = vadd.f32 %v1433, %v1670
      %v1821 = vadd.f32 %v1434, %v1675
      %v1822 = vadd.f32 %v1435, %v1680
      %v1823 = vadd.f32 %v1436, %v1685
      %v1824 = vadd.f32 %v1437, %v1690
      %v1825 = vadd.f32 %v1438, %v1695
      %v1826 = vadd.f32 %v1439, %v1700
      %v1827 = vadd.f32 %v1440, %v1705
      %v1828 = vadd.f32 %v1441, %v1710
      %v1829 = vadd.f32 %v1442, %v1715
      %v1830 = vadd.f32 %v1443, %v1720
      %v1831 = vadd.f32 %v1444, %v1725
      %v1832 = vadd.f32 %v1445, %v1730
      %v1833 = vadd.f32 %v1446, %v1735
      %v1834 = vadd.f32 %v1447, %v1740
      %v1835 = vadd.f32 %v1448, %v1745
      %v1836 = vadd.f32 %v1449, %v1750
      %v1837 = vadd.f32 %v1450, %v1755
      %v1838 = vadd.f32 %v1451, %v1760
      %v1839 = vadd.f32 %v1452, %v1765
      %v1840 = vadd.f32 %v1453, %v1770
      %v1841 = vadd.f32 %v1454, %v1775
      %v1842 = vadd.f32 %v1455, %v1780
      %v1843 = vadd.f32 %v1456, %v1785
      %v1844 = vadd.f32 %v1457, %v1790
      %v1845 = vadd.f32 %v1458, %v1795
      %v1846 = vadd.f32 %v1459, %v1800
      %v1847 = vadd.f32 %v1460, %v1805
      %v1848 = vadd.f32 %v1461, %v1810
      %v1849 = vadd.f32 %v1462, %v1815
      %v1850 = vld [vmem:[%s335 + $0x1] sm:$0xff]
      %v1851 = vld [vmem:[%s335 + $0x9] sm:$0xff]
      %v1852 = vld [vmem:[%s335 + $0x19] sm:$0xff]
      %v1853 = vld [vmem:[%s335 + $0x21] sm:$0xff]
      %v1854 = vld [vmem:[%s335 + $0x31] sm:$0xff]
      %v1855 = vld [vmem:[%s335 + $0x39] sm:$0xff]
      %v1856 = vld [vmem:[%s335 + $0x49] sm:$0xff]
      %v1857 = vld [vmem:[%s335 + $0x51] sm:$0xff]
      %v1858 = vld [vmem:[%s335 + $0x61] sm:$0xff]
      %v1859 = vld [vmem:[%s335 + $0x69] sm:$0xff]
      %v1860 = vld [vmem:[%s335 + $0x79] sm:$0xff]
      %v1861 = vld [vmem:[%s335 + $0x81] sm:$0xff]
      %v1862 = vld [vmem:[%s335 + $0x91] sm:$0xff]
      %v1863 = vld [vmem:[%s335 + $0x99] sm:$0xff]
      %v1864 = vld [vmem:[%s335 + $0xa9] sm:$0xff]
      %v1865 = vld [vmem:[%s335 + $0xb1] sm:$0xff]
      %v1866 = vld [vmem:[%s335 + $0xc1] sm:$0xff]
      %v1867 = vld [vmem:[%s335 + $0xc9] sm:$0xff]
      %v1868 = vld [vmem:[%s335 + $0xd9] sm:$0xff]
      %v1869 = vld [vmem:[%s335 + $0xe1] sm:$0xff]
      %v1870 = vld [vmem:[%s335 + $0xf1] sm:$0xff]
      %v1871 = vld [vmem:[%s335 + $0xf9] sm:$0xff]
      %v1872 = vld [vmem:[%s335 + $0x109] sm:$0xff]
      %v1873 = vld [vmem:[%s335 + $0x111] sm:$0xff]
      %v1874 = vld [vmem:[%s335 + $0x121] sm:$0xff]
      %v1875 = vld [vmem:[%s335 + $0x129] sm:$0xff]
      %v1876 = vld [vmem:[%s335 + $0x139] sm:$0xff]
      %v1877 = vld [vmem:[%s335 + $0x141] sm:$0xff]
      %v1878 = vld [vmem:[%s335 + $0x151] sm:$0xff]
      %v1879 = vld [vmem:[%s335 + $0x159] sm:$0xff]
      %v1880 = vld [vmem:[%s335 + $0x169] sm:$0xff]
      %v1881 = vld [vmem:[%s335 + $0x171] sm:$0xff]
      %s1882 = scalar_lea.vmem %s3, 32
      %v1883 = vld [vmem:[%s1882] sm:$0xff]
      %v1885 = vsel %vm433, %v1850, 0
      %v1888 = vsel %vm433, %v1851, 0
      %v1891 = vsel %vm433, %v1852, 0
      %v1894 = vsel %vm433, %v1853, 0
      %v1897 = vsel %vm433, %v1854, 0
      %v1900 = vsel %vm433, %v1855, 0
      %v1903 = vsel %vm433, %v1856, 0
      %v1906 = vsel %vm433, %v1857, 0
      %v1909 = vsel %vm433, %v1858, 0
      %v1912 = vsel %vm433, %v1859, 0
      %v1915 = vsel %vm433, %v1860, 0
      %v1918 = vsel %vm433, %v1861, 0
      %v1921 = vsel %vm433, %v1862, 0
      %v1924 = vsel %vm433, %v1863, 0
      %v1927 = vsel %vm433, %v1864, 0
      %v1930 = vsel %vm433, %v1865, 0
      %v1933 = vsel %vm433, %v1866, 0
      %v1936 = vsel %vm433, %v1867, 0
      %v1939 = vsel %vm433, %v1868, 0
      %v1942 = vsel %vm433, %v1869, 0
      %v1945 = vsel %vm433, %v1870, 0
      %v1948 = vsel %vm433, %v1871, 0
      %v1951 = vsel %vm433, %v1872, 0
      %v1954 = vsel %vm433, %v1873, 0
      %v1957 = vsel %vm433, %v1874, 0
      %v1960 = vsel %vm433, %v1875, 0
      %v1963 = vsel %vm433, %v1876, 0
      %v1966 = vsel %vm433, %v1877, 0
      %v1969 = vsel %vm433, %v1878, 0
      %v1972 = vsel %vm433, %v1879, 0
      %v1975 = vsel %vm433, %v1880, 0
      %v1978 = vsel %vm433, %v1881, 0
      %1980 = vmatprep.subr.mxu0 0.0
      %1981 = vmatpush1.msra.mxu0 0.0
      %1982 = vmatprep.subr.mxu0 0.0
      %1983 = vmatpush1.msra.mxu0 0.0
      %1984 = vmatprep.subr.mxu0 0.0
      %1985 = vmatpush1.msra.mxu0 0.0
      %1986 = vmatprep.subr.mxu0 0.0
      %1987 = vmatpush1.msra.mxu0 0.0
      %1988 = vmatprep.subr.mxu0 0.0
      %1989 = vmatpush1.msra.mxu0 0.0
      %1990 = vmatprep.subr.mxu0 0.0
      %1991 = vmatpush1.msra.mxu0 0.0
      %1992 = vmatprep.subr.mxu0 0.0
      %1993 = vmatpush1.msra.mxu0 0.0
      %1994 = vmatprep.subr.mxu0 0.0
      %1995 = vmatpush1.msra.mxu0 0.0
      %1996 = vmatprep.subr.mxu0 0.0
      %1997 = vmatpush1.msra.mxu0 0.0
      %1998 = vmatprep.subr.mxu0 0.0
      %1999 = vmatpush1.msra.mxu0 0.0
      %2000 = vmatprep.subr.mxu0 0.0
      %2001 = vmatpush1.msra.mxu0 0.0
      %2002 = vmatprep.subr.mxu0 0.0
      %2003 = vmatpush1.msra.mxu0 0.0
      %2004 = vmatprep.subr.mxu0 0.0
      %2005 = vmatpush1.msra.mxu0 0.0
      %2006 = vmatprep.subr.mxu0 0.0
      %2007 = vmatpush1.msra.mxu0 0.0
      %2008 = vmatprep.subr.mxu0 0.0
      %2009 = vmatpush1.msra.mxu0 0.0
      %2010 = vmatprep.subr.mxu0 0.0
      %2011 = vmatpush1.msra.mxu0 %v1883
      %2012 = vmatprep.subr.mxu0 0.0
      %2013 = vmatpush2.msra.mxu0 0.0
      %2014 = vmatprep.subr.mxu0 0.0
      %2015 = vmatpush2.msra.mxu0 0.0
      %2016 = vmatprep.subr.mxu0 0.0
      %2017 = vmatpush2.msra.mxu0 0.0
      %2018 = vmatprep.subr.mxu0 0.0
      %2019 = vmatpush2.msra.mxu0 0.0
      %2020 = vmatprep.subr.mxu0 0.0
      %2021 = vmatpush2.msra.mxu0 0.0
      %2022 = vmatprep.subr.mxu0 0.0
      %2023 = vmatpush2.msra.mxu0 0.0
      %2024 = vmatprep.subr.mxu0 0.0
      %2025 = vmatpush2.msra.mxu0 0.0
      %2026 = vmatprep.subr.mxu0 0.0
      %2027 = vmatpush2.msra.mxu0 0.0
      %2028 = vmatprep.subr.mxu0 0.0
      %2029 = vmatpush2.msra.mxu0 0.0
      %2030 = vmatprep.subr.mxu0 0.0
      %2031 = vmatpush2.msra.mxu0 0.0
      %2032 = vmatprep.subr.mxu0 0.0
      %2033 = vmatpush2.msra.mxu0 0.0
      %2034 = vmatprep.subr.mxu0 0.0
      %2035 = vmatpush2.msra.mxu0 0.0
      %2036 = vmatprep.subr.mxu0 0.0
      %2037 = vmatpush2.msra.mxu0 0.0
      %2038 = vmatprep.subr.mxu0 0.0
      %2039 = vmatpush2.msra.mxu0 0.0
      %2040 = vmatprep.subr.mxu0 0.0
      %2041 = vmatpush2.msra.mxu0 0.0
      %2042 = vmatprep.subr.mxu0 0.0
      %2043 = vmatpush2.msra.mxu0 0.0
      %2044 = vmatprep.mubr.f32.mxu0 0.0
      %2045 = vmatmul.mubr.f32.gmra.mxu0 %v1885
      %v2046 = vpop.f32.mrf.mxu0
      %v2047 = vadd.f32 0.0, %v2046
      %v2048 = vpop.f32.mrf.mxu0
      %2049 = vmatprep.mubr.f32.mxu0 0.0
      %2050 = vmatmul.mubr.f32.gmra.mxu0 %v1888
      %v2051 = vpop.f32.mrf.mxu0
      %v2052 = vadd.f32 0.0, %v2051
      %v2053 = vpop.f32.mrf.mxu0
      %2054 = vmatprep.mubr.f32.mxu0 0.0
      %2055 = vmatmul.mubr.f32.gmra.mxu0 %v1891
      %v2056 = vpop.f32.mrf.mxu0
      %v2057 = vadd.f32 0.0, %v2056
      %v2058 = vpop.f32.mrf.mxu0
      %2059 = vmatprep.mubr.f32.mxu0 0.0
      %2060 = vmatmul.mubr.f32.gmra.mxu0 %v1894
      %v2061 = vpop.f32.mrf.mxu0
      %v2062 = vadd.f32 0.0, %v2061
      %v2063 = vpop.f32.mrf.mxu0
      %2064 = vmatprep.mubr.f32.mxu0 0.0
      %2065 = vmatmul.mubr.f32.gmra.mxu0 %v1897
      %v2066 = vpop.f32.mrf.mxu0
      %v2067 = vadd.f32 0.0, %v2066
      %v2068 = vpop.f32.mrf.mxu0
      %2069 = vmatprep.mubr.f32.mxu0 0.0
      %2070 = vmatmul.mubr.f32.gmra.mxu0 %v1900
      %v2071 = vpop.f32.mrf.mxu0
      %v2072 = vadd.f32 0.0, %v2071
      %v2073 = vpop.f32.mrf.mxu0
      %2074 = vmatprep.mubr.f32.mxu0 0.0
      %2075 = vmatmul.mubr.f32.gmra.mxu0 %v1903
      %v2076 = vpop.f32.mrf.mxu0
      %v2077 = vadd.f32 0.0, %v2076
      %v2078 = vpop.f32.mrf.mxu0
      %2079 = vmatprep.mubr.f32.mxu0 0.0
      %2080 = vmatmul.mubr.f32.gmra.mxu0 %v1906
      %v2081 = vpop.f32.mrf.mxu0
      %v2082 = vadd.f32 0.0, %v2081
      %v2083 = vpop.f32.mrf.mxu0
      %2084 = vmatprep.mubr.f32.mxu0 0.0
      %2085 = vmatmul.mubr.f32.gmra.mxu0 %v1909
      %v2086 = vpop.f32.mrf.mxu0
      %v2087 = vadd.f32 0.0, %v2086
      %v2088 = vpop.f32.mrf.mxu0
      %2089 = vmatprep.mubr.f32.mxu0 0.0
      %2090 = vmatmul.mubr.f32.gmra.mxu0 %v1912
      %v2091 = vpop.f32.mrf.mxu0
      %v2092 = vadd.f32 0.0, %v2091
      %v2093 = vpop.f32.mrf.mxu0
      %2094 = vmatprep.mubr.f32.mxu0 0.0
      %2095 = vmatmul.mubr.f32.gmra.mxu0 %v1915
      %v2096 = vpop.f32.mrf.mxu0
      %v2097 = vadd.f32 0.0, %v2096
      %v2098 = vpop.f32.mrf.mxu0
      %2099 = vmatprep.mubr.f32.mxu0 0.0
      %2100 = vmatmul.mubr.f32.gmra.mxu0 %v1918
      %v2101 = vpop.f32.mrf.mxu0
      %v2102 = vadd.f32 0.0, %v2101
      %v2103 = vpop.f32.mrf.mxu0
      %2104 = vmatprep.mubr.f32.mxu0 0.0
      %2105 = vmatmul.mubr.f32.gmra.mxu0 %v1921
      %v2106 = vpop.f32.mrf.mxu0
      %v2107 = vadd.f32 0.0, %v2106
      %v2108 = vpop.f32.mrf.mxu0
      %2109 = vmatprep.mubr.f32.mxu0 0.0
      %2110 = vmatmul.mubr.f32.gmra.mxu0 %v1924
      %v2111 = vpop.f32.mrf.mxu0
      %v2112 = vadd.f32 0.0, %v2111
      %v2113 = vpop.f32.mrf.mxu0
      %2114 = vmatprep.mubr.f32.mxu0 0.0
      %2115 = vmatmul.mubr.f32.gmra.mxu0 %v1927
      %v2116 = vpop.f32.mrf.mxu0
      %v2117 = vadd.f32 0.0, %v2116
      %v2118 = vpop.f32.mrf.mxu0
      %2119 = vmatprep.mubr.f32.mxu0 0.0
      %2120 = vmatmul.mubr.f32.gmra.mxu0 %v1930
      %v2121 = vpop.f32.mrf.mxu0
      %v2122 = vadd.f32 0.0, %v2121
      %v2123 = vpop.f32.mrf.mxu0
      %2124 = vmatprep.mubr.f32.mxu0 0.0
      %2125 = vmatmul.mubr.f32.gmra.mxu0 %v1933
      %v2126 = vpop.f32.mrf.mxu0
      %v2127 = vadd.f32 0.0, %v2126
      %v2128 = vpop.f32.mrf.mxu0
      %2129 = vmatprep.mubr.f32.mxu0 0.0
      %2130 = vmatmul.mubr.f32.gmra.mxu0 %v1936
      %v2131 = vpop.f32.mrf.mxu0
      %v2132 = vadd.f32 0.0, %v2131
      %v2133 = vpop.f32.mrf.mxu0
      %2134 = vmatprep.mubr.f32.mxu0 0.0
      %2135 = vmatmul.mubr.f32.gmra.mxu0 %v1939
      %v2136 = vpop.f32.mrf.mxu0
      %v2137 = vadd.f32 0.0, %v2136
      %v2138 = vpop.f32.mrf.mxu0
      %2139 = vmatprep.mubr.f32.mxu0 0.0
      %2140 = vmatmul.mubr.f32.gmra.mxu0 %v1942
      %v2141 = vpop.f32.mrf.mxu0
      %v2142 = vadd.f32 0.0, %v2141
      %v2143 = vpop.f32.mrf.mxu0
      %2144 = vmatprep.mubr.f32.mxu0 0.0
      %2145 = vmatmul.mubr.f32.gmra.mxu0 %v1945
      %v2146 = vpop.f32.mrf.mxu0
      %v2147 = vadd.f32 0.0, %v2146
      %v2148 = vpop.f32.mrf.mxu0
      %2149 = vmatprep.mubr.f32.mxu0 0.0
      %2150 = vmatmul.mubr.f32.gmra.mxu0 %v1948
      %v2151 = vpop.f32.mrf.mxu0
      %v2152 = vadd.f32 0.0, %v2151
      %v2153 = vpop.f32.mrf.mxu0
      %2154 = vmatprep.mubr.f32.mxu0 0.0
      %2155 = vmatmul.mubr.f32.gmra.mxu0 %v1951
      %v2156 = vpop.f32.mrf.mxu0
      %v2157 = vadd.f32 0.0, %v2156
      %v2158 = vpop.f32.mrf.mxu0
      %2159 = vmatprep.mubr.f32.mxu0 0.0
      %2160 = vmatmul.mubr.f32.gmra.mxu0 %v1954
      %v2161 = vpop.f32.mrf.mxu0
      %v2162 = vadd.f32 0.0, %v2161
      %v2163 = vpop.f32.mrf.mxu0
      %2164 = vmatprep.mubr.f32.mxu0 0.0
      %2165 = vmatmul.mubr.f32.gmra.mxu0 %v1957
      %v2166 = vpop.f32.mrf.mxu0
      %v2167 = vadd.f32 0.0, %v2166
      %v2168 = vpop.f32.mrf.mxu0
      %2169 = vmatprep.mubr.f32.mxu0 0.0
      %2170 = vmatmul.mubr.f32.gmra.mxu0 %v1960
      %v2171 = vpop.f32.mrf.mxu0
      %v2172 = vadd.f32 0.0, %v2171
      %v2173 = vpop.f32.mrf.mxu0
      %2174 = vmatprep.mubr.f32.mxu0 0.0
      %2175 = vmatmul.mubr.f32.gmra.mxu0 %v1963
      %v2176 = vpop.f32.mrf.mxu0
      %v2177 = vadd.f32 0.0, %v2176
      %v2178 = vpop.f32.mrf.mxu0
      %2179 = vmatprep.mubr.f32.mxu0 0.0
      %2180 = vmatmul.mubr.f32.gmra.mxu0 %v1966
      %v2181 = vpop.f32.mrf.mxu0
      %v2182 = vadd.f32 0.0, %v2181
      %v2183 = vpop.f32.mrf.mxu0
      %2184 = vmatprep.mubr.f32.mxu0 0.0
      %2185 = vmatmul.mubr.f32.gmra.mxu0 %v1969
      %v2186 = vpop.f32.mrf.mxu0
      %v2187 = vadd.f32 0.0, %v2186
      %v2188 = vpop.f32.mrf.mxu0
      %2189 = vmatprep.mubr.f32.mxu0 0.0
      %2190 = vmatmul.mubr.f32.gmra.mxu0 %v1972
      %v2191 = vpop.f32.mrf.mxu0
      %v2192 = vadd.f32 0.0, %v2191
      %v2193 = vpop.f32.mrf.mxu0
      %2194 = vmatprep.mubr.f32.mxu0 0.0
      %2195 = vmatmul.mubr.f32.gmra.mxu0 %v1975
      %v2196 = vpop.f32.mrf.mxu0
      %v2197 = vadd.f32 0.0, %v2196
      %v2198 = vpop.f32.mrf.mxu0
      %2199 = vmatprep.mubr.f32.mxu0 0.0
      %2200 = vmatmul.mubr.f32.gmra.mxu0 %v1978
      %v2201 = vpop.f32.mrf.mxu0
      %v2202 = vadd.f32 0.0, %v2201
      %v2203 = vpop.f32.mrf.mxu0
      %2204 = vdwg.mxu0
      %v2205 = vadd.f32 %v1818, %v2047
      %v2206 = vadd.f32 %v1819, %v2052
      %v2207 = vadd.f32 %v1820, %v2057
      %v2208 = vadd.f32 %v1821, %v2062
      %v2209 = vadd.f32 %v1822, %v2067
      %v2210 = vadd.f32 %v1823, %v2072
      %v2211 = vadd.f32 %v1824, %v2077
      %v2212 = vadd.f32 %v1825, %v2082
      %v2213 = vadd.f32 %v1826, %v2087
      %v2214 = vadd.f32 %v1827, %v2092
      %v2215 = vadd.f32 %v1828, %v2097
      %v2216 = vadd.f32 %v1829, %v2102
      %v2217 = vadd.f32 %v1830, %v2107
      %v2218 = vadd.f32 %v1831, %v2112
      %v2219 = vadd.f32 %v1832, %v2117
      %v2220 = vadd.f32 %v1833, %v2122
      %v2221 = vadd.f32 %v1834, %v2127
      %v2222 = vadd.f32 %v1835, %v2132
      %v2223 = vadd.f32 %v1836, %v2137
      %v2224 = vadd.f32 %v1837, %v2142
      %v2225 = vadd.f32 %v1838, %v2147
      %v2226 = vadd.f32 %v1839, %v2152
      %v2227 = vadd.f32 %v1840, %v2157
      %v2228 = vadd.f32 %v1841, %v2162
      %v2229 = vadd.f32 %v1842, %v2167
      %v2230 = vadd.f32 %v1843, %v2172
      %v2231 = vadd.f32 %v1844, %v2177
      %v2232 = vadd.f32 %v1845, %v2182
      %v2233 = vadd.f32 %v1846, %v2187
      %v2234 = vadd.f32 %v1847, %v2192
      %v2235 = vadd.f32 %v1848, %v2197
      %v2236 = vadd.f32 %v1849, %v2202
      %v2237 = vld [vmem:[%s335 + $0x2] sm:$0xff]
      %v2238 = vld [vmem:[%s335 + $0xa] sm:$0xff]
      %v2239 = vld [vmem:[%s335 + $0x1a] sm:$0xff]
      %v2240 = vld [vmem:[%s335 + $0x22] sm:$0xff]
      %v2241 = vld [vmem:[%s335 + $0x32] sm:$0xff]
      %v2242 = vld [vmem:[%s335 + $0x3a] sm:$0xff]
      %v2243 = vld [vmem:[%s335 + $0x4a] sm:$0xff]
      %v2244 = vld [vmem:[%s335 + $0x52] sm:$0xff]
      %v2245 = vld [vmem:[%s335 + $0x62] sm:$0xff]
      %v2246 = vld [vmem:[%s335 + $0x6a] sm:$0xff]
      %v2247 = vld [vmem:[%s335 + $0x7a] sm:$0xff]
      %v2248 = vld [vmem:[%s335 + $0x82] sm:$0xff]
      %v2249 = vld [vmem:[%s335 + $0x92] sm:$0xff]
      %v2250 = vld [vmem:[%s335 + $0x9a] sm:$0xff]
      %v2251 = vld [vmem:[%s335 + $0xaa] sm:$0xff]
      %v2252 = vld [vmem:[%s335 + $0xb2] sm:$0xff]
      %v2253 = vld [vmem:[%s335 + $0xc2] sm:$0xff]
      %v2254 = vld [vmem:[%s335 + $0xca] sm:$0xff]
      %v2255 = vld [vmem:[%s335 + $0xda] sm:$0xff]
      %v2256 = vld [vmem:[%s335 + $0xe2] sm:$0xff]
      %v2257 = vld [vmem:[%s335 + $0xf2] sm:$0xff]
      %v2258 = vld [vmem:[%s335 + $0xfa] sm:$0xff]
      %v2259 = vld [vmem:[%s335 + $0x10a] sm:$0xff]
      %v2260 = vld [vmem:[%s335 + $0x112] sm:$0xff]
      %v2261 = vld [vmem:[%s335 + $0x122] sm:$0xff]
      %v2262 = vld [vmem:[%s335 + $0x12a] sm:$0xff]
      %v2263 = vld [vmem:[%s335 + $0x13a] sm:$0xff]
      %v2264 = vld [vmem:[%s335 + $0x142] sm:$0xff]
      %v2265 = vld [vmem:[%s335 + $0x152] sm:$0xff]
      %v2266 = vld [vmem:[%s335 + $0x15a] sm:$0xff]
      %v2267 = vld [vmem:[%s335 + $0x16a] sm:$0xff]
      %v2268 = vld [vmem:[%s335 + $0x172] sm:$0xff]
      %s2269 = scalar_lea.vmem %s3, 40
      %v2270 = vld [vmem:[%s2269] sm:$0xff]
      %v2272 = vsel %vm433, %v2237, 0
      %v2275 = vsel %vm433, %v2238, 0
      %v2278 = vsel %vm433, %v2239, 0
      %v2281 = vsel %vm433, %v2240, 0
      %v2284 = vsel %vm433, %v2241, 0
      %v2287 = vsel %vm433, %v2242, 0
      %v2290 = vsel %vm433, %v2243, 0
      %v2293 = vsel %vm433, %v2244, 0
      %v2296 = vsel %vm433, %v2245, 0
      %v2299 = vsel %vm433, %v2246, 0
      %v2302 = vsel %vm433, %v2247, 0
      %v2305 = vsel %vm433, %v2248, 0
      %v2308 = vsel %vm433, %v2249, 0
      %v2311 = vsel %vm433, %v2250, 0
      %v2314 = vsel %vm433, %v2251, 0
      %v2317 = vsel %vm433, %v2252, 0
      %v2320 = vsel %vm433, %v2253, 0
      %v2323 = vsel %vm433, %v2254, 0
      %v2326 = vsel %vm433, %v2255, 0
      %v2329 = vsel %vm433, %v2256, 0
      %v2332 = vsel %vm433, %v2257, 0
      %v2335 = vsel %vm433, %v2258, 0
      %v2338 = vsel %vm433, %v2259, 0
      %v2341 = vsel %vm433, %v2260, 0
      %v2344 = vsel %vm433, %v2261, 0
      %v2347 = vsel %vm433, %v2262, 0
      %v2350 = vsel %vm433, %v2263, 0
      %v2353 = vsel %vm433, %v2264, 0
      %v2356 = vsel %vm433, %v2265, 0
      %v2359 = vsel %vm433, %v2266, 0
      %v2362 = vsel %vm433, %v2267, 0
      %v2365 = vsel %vm433, %v2268, 0
      %2367 = vmatprep.subr.mxu0 0.0
      %2368 = vmatpush1.msra.mxu0 0.0
      %2369 = vmatprep.subr.mxu0 0.0
      %2370 = vmatpush1.msra.mxu0 0.0
      %2371 = vmatprep.subr.mxu0 0.0
      %2372 = vmatpush1.msra.mxu0 0.0
      %2373 = vmatprep.subr.mxu0 0.0
      %2374 = vmatpush1.msra.mxu0 0.0
      %2375 = vmatprep.subr.mxu0 0.0
      %2376 = vmatpush1.msra.mxu0 0.0
      %2377 = vmatprep.subr.mxu0 0.0
      %2378 = vmatpush1.msra.mxu0 0.0
      %2379 = vmatprep.subr.mxu0 0.0
      %2380 = vmatpush1.msra.mxu0 0.0
      %2381 = vmatprep.subr.mxu0 0.0
      %2382 = vmatpush1.msra.mxu0 0.0
      %2383 = vmatprep.subr.mxu0 0.0
      %2384 = vmatpush1.msra.mxu0 0.0
      %2385 = vmatprep.subr.mxu0 0.0
      %2386 = vmatpush1.msra.mxu0 0.0
      %2387 = vmatprep.subr.mxu0 0.0
      %2388 = vmatpush1.msra.mxu0 0.0
      %2389 = vmatprep.subr.mxu0 0.0
      %2390 = vmatpush1.msra.mxu0 0.0
      %2391 = vmatprep.subr.mxu0 0.0
      %2392 = vmatpush1.msra.mxu0 0.0
      %2393 = vmatprep.subr.mxu0 0.0
      %2394 = vmatpush1.msra.mxu0 0.0
      %2395 = vmatprep.subr.mxu0 0.0
      %2396 = vmatpush1.msra.mxu0 0.0
      %2397 = vmatprep.subr.mxu0 0.0
      %2398 = vmatpush1.msra.mxu0 %v2270
      %2399 = vmatprep.subr.mxu0 0.0
      %2400 = vmatpush2.msra.mxu0 0.0
      %2401 = vmatprep.subr.mxu0 0.0
      %2402 = vmatpush2.msra.mxu0 0.0
      %2403 = vmatprep.subr.mxu0 0.0
      %2404 = vmatpush2.msra.mxu0 0.0
      %2405 = vmatprep.subr.mxu0 0.0
      %2406 = vmatpush2.msra.mxu0 0.0
      %2407 = vmatprep.subr.mxu0 0.0
      %2408 = vmatpush2.msra.mxu0 0.0
      %2409 = vmatprep.subr.mxu0 0.0
      %2410 = vmatpush2.msra.mxu0 0.0
      %2411 = vmatprep.subr.mxu0 0.0
      %2412 = vmatpush2.msra.mxu0 0.0
      %2413 = vmatprep.subr.mxu0 0.0
      %2414 = vmatpush2.msra.mxu0 0.0
      %2415 = vmatprep.subr.mxu0 0.0
      %2416 = vmatpush2.msra.mxu0 0.0
      %2417 = vmatprep.subr.mxu0 0.0
      %2418 = vmatpush2.msra.mxu0 0.0
      %2419 = vmatprep.subr.mxu0 0.0
      %2420 = vmatpush2.msra.mxu0 0.0
      %2421 = vmatprep.subr.mxu0 0.0
      %2422 = vmatpush2.msra.mxu0 0.0
      %2423 = vmatprep.subr.mxu0 0.0
      %2424 = vmatpush2.msra.mxu0 0.0
      %2425 = vmatprep.subr.mxu0 0.0
      %2426 = vmatpush2.msra.mxu0 0.0
      %2427 = vmatprep.subr.mxu0 0.0
      %2428 = vmatpush2.msra.mxu0 0.0
      %2429 = vmatprep.subr.mxu0 0.0
      %2430 = vmatpush2.msra.mxu0 0.0
      %2431 = vmatprep.mubr.f32.mxu0 0.0
      %2432 = vmatmul.mubr.f32.gmra.mxu0 %v2272
      %v2433 = vpop.f32.mrf.mxu0
      %v2434 = vadd.f32 0.0, %v2433
      %v2435 = vpop.f32.mrf.mxu0
      %2436 = vmatprep.mubr.f32.mxu0 0.0
      %2437 = vmatmul.mubr.f32.gmra.mxu0 %v2275
      %v2438 = vpop.f32.mrf.mxu0
      %v2439 = vadd.f32 0.0, %v2438
      %v2440 = vpop.f32.mrf.mxu0
      %2441 = vmatprep.mubr.f32.mxu0 0.0
      %2442 = vmatmul.mubr.f32.gmra.mxu0 %v2278
      %v2443 = vpop.f32.mrf.mxu0
      %v2444 = vadd.f32 0.0, %v2443
      %v2445 = vpop.f32.mrf.mxu0
      %2446 = vmatprep.mubr.f32.mxu0 0.0
      %2447 = vmatmul.mubr.f32.gmra.mxu0 %v2281
      %v2448 = vpop.f32.mrf.mxu0
      %v2449 = vadd.f32 0.0, %v2448
      %v2450 = vpop.f32.mrf.mxu0
      %2451 = vmatprep.mubr.f32.mxu0 0.0
      %2452 = vmatmul.mubr.f32.gmra.mxu0 %v2284
      %v2453 = vpop.f32.mrf.mxu0
      %v2454 = vadd.f32 0.0, %v2453
      %v2455 = vpop.f32.mrf.mxu0
      %2456 = vmatprep.mubr.f32.mxu0 0.0
      %2457 = vmatmul.mubr.f32.gmra.mxu0 %v2287
      %v2458 = vpop.f32.mrf.mxu0
      %v2459 = vadd.f32 0.0, %v2458
      %v2460 = vpop.f32.mrf.mxu0
      %2461 = vmatprep.mubr.f32.mxu0 0.0
      %2462 = vmatmul.mubr.f32.gmra.mxu0 %v2290
      %v2463 = vpop.f32.mrf.mxu0
      %v2464 = vadd.f32 0.0, %v2463
      %v2465 = vpop.f32.mrf.mxu0
      %2466 = vmatprep.mubr.f32.mxu0 0.0
      %2467 = vmatmul.mubr.f32.gmra.mxu0 %v2293
      %v2468 = vpop.f32.mrf.mxu0
      %v2469 = vadd.f32 0.0, %v2468
      %v2470 = vpop.f32.mrf.mxu0
      %2471 = vmatprep.mubr.f32.mxu0 0.0
      %2472 = vmatmul.mubr.f32.gmra.mxu0 %v2296
      %v2473 = vpop.f32.mrf.mxu0
      %v2474 = vadd.f32 0.0, %v2473
      %v2475 = vpop.f32.mrf.mxu0
      %2476 = vmatprep.mubr.f32.mxu0 0.0
      %2477 = vmatmul.mubr.f32.gmra.mxu0 %v2299
      %v2478 = vpop.f32.mrf.mxu0
      %v2479 = vadd.f32 0.0, %v2478
      %v2480 = vpop.f32.mrf.mxu0
      %2481 = vmatprep.mubr.f32.mxu0 0.0
      %2482 = vmatmul.mubr.f32.gmra.mxu0 %v2302
      %v2483 = vpop.f32.mrf.mxu0
      %v2484 = vadd.f32 0.0, %v2483
      %v2485 = vpop.f32.mrf.mxu0
      %2486 = vmatprep.mubr.f32.mxu0 0.0
      %2487 = vmatmul.mubr.f32.gmra.mxu0 %v2305
      %v2488 = vpop.f32.mrf.mxu0
      %v2489 = vadd.f32 0.0, %v2488
      %v2490 = vpop.f32.mrf.mxu0
      %2491 = vmatprep.mubr.f32.mxu0 0.0
      %2492 = vmatmul.mubr.f32.gmra.mxu0 %v2308
      %v2493 = vpop.f32.mrf.mxu0
      %v2494 = vadd.f32 0.0, %v2493
      %v2495 = vpop.f32.mrf.mxu0
      %2496 = vmatprep.mubr.f32.mxu0 0.0
      %2497 = vmatmul.mubr.f32.gmra.mxu0 %v2311
      %v2498 = vpop.f32.mrf.mxu0
      %v2499 = vadd.f32 0.0, %v2498
      %v2500 = vpop.f32.mrf.mxu0
      %2501 = vmatprep.mubr.f32.mxu0 0.0
      %2502 = vmatmul.mubr.f32.gmra.mxu0 %v2314
      %v2503 = vpop.f32.mrf.mxu0
      %v2504 = vadd.f32 0.0, %v2503
      %v2505 = vpop.f32.mrf.mxu0
      %2506 = vmatprep.mubr.f32.mxu0 0.0
      %2507 = vmatmul.mubr.f32.gmra.mxu0 %v2317
      %v2508 = vpop.f32.mrf.mxu0
      %v2509 = vadd.f32 0.0, %v2508
      %v2510 = vpop.f32.mrf.mxu0
      %2511 = vmatprep.mubr.f32.mxu0 0.0
      %2512 = vmatmul.mubr.f32.gmra.mxu0 %v2320
      %v2513 = vpop.f32.mrf.mxu0
      %v2514 = vadd.f32 0.0, %v2513
      %v2515 = vpop.f32.mrf.mxu0
      %2516 = vmatprep.mubr.f32.mxu0 0.0
      %2517 = vmatmul.mubr.f32.gmra.mxu0 %v2323
      %v2518 = vpop.f32.mrf.mxu0
      %v2519 = vadd.f32 0.0, %v2518
      %v2520 = vpop.f32.mrf.mxu0
      %2521 = vmatprep.mubr.f32.mxu0 0.0
      %2522 = vmatmul.mubr.f32.gmra.mxu0 %v2326
      %v2523 = vpop.f32.mrf.mxu0
      %v2524 = vadd.f32 0.0, %v2523
      %v2525 = vpop.f32.mrf.mxu0
      %2526 = vmatprep.mubr.f32.mxu0 0.0
      %2527 = vmatmul.mubr.f32.gmra.mxu0 %v2329
      %v2528 = vpop.f32.mrf.mxu0
      %v2529 = vadd.f32 0.0, %v2528
      %v2530 = vpop.f32.mrf.mxu0
      %2531 = vmatprep.mubr.f32.mxu0 0.0
      %2532 = vmatmul.mubr.f32.gmra.mxu0 %v2332
      %v2533 = vpop.f32.mrf.mxu0
      %v2534 = vadd.f32 0.0, %v2533
      %v2535 = vpop.f32.mrf.mxu0
      %2536 = vmatprep.mubr.f32.mxu0 0.0
      %2537 = vmatmul.mubr.f32.gmra.mxu0 %v2335
      %v2538 = vpop.f32.mrf.mxu0
      %v2539 = vadd.f32 0.0, %v2538
      %v2540 = vpop.f32.mrf.mxu0
      %2541 = vmatprep.mubr.f32.mxu0 0.0
      %2542 = vmatmul.mubr.f32.gmra.mxu0 %v2338
      %v2543 = vpop.f32.mrf.mxu0
      %v2544 = vadd.f32 0.0, %v2543
      %v2545 = vpop.f32.mrf.mxu0
      %2546 = vmatprep.mubr.f32.mxu0 0.0
      %2547 = vmatmul.mubr.f32.gmra.mxu0 %v2341
      %v2548 = vpop.f32.mrf.mxu0
      %v2549 = vadd.f32 0.0, %v2548
      %v2550 = vpop.f32.mrf.mxu0
      %2551 = vmatprep.mubr.f32.mxu0 0.0
      %2552 = vmatmul.mubr.f32.gmra.mxu0 %v2344
      %v2553 = vpop.f32.mrf.mxu0
      %v2554 = vadd.f32 0.0, %v2553
      %v2555 = vpop.f32.mrf.mxu0
      %2556 = vmatprep.mubr.f32.mxu0 0.0
      %2557 = vmatmul.mubr.f32.gmra.mxu0 %v2347
      %v2558 = vpop.f32.mrf.mxu0
      %v2559 = vadd.f32 0.0, %v2558
      %v2560 = vpop.f32.mrf.mxu0
      %2561 = vmatprep.mubr.f32.mxu0 0.0
      %2562 = vmatmul.mubr.f32.gmra.mxu0 %v2350
      %v2563 = vpop.f32.mrf.mxu0
      %v2564 = vadd.f32 0.0, %v2563
      %v2565 = vpop.f32.mrf.mxu0
      %2566 = vmatprep.mubr.f32.mxu0 0.0
      %2567 = vmatmul.mubr.f32.gmra.mxu0 %v2353
      %v2568 = vpop.f32.mrf.mxu0
      %v2569 = vadd.f32 0.0, %v2568
      %v2570 = vpop.f32.mrf.mxu0
      %2571 = vmatprep.mubr.f32.mxu0 0.0
      %2572 = vmatmul.mubr.f32.gmra.mxu0 %v2356
      %v2573 = vpop.f32.mrf.mxu0
      %v2574 = vadd.f32 0.0, %v2573
      %v2575 = vpop.f32.mrf.mxu0
      %2576 = vmatprep.mubr.f32.mxu0 0.0
      %2577 = vmatmul.mubr.f32.gmra.mxu0 %v2359
      %v2578 = vpop.f32.mrf.mxu0
      %v2579 = vadd.f32 0.0, %v2578
      %v2580 = vpop.f32.mrf.mxu0
      %2581 = vmatprep.mubr.f32.mxu0 0.0
      %2582 = vmatmul.mubr.f32.gmra.mxu0 %v2362
      %v2583 = vpop.f32.mrf.mxu0
      %v2584 = vadd.f32 0.0, %v2583
      %v2585 = vpop.f32.mrf.mxu0
      %2586 = vmatprep.mubr.f32.mxu0 0.0
      %2587 = vmatmul.mubr.f32.gmra.mxu0 %v2365
      %v2588 = vpop.f32.mrf.mxu0
      %v2589 = vadd.f32 0.0, %v2588
      %v2590 = vpop.f32.mrf.mxu0
      %2591 = vdwg.mxu0
      %v2592 = vadd.f32 %v2205, %v2434
      %v2593 = vadd.f32 %v2206, %v2439
      %v2594 = vadd.f32 %v2207, %v2444
      %v2595 = vadd.f32 %v2208, %v2449
      %v2596 = vadd.f32 %v2209, %v2454
      %v2597 = vadd.f32 %v2210, %v2459
      %v2598 = vadd.f32 %v2211, %v2464
      %v2599 = vadd.f32 %v2212, %v2469
      %v2600 = vadd.f32 %v2213, %v2474
      %v2601 = vadd.f32 %v2214, %v2479
      %v2602 = vadd.f32 %v2215, %v2484
      %v2603 = vadd.f32 %v2216, %v2489
      %v2604 = vadd.f32 %v2217, %v2494
      %v2605 = vadd.f32 %v2218, %v2499
      %v2606 = vadd.f32 %v2219, %v2504
      %v2607 = vadd.f32 %v2220, %v2509
      %v2608 = vadd.f32 %v2221, %v2514
      %v2609 = vadd.f32 %v2222, %v2519
      %v2610 = vadd.f32 %v2223, %v2524
      %v2611 = vadd.f32 %v2224, %v2529
      %v2612 = vadd.f32 %v2225, %v2534
      %v2613 = vadd.f32 %v2226, %v2539
      %v2614 = vadd.f32 %v2227, %v2544
      %v2615 = vadd.f32 %v2228, %v2549
      %v2616 = vadd.f32 %v2229, %v2554
      %v2617 = vadd.f32 %v2230, %v2559
      %v2618 = vadd.f32 %v2231, %v2564
      %v2619 = vadd.f32 %v2232, %v2569
      %v2620 = vadd.f32 %v2233, %v2574
      %v2621 = vadd.f32 %v2234, %v2579
      %v2622 = vadd.f32 %v2235, %v2584
      %v2623 = vadd.f32 %v2236, %v2589
      %v2624 = vld [vmem:[%s346] sm:$0xff]
      %v2625 = vld [vmem:[%s346 + $0x8] sm:$0xff]
      %v2626 = vld [vmem:[%s346 + $0x18] sm:$0xff]
      %v2627 = vld [vmem:[%s346 + $0x20] sm:$0xff]
      %v2628 = vld [vmem:[%s346 + $0x30] sm:$0xff]
      %v2629 = vld [vmem:[%s346 + $0x38] sm:$0xff]
      %v2630 = vld [vmem:[%s346 + $0x48] sm:$0xff]
      %v2631 = vld [vmem:[%s346 + $0x50] sm:$0xff]
      %v2632 = vld [vmem:[%s346 + $0x60] sm:$0xff]
      %v2633 = vld [vmem:[%s346 + $0x68] sm:$0xff]
      %v2634 = vld [vmem:[%s346 + $0x78] sm:$0xff]
      %v2635 = vld [vmem:[%s346 + $0x80] sm:$0xff]
      %v2636 = vld [vmem:[%s346 + $0x90] sm:$0xff]
      %v2637 = vld [vmem:[%s346 + $0x98] sm:$0xff]
      %v2638 = vld [vmem:[%s346 + $0xa8] sm:$0xff]
      %v2639 = vld [vmem:[%s346 + $0xb0] sm:$0xff]
      %v2640 = vld [vmem:[%s346 + $0xc0] sm:$0xff]
      %v2641 = vld [vmem:[%s346 + $0xc8] sm:$0xff]
      %v2642 = vld [vmem:[%s346 + $0xd8] sm:$0xff]
      %v2643 = vld [vmem:[%s346 + $0xe0] sm:$0xff]
      %v2644 = vld [vmem:[%s346 + $0xf0] sm:$0xff]
      %v2645 = vld [vmem:[%s346 + $0xf8] sm:$0xff]
      %v2646 = vld [vmem:[%s346 + $0x108] sm:$0xff]
      %v2647 = vld [vmem:[%s346 + $0x110] sm:$0xff]
      %v2648 = vld [vmem:[%s346 + $0x120] sm:$0xff]
      %v2649 = vld [vmem:[%s346 + $0x128] sm:$0xff]
      %v2650 = vld [vmem:[%s346 + $0x138] sm:$0xff]
      %v2651 = vld [vmem:[%s346 + $0x140] sm:$0xff]
      %v2652 = vld [vmem:[%s346 + $0x150] sm:$0xff]
      %v2653 = vld [vmem:[%s346 + $0x158] sm:$0xff]
      %v2654 = vld [vmem:[%s346 + $0x168] sm:$0xff]
      %v2655 = vld [vmem:[%s346 + $0x170] sm:$0xff]
      %s2656 = scalar_lea.vmem %s3, 48
      %v2657 = vld [vmem:[%s2656] sm:$0xff]
      %v2659 = vsel %vm433, %v2624, 0
      %v2662 = vsel %vm433, %v2625, 0
      %v2665 = vsel %vm433, %v2626, 0
      %v2668 = vsel %vm433, %v2627, 0
      %v2671 = vsel %vm433, %v2628, 0
      %v2674 = vsel %vm433, %v2629, 0
      %v2677 = vsel %vm433, %v2630, 0
      %v2680 = vsel %vm433, %v2631, 0
      %v2683 = vsel %vm433, %v2632, 0
      %v2686 = vsel %vm433, %v2633, 0
      %v2689 = vsel %vm433, %v2634, 0
      %v2692 = vsel %vm433, %v2635, 0
      %v2695 = vsel %vm433, %v2636, 0
      %v2698 = vsel %vm433, %v2637, 0
      %v2701 = vsel %vm433, %v2638, 0
      %v2704 = vsel %vm433, %v2639, 0
      %v2707 = vsel %vm433, %v2640, 0
      %v2710 = vsel %vm433, %v2641, 0
      %v2713 = vsel %vm433, %v2642, 0
      %v2716 = vsel %vm433, %v2643, 0
      %v2719 = vsel %vm433, %v2644, 0
      %v2722 = vsel %vm433, %v2645, 0
      %v2725 = vsel %vm433, %v2646, 0
      %v2728 = vsel %vm433, %v2647, 0
      %v2731 = vsel %vm433, %v2648, 0
      %v2734 = vsel %vm433, %v2649, 0
      %v2737 = vsel %vm433, %v2650, 0
      %v2740 = vsel %vm433, %v2651, 0
      %v2743 = vsel %vm433, %v2652, 0
      %v2746 = vsel %vm433, %v2653, 0
      %v2749 = vsel %vm433, %v2654, 0
      %v2752 = vsel %vm433, %v2655, 0
      %2754 = vmatprep.subr.mxu0 0.0
      %2755 = vmatpush1.msra.mxu0 0.0
      %2756 = vmatprep.subr.mxu0 0.0
      %2757 = vmatpush1.msra.mxu0 0.0
      %2758 = vmatprep.subr.mxu0 0.0
      %2759 = vmatpush1.msra.mxu0 0.0
      %2760 = vmatprep.subr.mxu0 0.0
      %2761 = vmatpush1.msra.mxu0 0.0
      %2762 = vmatprep.subr.mxu0 0.0
      %2763 = vmatpush1.msra.mxu0 0.0
      %2764 = vmatprep.subr.mxu0 0.0
      %2765 = vmatpush1.msra.mxu0 0.0
      %2766 = vmatprep.subr.mxu0 0.0
      %2767 = vmatpush1.msra.mxu0 0.0
      %2768 = vmatprep.subr.mxu0 0.0
      %2769 = vmatpush1.msra.mxu0 0.0
      %2770 = vmatprep.subr.mxu0 0.0
      %2771 = vmatpush1.msra.mxu0 0.0
      %2772 = vmatprep.subr.mxu0 0.0
      %2773 = vmatpush1.msra.mxu0 0.0
      %2774 = vmatprep.subr.mxu0 0.0
      %2775 = vmatpush1.msra.mxu0 0.0
      %2776 = vmatprep.subr.mxu0 0.0
      %2777 = vmatpush1.msra.mxu0 0.0
      %2778 = vmatprep.subr.mxu0 0.0
      %2779 = vmatpush1.msra.mxu0 0.0
      %2780 = vmatprep.subr.mxu0 0.0
      %2781 = vmatpush1.msra.mxu0 0.0
      %2782 = vmatprep.subr.mxu0 0.0
      %2783 = vmatpush1.msra.mxu0 0.0
      %2784 = vmatprep.subr.mxu0 0.0
      %2785 = vmatpush1.msra.mxu0 %v2657
      %2786 = vmatprep.subr.mxu0 0.0
      %2787 = vmatpush2.msra.mxu0 0.0
      %2788 = vmatprep.subr.mxu0 0.0
      %2789 = vmatpush2.msra.mxu0 0.0
      %2790 = vmatprep.subr.mxu0 0.0
      %2791 = vmatpush2.msra.mxu0 0.0
      %2792 = vmatprep.subr.mxu0 0.0
      %2793 = vmatpush2.msra.mxu0 0.0
      %2794 = vmatprep.subr.mxu0 0.0
      %2795 = vmatpush2.msra.mxu0 0.0
      %2796 = vmatprep.subr.mxu0 0.0
      %2797 = vmatpush2.msra.mxu0 0.0
      %2798 = vmatprep.subr.mxu0 0.0
      %2799 = vmatpush2.msra.mxu0 0.0
      %2800 = vmatprep.subr.mxu0 0.0
      %2801 = vmatpush2.msra.mxu0 0.0
      %2802 = vmatprep.subr.mxu0 0.0
      %2803 = vmatpush2.msra.mxu0 0.0
      %2804 = vmatprep.subr.mxu0 0.0
      %2805 = vmatpush2.msra.mxu0 0.0
      %2806 = vmatprep.subr.mxu0 0.0
      %2807 = vmatpush2.msra.mxu0 0.0
      %2808 = vmatprep.subr.mxu0 0.0
      %2809 = vmatpush2.msra.mxu0 0.0
      %2810 = vmatprep.subr.mxu0 0.0
      %2811 = vmatpush2.msra.mxu0 0.0
      %2812 = vmatprep.subr.mxu0 0.0
      %2813 = vmatpush2.msra.mxu0 0.0
      %2814 = vmatprep.subr.mxu0 0.0
      %2815 = vmatpush2.msra.mxu0 0.0
      %2816 = vmatprep.subr.mxu0 0.0
      %2817 = vmatpush2.msra.mxu0 0.0
      %2818 = vmatprep.mubr.f32.mxu0 0.0
      %2819 = vmatmul.mubr.f32.gmra.mxu0 %v2659
      %v2820 = vpop.f32.mrf.mxu0
      %v2821 = vadd.f32 0.0, %v2820
      %v2822 = vpop.f32.mrf.mxu0
      %2823 = vmatprep.mubr.f32.mxu0 0.0
      %2824 = vmatmul.mubr.f32.gmra.mxu0 %v2662
      %v2825 = vpop.f32.mrf.mxu0
      %v2826 = vadd.f32 0.0, %v2825
      %v2827 = vpop.f32.mrf.mxu0
      %2828 = vmatprep.mubr.f32.mxu0 0.0
      %2829 = vmatmul.mubr.f32.gmra.mxu0 %v2665
      %v2830 = vpop.f32.mrf.mxu0
      %v2831 = vadd.f32 0.0, %v2830
      %v2832 = vpop.f32.mrf.mxu0
      %2833 = vmatprep.mubr.f32.mxu0 0.0
      %2834 = vmatmul.mubr.f32.gmra.mxu0 %v2668
      %v2835 = vpop.f32.mrf.mxu0
      %v2836 = vadd.f32 0.0, %v2835
      %v2837 = vpop.f32.mrf.mxu0
      %2838 = vmatprep.mubr.f32.mxu0 0.0
      %2839 = vmatmul.mubr.f32.gmra.mxu0 %v2671
      %v2840 = vpop.f32.mrf.mxu0
      %v2841 = vadd.f32 0.0, %v2840
      %v2842 = vpop.f32.mrf.mxu0
      %2843 = vmatprep.mubr.f32.mxu0 0.0
      %2844 = vmatmul.mubr.f32.gmra.mxu0 %v2674
      %v2845 = vpop.f32.mrf.mxu0
      %v2846 = vadd.f32 0.0, %v2845
      %v2847 = vpop.f32.mrf.mxu0
      %2848 = vmatprep.mubr.f32.mxu0 0.0
      %2849 = vmatmul.mubr.f32.gmra.mxu0 %v2677
      %v2850 = vpop.f32.mrf.mxu0
      %v2851 = vadd.f32 0.0, %v2850
      %v2852 = vpop.f32.mrf.mxu0
      %2853 = vmatprep.mubr.f32.mxu0 0.0
      %2854 = vmatmul.mubr.f32.gmra.mxu0 %v2680
      %v2855 = vpop.f32.mrf.mxu0
      %v2856 = vadd.f32 0.0, %v2855
      %v2857 = vpop.f32.mrf.mxu0
      %2858 = vmatprep.mubr.f32.mxu0 0.0
      %2859 = vmatmul.mubr.f32.gmra.mxu0 %v2683
      %v2860 = vpop.f32.mrf.mxu0
      %v2861 = vadd.f32 0.0, %v2860
      %v2862 = vpop.f32.mrf.mxu0
      %2863 = vmatprep.mubr.f32.mxu0 0.0
      %2864 = vmatmul.mubr.f32.gmra.mxu0 %v2686
      %v2865 = vpop.f32.mrf.mxu0
      %v2866 = vadd.f32 0.0, %v2865
      %v2867 = vpop.f32.mrf.mxu0
      %2868 = vmatprep.mubr.f32.mxu0 0.0
      %2869 = vmatmul.mubr.f32.gmra.mxu0 %v2689
      %v2870 = vpop.f32.mrf.mxu0
      %v2871 = vadd.f32 0.0, %v2870
      %v2872 = vpop.f32.mrf.mxu0
      %2873 = vmatprep.mubr.f32.mxu0 0.0
      %2874 = vmatmul.mubr.f32.gmra.mxu0 %v2692
      %v2875 = vpop.f32.mrf.mxu0
      %v2876 = vadd.f32 0.0, %v2875
      %v2877 = vpop.f32.mrf.mxu0
      %2878 = vmatprep.mubr.f32.mxu0 0.0
      %2879 = vmatmul.mubr.f32.gmra.mxu0 %v2695
      %v2880 = vpop.f32.mrf.mxu0
      %v2881 = vadd.f32 0.0, %v2880
      %v2882 = vpop.f32.mrf.mxu0
      %2883 = vmatprep.mubr.f32.mxu0 0.0
      %2884 = vmatmul.mubr.f32.gmra.mxu0 %v2698
      %v2885 = vpop.f32.mrf.mxu0
      %v2886 = vadd.f32 0.0, %v2885
      %v2887 = vpop.f32.mrf.mxu0
      %2888 = vmatprep.mubr.f32.mxu0 0.0
      %2889 = vmatmul.mubr.f32.gmra.mxu0 %v2701
      %v2890 = vpop.f32.mrf.mxu0
      %v2891 = vadd.f32 0.0, %v2890
      %v2892 = vpop.f32.mrf.mxu0
      %2893 = vmatprep.mubr.f32.mxu0 0.0
      %2894 = vmatmul.mubr.f32.gmra.mxu0 %v2704
      %v2895 = vpop.f32.mrf.mxu0
      %v2896 = vadd.f32 0.0, %v2895
      %v2897 = vpop.f32.mrf.mxu0
      %2898 = vmatprep.mubr.f32.mxu0 0.0
      %2899 = vmatmul.mubr.f32.gmra.mxu0 %v2707
      %v2900 = vpop.f32.mrf.mxu0
      %v2901 = vadd.f32 0.0, %v2900
      %v2902 = vpop.f32.mrf.mxu0
      %2903 = vmatprep.mubr.f32.mxu0 0.0
      %2904 = vmatmul.mubr.f32.gmra.mxu0 %v2710
      %v2905 = vpop.f32.mrf.mxu0
      %v2906 = vadd.f32 0.0, %v2905
      %v2907 = vpop.f32.mrf.mxu0
      %2908 = vmatprep.mubr.f32.mxu0 0.0
      %2909 = vmatmul.mubr.f32.gmra.mxu0 %v2713
      %v2910 = vpop.f32.mrf.mxu0
      %v2911 = vadd.f32 0.0, %v2910
      %v2912 = vpop.f32.mrf.mxu0
      %2913 = vmatprep.mubr.f32.mxu0 0.0
      %2914 = vmatmul.mubr.f32.gmra.mxu0 %v2716
      %v2915 = vpop.f32.mrf.mxu0
      %v2916 = vadd.f32 0.0, %v2915
      %v2917 = vpop.f32.mrf.mxu0
      %2918 = vmatprep.mubr.f32.mxu0 0.0
      %2919 = vmatmul.mubr.f32.gmra.mxu0 %v2719
      %v2920 = vpop.f32.mrf.mxu0
      %v2921 = vadd.f32 0.0, %v2920
      %v2922 = vpop.f32.mrf.mxu0
      %2923 = vmatprep.mubr.f32.mxu0 0.0
      %2924 = vmatmul.mubr.f32.gmra.mxu0 %v2722
      %v2925 = vpop.f32.mrf.mxu0
      %v2926 = vadd.f32 0.0, %v2925
      %v2927 = vpop.f32.mrf.mxu0
      %2928 = vmatprep.mubr.f32.mxu0 0.0
      %2929 = vmatmul.mubr.f32.gmra.mxu0 %v2725
      %v2930 = vpop.f32.mrf.mxu0
      %v2931 = vadd.f32 0.0, %v2930
      %v2932 = vpop.f32.mrf.mxu0
      %2933 = vmatprep.mubr.f32.mxu0 0.0
      %2934 = vmatmul.mubr.f32.gmra.mxu0 %v2728
      %v2935 = vpop.f32.mrf.mxu0
      %v2936 = vadd.f32 0.0, %v2935
      %v2937 = vpop.f32.mrf.mxu0
      %2938 = vmatprep.mubr.f32.mxu0 0.0
      %2939 = vmatmul.mubr.f32.gmra.mxu0 %v2731
      %v2940 = vpop.f32.mrf.mxu0
      %v2941 = vadd.f32 0.0, %v2940
      %v2942 = vpop.f32.mrf.mxu0
      %2943 = vmatprep.mubr.f32.mxu0 0.0
      %2944 = vmatmul.mubr.f32.gmra.mxu0 %v2734
      %v2945 = vpop.f32.mrf.mxu0
      %v2946 = vadd.f32 0.0, %v2945
      %v2947 = vpop.f32.mrf.mxu0
      %2948 = vmatprep.mubr.f32.mxu0 0.0
      %2949 = vmatmul.mubr.f32.gmra.mxu0 %v2737
      %v2950 = vpop.f32.mrf.mxu0
      %v2951 = vadd.f32 0.0, %v2950
      %v2952 = vpop.f32.mrf.mxu0
      %2953 = vmatprep.mubr.f32.mxu0 0.0
      %2954 = vmatmul.mubr.f32.gmra.mxu0 %v2740
      %v2955 = vpop.f32.mrf.mxu0
      %v2956 = vadd.f32 0.0, %v2955
      %v2957 = vpop.f32.mrf.mxu0
      %2958 = vmatprep.mubr.f32.mxu0 0.0
      %2959 = vmatmul.mubr.f32.gmra.mxu0 %v2743
      %v2960 = vpop.f32.mrf.mxu0
      %v2961 = vadd.f32 0.0, %v2960
      %v2962 = vpop.f32.mrf.mxu0
      %2963 = vmatprep.mubr.f32.mxu0 0.0
      %2964 = vmatmul.mubr.f32.gmra.mxu0 %v2746
      %v2965 = vpop.f32.mrf.mxu0
      %v2966 = vadd.f32 0.0, %v2965
      %v2967 = vpop.f32.mrf.mxu0
      %2968 = vmatprep.mubr.f32.mxu0 0.0
      %2969 = vmatmul.mubr.f32.gmra.mxu0 %v2749
      %v2970 = vpop.f32.mrf.mxu0
      %v2971 = vadd.f32 0.0, %v2970
      %v2972 = vpop.f32.mrf.mxu0
      %2973 = vmatprep.mubr.f32.mxu0 0.0
      %2974 = vmatmul.mubr.f32.gmra.mxu0 %v2752
      %v2975 = vpop.f32.mrf.mxu0
      %v2976 = vadd.f32 0.0, %v2975
      %v2977 = vpop.f32.mrf.mxu0
      %2978 = vdwg.mxu0
      %v2979 = vadd.f32 %v2592, %v2821
      %v2980 = vadd.f32 %v2593, %v2826
      %v2981 = vadd.f32 %v2594, %v2831
      %v2982 = vadd.f32 %v2595, %v2836
      %v2983 = vadd.f32 %v2596, %v2841
      %v2984 = vadd.f32 %v2597, %v2846
      %v2985 = vadd.f32 %v2598, %v2851
      %v2986 = vadd.f32 %v2599, %v2856
      %v2987 = vadd.f32 %v2600, %v2861
      %v2988 = vadd.f32 %v2601, %v2866
      %v2989 = vadd.f32 %v2602, %v2871
      %v2990 = vadd.f32 %v2603, %v2876
      %v2991 = vadd.f32 %v2604, %v2881
      %v2992 = vadd.f32 %v2605, %v2886
      %v2993 = vadd.f32 %v2606, %v2891
      %v2994 = vadd.f32 %v2607, %v2896
      %v2995 = vadd.f32 %v2608, %v2901
      %v2996 = vadd.f32 %v2609, %v2906
      %v2997 = vadd.f32 %v2610, %v2911
      %v2998 = vadd.f32 %v2611, %v2916
      %v2999 = vadd.f32 %v2612, %v2921
      %v3000 = vadd.f32 %v2613, %v2926
      %v3001 = vadd.f32 %v2614, %v2931
      %v3002 = vadd.f32 %v2615, %v2936
      %v3003 = vadd.f32 %v2616, %v2941
      %v3004 = vadd.f32 %v2617, %v2946
      %v3005 = vadd.f32 %v2618, %v2951
      %v3006 = vadd.f32 %v2619, %v2956
      %v3007 = vadd.f32 %v2620, %v2961
      %v3008 = vadd.f32 %v2621, %v2966
      %v3009 = vadd.f32 %v2622, %v2971
      %v3010 = vadd.f32 %v2623, %v2976
      %v3011 = vld [vmem:[%s346 + $0x1] sm:$0xff]
      %v3012 = vld [vmem:[%s346 + $0x9] sm:$0xff]
      %v3013 = vld [vmem:[%s346 + $0x19] sm:$0xff]
      %v3014 = vld [vmem:[%s346 + $0x21] sm:$0xff]
      %v3015 = vld [vmem:[%s346 + $0x31] sm:$0xff]
      %v3016 = vld [vmem:[%s346 + $0x39] sm:$0xff]
      %v3017 = vld [vmem:[%s346 + $0x49] sm:$0xff]
      %v3018 = vld [vmem:[%s346 + $0x51] sm:$0xff]
      %v3019 = vld [vmem:[%s346 + $0x61] sm:$0xff]
      %v3020 = vld [vmem:[%s346 + $0x69] sm:$0xff]
      %v3021 = vld [vmem:[%s346 + $0x79] sm:$0xff]
      %v3022 = vld [vmem:[%s346 + $0x81] sm:$0xff]
      %v3023 = vld [vmem:[%s346 + $0x91] sm:$0xff]
      %v3024 = vld [vmem:[%s346 + $0x99] sm:$0xff]
      %v3025 = vld [vmem:[%s346 + $0xa9] sm:$0xff]
      %v3026 = vld [vmem:[%s346 + $0xb1] sm:$0xff]
      %v3027 = vld [vmem:[%s346 + $0xc1] sm:$0xff]
      %v3028 = vld [vmem:[%s346 + $0xc9] sm:$0xff]
      %v3029 = vld [vmem:[%s346 + $0xd9] sm:$0xff]
      %v3030 = vld [vmem:[%s346 + $0xe1] sm:$0xff]
      %v3031 = vld [vmem:[%s346 + $0xf1] sm:$0xff]
      %v3032 = vld [vmem:[%s346 + $0xf9] sm:$0xff]
      %v3033 = vld [vmem:[%s346 + $0x109] sm:$0xff]
      %v3034 = vld [vmem:[%s346 + $0x111] sm:$0xff]
      %v3035 = vld [vmem:[%s346 + $0x121] sm:$0xff]
      %v3036 = vld [vmem:[%s346 + $0x129] sm:$0xff]
      %v3037 = vld [vmem:[%s346 + $0x139] sm:$0xff]
      %v3038 = vld [vmem:[%s346 + $0x141] sm:$0xff]
      %v3039 = vld [vmem:[%s346 + $0x151] sm:$0xff]
      %v3040 = vld [vmem:[%s346 + $0x159] sm:$0xff]
      %v3041 = vld [vmem:[%s346 + $0x169] sm:$0xff]
      %v3042 = vld [vmem:[%s346 + $0x171] sm:$0xff]
      %s3043 = scalar_lea.vmem %s3, 56
      %v3044 = vld [vmem:[%s3043] sm:$0xff]
      %v3046 = vsel %vm433, %v3011, 0
      %v3049 = vsel %vm433, %v3012, 0
      %v3052 = vsel %vm433, %v3013, 0
      %v3055 = vsel %vm433, %v3014, 0
      %v3058 = vsel %vm433, %v3015, 0
      %v3061 = vsel %vm433, %v3016, 0
      %v3064 = vsel %vm433, %v3017, 0
      %v3067 = vsel %vm433, %v3018, 0
      %v3070 = vsel %vm433, %v3019, 0
      %v3073 = vsel %vm433, %v3020, 0
      %v3076 = vsel %vm433, %v3021, 0
      %v3079 = vsel %vm433, %v3022, 0
      %v3082 = vsel %vm433, %v3023, 0
      %v3085 = vsel %vm433, %v3024, 0
      %v3088 = vsel %vm433, %v3025, 0
      %v3091 = vsel %vm433, %v3026, 0
      %v3094 = vsel %vm433, %v3027, 0
      %v3097 = vsel %vm433, %v3028, 0
      %v3100 = vsel %vm433, %v3029, 0
      %v3103 = vsel %vm433, %v3030, 0
      %v3106 = vsel %vm433, %v3031, 0
      %v3109 = vsel %vm433, %v3032, 0
      %v3112 = vsel %vm433, %v3033, 0
      %v3115 = vsel %vm433, %v3034, 0
      %v3118 = vsel %vm433, %v3035, 0
      %v3121 = vsel %vm433, %v3036, 0
      %v3124 = vsel %vm433, %v3037, 0
      %v3127 = vsel %vm433, %v3038, 0
      %v3130 = vsel %vm433, %v3039, 0
      %v3133 = vsel %vm433, %v3040, 0
      %v3136 = vsel %vm433, %v3041, 0
      %v3139 = vsel %vm433, %v3042, 0
      %3141 = vmatprep.subr.mxu0 0.0
      %3142 = vmatpush1.msra.mxu0 0.0
      %3143 = vmatprep.subr.mxu0 0.0
      %3144 = vmatpush1.msra.mxu0 0.0
      %3145 = vmatprep.subr.mxu0 0.0
      %3146 = vmatpush1.msra.mxu0 0.0
      %3147 = vmatprep.subr.mxu0 0.0
      %3148 = vmatpush1.msra.mxu0 0.0
      %3149 = vmatprep.subr.mxu0 0.0
      %3150 = vmatpush1.msra.mxu0 0.0
      %3151 = vmatprep.subr.mxu0 0.0
      %3152 = vmatpush1.msra.mxu0 0.0
      %3153 = vmatprep.subr.mxu0 0.0
      %3154 = vmatpush1.msra.mxu0 0.0
      %3155 = vmatprep.subr.mxu0 0.0
      %3156 = vmatpush1.msra.mxu0 0.0
      %3157 = vmatprep.subr.mxu0 0.0
      %3158 = vmatpush1.msra.mxu0 0.0
      %3159 = vmatprep.subr.mxu0 0.0
      %3160 = vmatpush1.msra.mxu0 0.0
      %3161 = vmatprep.subr.mxu0 0.0
      %3162 = vmatpush1.msra.mxu0 0.0
      %3163 = vmatprep.subr.mxu0 0.0
      %3164 = vmatpush1.msra.mxu0 0.0
      %3165 = vmatprep.subr.mxu0 0.0
      %3166 = vmatpush1.msra.mxu0 0.0
      %3167 = vmatprep.subr.mxu0 0.0
      %3168 = vmatpush1.msra.mxu0 0.0
      %3169 = vmatprep.subr.mxu0 0.0
      %3170 = vmatpush1.msra.mxu0 0.0
      %3171 = vmatprep.subr.mxu0 0.0
      %3172 = vmatpush1.msra.mxu0 %v3044
      %3173 = vmatprep.subr.mxu0 0.0
      %3174 = vmatpush2.msra.mxu0 0.0
      %3175 = vmatprep.subr.mxu0 0.0
      %3176 = vmatpush2.msra.mxu0 0.0
      %3177 = vmatprep.subr.mxu0 0.0
      %3178 = vmatpush2.msra.mxu0 0.0
      %3179 = vmatprep.subr.mxu0 0.0
      %3180 = vmatpush2.msra.mxu0 0.0
      %3181 = vmatprep.subr.mxu0 0.0
      %3182 = vmatpush2.msra.mxu0 0.0
      %3183 = vmatprep.subr.mxu0 0.0
      %3184 = vmatpush2.msra.mxu0 0.0
      %3185 = vmatprep.subr.mxu0 0.0
      %3186 = vmatpush2.msra.mxu0 0.0
      %3187 = vmatprep.subr.mxu0 0.0
      %3188 = vmatpush2.msra.mxu0 0.0
      %3189 = vmatprep.subr.mxu0 0.0
      %3190 = vmatpush2.msra.mxu0 0.0
      %3191 = vmatprep.subr.mxu0 0.0
      %3192 = vmatpush2.msra.mxu0 0.0
      %3193 = vmatprep.subr.mxu0 0.0
      %3194 = vmatpush2.msra.mxu0 0.0
      %3195 = vmatprep.subr.mxu0 0.0
      %3196 = vmatpush2.msra.mxu0 0.0
      %3197 = vmatprep.subr.mxu0 0.0
      %3198 = vmatpush2.msra.mxu0 0.0
      %3199 = vmatprep.subr.mxu0 0.0
      %3200 = vmatpush2.msra.mxu0 0.0
      %3201 = vmatprep.subr.mxu0 0.0
      %3202 = vmatpush2.msra.mxu0 0.0
      %3203 = vmatprep.subr.mxu0 0.0
      %3204 = vmatpush2.msra.mxu0 0.0
      %3205 = vmatprep.mubr.f32.mxu0 0.0
      %3206 = vmatmul.mubr.f32.gmra.mxu0 %v3046
      %v3207 = vpop.f32.mrf.mxu0
      %v3208 = vadd.f32 0.0, %v3207
      %v3209 = vpop.f32.mrf.mxu0
      %3210 = vmatprep.mubr.f32.mxu0 0.0
      %3211 = vmatmul.mubr.f32.gmra.mxu0 %v3049
      %v3212 = vpop.f32.mrf.mxu0
      %v3213 = vadd.f32 0.0, %v3212
      %v3214 = vpop.f32.mrf.mxu0
      %3215 = vmatprep.mubr.f32.mxu0 0.0
      %3216 = vmatmul.mubr.f32.gmra.mxu0 %v3052
      %v3217 = vpop.f32.mrf.mxu0
      %v3218 = vadd.f32 0.0, %v3217
      %v3219 = vpop.f32.mrf.mxu0
      %3220 = vmatprep.mubr.f32.mxu0 0.0
      %3221 = vmatmul.mubr.f32.gmra.mxu0 %v3055
      %v3222 = vpop.f32.mrf.mxu0
      %v3223 = vadd.f32 0.0, %v3222
      %v3224 = vpop.f32.mrf.mxu0
      %3225 = vmatprep.mubr.f32.mxu0 0.0
      %3226 = vmatmul.mubr.f32.gmra.mxu0 %v3058
      %v3227 = vpop.f32.mrf.mxu0
      %v3228 = vadd.f32 0.0, %v3227
      %v3229 = vpop.f32.mrf.mxu0
      %3230 = vmatprep.mubr.f32.mxu0 0.0
      %3231 = vmatmul.mubr.f32.gmra.mxu0 %v3061
      %v3232 = vpop.f32.mrf.mxu0
      %v3233 = vadd.f32 0.0, %v3232
      %v3234 = vpop.f32.mrf.mxu0
      %3235 = vmatprep.mubr.f32.mxu0 0.0
      %3236 = vmatmul.mubr.f32.gmra.mxu0 %v3064
      %v3237 = vpop.f32.mrf.mxu0
      %v3238 = vadd.f32 0.0, %v3237
      %v3239 = vpop.f32.mrf.mxu0
      %3240 = vmatprep.mubr.f32.mxu0 0.0
      %3241 = vmatmul.mubr.f32.gmra.mxu0 %v3067
      %v3242 = vpop.f32.mrf.mxu0
      %v3243 = vadd.f32 0.0, %v3242
      %v3244 = vpop.f32.mrf.mxu0
      %3245 = vmatprep.mubr.f32.mxu0 0.0
      %3246 = vmatmul.mubr.f32.gmra.mxu0 %v3070
      %v3247 = vpop.f32.mrf.mxu0
      %v3248 = vadd.f32 0.0, %v3247
      %v3249 = vpop.f32.mrf.mxu0
      %3250 = vmatprep.mubr.f32.mxu0 0.0
      %3251 = vmatmul.mubr.f32.gmra.mxu0 %v3073
      %v3252 = vpop.f32.mrf.mxu0
      %v3253 = vadd.f32 0.0, %v3252
      %v3254 = vpop.f32.mrf.mxu0
      %3255 = vmatprep.mubr.f32.mxu0 0.0
      %3256 = vmatmul.mubr.f32.gmra.mxu0 %v3076
      %v3257 = vpop.f32.mrf.mxu0
      %v3258 = vadd.f32 0.0, %v3257
      %v3259 = vpop.f32.mrf.mxu0
      %3260 = vmatprep.mubr.f32.mxu0 0.0
      %3261 = vmatmul.mubr.f32.gmra.mxu0 %v3079
      %v3262 = vpop.f32.mrf.mxu0
      %v3263 = vadd.f32 0.0, %v3262
      %v3264 = vpop.f32.mrf.mxu0
      %3265 = vmatprep.mubr.f32.mxu0 0.0
      %3266 = vmatmul.mubr.f32.gmra.mxu0 %v3082
      %v3267 = vpop.f32.mrf.mxu0
      %v3268 = vadd.f32 0.0, %v3267
      %v3269 = vpop.f32.mrf.mxu0
      %3270 = vmatprep.mubr.f32.mxu0 0.0
      %3271 = vmatmul.mubr.f32.gmra.mxu0 %v3085
      %v3272 = vpop.f32.mrf.mxu0
      %v3273 = vadd.f32 0.0, %v3272
      %v3274 = vpop.f32.mrf.mxu0
      %3275 = vmatprep.mubr.f32.mxu0 0.0
      %3276 = vmatmul.mubr.f32.gmra.mxu0 %v3088
      %v3277 = vpop.f32.mrf.mxu0
      %v3278 = vadd.f32 0.0, %v3277
      %v3279 = vpop.f32.mrf.mxu0
      %3280 = vmatprep.mubr.f32.mxu0 0.0
      %3281 = vmatmul.mubr.f32.gmra.mxu0 %v3091
      %v3282 = vpop.f32.mrf.mxu0
      %v3283 = vadd.f32 0.0, %v3282
      %v3284 = vpop.f32.mrf.mxu0
      %3285 = vmatprep.mubr.f32.mxu0 0.0
      %3286 = vmatmul.mubr.f32.gmra.mxu0 %v3094
      %v3287 = vpop.f32.mrf.mxu0
      %v3288 = vadd.f32 0.0, %v3287
      %v3289 = vpop.f32.mrf.mxu0
      %3290 = vmatprep.mubr.f32.mxu0 0.0
      %3291 = vmatmul.mubr.f32.gmra.mxu0 %v3097
      %v3292 = vpop.f32.mrf.mxu0
      %v3293 = vadd.f32 0.0, %v3292
      %v3294 = vpop.f32.mrf.mxu0
      %3295 = vmatprep.mubr.f32.mxu0 0.0
      %3296 = vmatmul.mubr.f32.gmra.mxu0 %v3100
      %v3297 = vpop.f32.mrf.mxu0
      %v3298 = vadd.f32 0.0, %v3297
      %v3299 = vpop.f32.mrf.mxu0
      %3300 = vmatprep.mubr.f32.mxu0 0.0
      %3301 = vmatmul.mubr.f32.gmra.mxu0 %v3103
      %v3302 = vpop.f32.mrf.mxu0
      %v3303 = vadd.f32 0.0, %v3302
      %v3304 = vpop.f32.mrf.mxu0
      %3305 = vmatprep.mubr.f32.mxu0 0.0
      %3306 = vmatmul.mubr.f32.gmra.mxu0 %v3106
      %v3307 = vpop.f32.mrf.mxu0
      %v3308 = vadd.f32 0.0, %v3307
      %v3309 = vpop.f32.mrf.mxu0
      %3310 = vmatprep.mubr.f32.mxu0 0.0
      %3311 = vmatmul.mubr.f32.gmra.mxu0 %v3109
      %v3312 = vpop.f32.mrf.mxu0
      %v3313 = vadd.f32 0.0, %v3312
      %v3314 = vpop.f32.mrf.mxu0
      %3315 = vmatprep.mubr.f32.mxu0 0.0
      %3316 = vmatmul.mubr.f32.gmra.mxu0 %v3112
      %v3317 = vpop.f32.mrf.mxu0
      %v3318 = vadd.f32 0.0, %v3317
      %v3319 = vpop.f32.mrf.mxu0
      %3320 = vmatprep.mubr.f32.mxu0 0.0
      %3321 = vmatmul.mubr.f32.gmra.mxu0 %v3115
      %v3322 = vpop.f32.mrf.mxu0
      %v3323 = vadd.f32 0.0, %v3322
      %v3324 = vpop.f32.mrf.mxu0
      %3325 = vmatprep.mubr.f32.mxu0 0.0
      %3326 = vmatmul.mubr.f32.gmra.mxu0 %v3118
      %v3327 = vpop.f32.mrf.mxu0
      %v3328 = vadd.f32 0.0, %v3327
      %v3329 = vpop.f32.mrf.mxu0
      %3330 = vmatprep.mubr.f32.mxu0 0.0
      %3331 = vmatmul.mubr.f32.gmra.mxu0 %v3121
      %v3332 = vpop.f32.mrf.mxu0
      %v3333 = vadd.f32 0.0, %v3332
      %v3334 = vpop.f32.mrf.mxu0
      %3335 = vmatprep.mubr.f32.mxu0 0.0
      %3336 = vmatmul.mubr.f32.gmra.mxu0 %v3124
      %v3337 = vpop.f32.mrf.mxu0
      %v3338 = vadd.f32 0.0, %v3337
      %v3339 = vpop.f32.mrf.mxu0
      %3340 = vmatprep.mubr.f32.mxu0 0.0
      %3341 = vmatmul.mubr.f32.gmra.mxu0 %v3127
      %v3342 = vpop.f32.mrf.mxu0
      %v3343 = vadd.f32 0.0, %v3342
      %v3344 = vpop.f32.mrf.mxu0
      %3345 = vmatprep.mubr.f32.mxu0 0.0
      %3346 = vmatmul.mubr.f32.gmra.mxu0 %v3130
      %v3347 = vpop.f32.mrf.mxu0
      %v3348 = vadd.f32 0.0, %v3347
      %v3349 = vpop.f32.mrf.mxu0
      %3350 = vmatprep.mubr.f32.mxu0 0.0
      %3351 = vmatmul.mubr.f32.gmra.mxu0 %v3133
      %v3352 = vpop.f32.mrf.mxu0
      %v3353 = vadd.f32 0.0, %v3352
      %v3354 = vpop.f32.mrf.mxu0
      %3355 = vmatprep.mubr.f32.mxu0 0.0
      %3356 = vmatmul.mubr.f32.gmra.mxu0 %v3136
      %v3357 = vpop.f32.mrf.mxu0
      %v3358 = vadd.f32 0.0, %v3357
      %v3359 = vpop.f32.mrf.mxu0
      %3360 = vmatprep.mubr.f32.mxu0 0.0
      %3361 = vmatmul.mubr.f32.gmra.mxu0 %v3139
      %v3362 = vpop.f32.mrf.mxu0
      %v3363 = vadd.f32 0.0, %v3362
      %v3364 = vpop.f32.mrf.mxu0
      %3365 = vdwg.mxu0
      %v3366 = vadd.f32 %v2979, %v3208
      %v3367 = vadd.f32 %v2980, %v3213
      %v3368 = vadd.f32 %v2981, %v3218
      %v3369 = vadd.f32 %v2982, %v3223
      %v3370 = vadd.f32 %v2983, %v3228
      %v3371 = vadd.f32 %v2984, %v3233
      %v3372 = vadd.f32 %v2985, %v3238
      %v3373 = vadd.f32 %v2986, %v3243
      %v3374 = vadd.f32 %v2987, %v3248
      %v3375 = vadd.f32 %v2988, %v3253
      %v3376 = vadd.f32 %v2989, %v3258
      %v3377 = vadd.f32 %v2990, %v3263
      %v3378 = vadd.f32 %v2991, %v3268
      %v3379 = vadd.f32 %v2992, %v3273
      %v3380 = vadd.f32 %v2993, %v3278
      %v3381 = vadd.f32 %v2994, %v3283
      %v3382 = vadd.f32 %v2995, %v3288
      %v3383 = vadd.f32 %v2996, %v3293
      %v3384 = vadd.f32 %v2997, %v3298
      %v3385 = vadd.f32 %v2998, %v3303
      %v3386 = vadd.f32 %v2999, %v3308
      %v3387 = vadd.f32 %v3000, %v3313
      %v3388 = vadd.f32 %v3001, %v3318
      %v3389 = vadd.f32 %v3002, %v3323
      %v3390 = vadd.f32 %v3003, %v3328
      %v3391 = vadd.f32 %v3004, %v3333
      %v3392 = vadd.f32 %v3005, %v3338
      %v3393 = vadd.f32 %v3006, %v3343
      %v3394 = vadd.f32 %v3007, %v3348
      %v3395 = vadd.f32 %v3008, %v3353
      %v3396 = vadd.f32 %v3009, %v3358
      %v3397 = vadd.f32 %v3010, %v3363
      %v3398 = vld [vmem:[%s346 + $0x2] sm:$0xff]
      %v3399 = vld [vmem:[%s346 + $0xa] sm:$0xff]
      %v3400 = vld [vmem:[%s346 + $0x1a] sm:$0xff]
      %v3401 = vld [vmem:[%s346 + $0x22] sm:$0xff]
      %v3402 = vld [vmem:[%s346 + $0x32] sm:$0xff]
      %v3403 = vld [vmem:[%s346 + $0x3a] sm:$0xff]
      %v3404 = vld [vmem:[%s346 + $0x4a] sm:$0xff]
      %v3405 = vld [vmem:[%s346 + $0x52] sm:$0xff]
      %v3406 = vld [vmem:[%s346 + $0x62] sm:$0xff]
      %v3407 = vld [vmem:[%s346 + $0x6a] sm:$0xff]
      %v3408 = vld [vmem:[%s346 + $0x7a] sm:$0xff]
      %v3409 = vld [vmem:[%s346 + $0x82] sm:$0xff]
      %v3410 = vld [vmem:[%s346 + $0x92] sm:$0xff]
      %v3411 = vld [vmem:[%s346 + $0x9a] sm:$0xff]
      %v3412 = vld [vmem:[%s346 + $0xaa] sm:$0xff]
      %v3413 = vld [vmem:[%s346 + $0xb2] sm:$0xff]
      %v3414 = vld [vmem:[%s346 + $0xc2] sm:$0xff]
      %v3415 = vld [vmem:[%s346 + $0xca] sm:$0xff]
      %v3416 = vld [vmem:[%s346 + $0xda] sm:$0xff]
      %v3417 = vld [vmem:[%s346 + $0xe2] sm:$0xff]
      %v3418 = vld [vmem:[%s346 + $0xf2] sm:$0xff]
      %v3419 = vld [vmem:[%s346 + $0xfa] sm:$0xff]
      %v3420 = vld [vmem:[%s346 + $0x10a] sm:$0xff]
      %v3421 = vld [vmem:[%s346 + $0x112] sm:$0xff]
      %v3422 = vld [vmem:[%s346 + $0x122] sm:$0xff]
      %v3423 = vld [vmem:[%s346 + $0x12a] sm:$0xff]
      %v3424 = vld [vmem:[%s346 + $0x13a] sm:$0xff]
      %v3425 = vld [vmem:[%s346 + $0x142] sm:$0xff]
      %v3426 = vld [vmem:[%s346 + $0x152] sm:$0xff]
      %v3427 = vld [vmem:[%s346 + $0x15a] sm:$0xff]
      %v3428 = vld [vmem:[%s346 + $0x16a] sm:$0xff]
      %v3429 = vld [vmem:[%s346 + $0x172] sm:$0xff]
      %s3430 = scalar_lea.vmem %s3, 64
      %v3431 = vld [vmem:[%s3430] sm:$0xff]
      %v3433 = vsel %vm433, %v3398, 0
      %v3436 = vsel %vm433, %v3399, 0
      %v3439 = vsel %vm433, %v3400, 0
      %v3442 = vsel %vm433, %v3401, 0
      %v3445 = vsel %vm433, %v3402, 0
      %v3448 = vsel %vm433, %v3403, 0
      %v3451 = vsel %vm433, %v3404, 0
      %v3454 = vsel %vm433, %v3405, 0
      %v3457 = vsel %vm433, %v3406, 0
      %v3460 = vsel %vm433, %v3407, 0
      %v3463 = vsel %vm433, %v3408, 0
      %v3466 = vsel %vm433, %v3409, 0
      %v3469 = vsel %vm433, %v3410, 0
      %v3472 = vsel %vm433, %v3411, 0
      %v3475 = vsel %vm433, %v3412, 0
      %v3478 = vsel %vm433, %v3413, 0
      %v3481 = vsel %vm433, %v3414, 0
      %v3484 = vsel %vm433, %v3415, 0
      %v3487 = vsel %vm433, %v3416, 0
      %v3490 = vsel %vm433, %v3417, 0
      %v3493 = vsel %vm433, %v3418, 0
      %v3496 = vsel %vm433, %v3419, 0
      %v3499 = vsel %vm433, %v3420, 0
      %v3502 = vsel %vm433, %v3421, 0
      %v3505 = vsel %vm433, %v3422, 0
      %v3508 = vsel %vm433, %v3423, 0
      %v3511 = vsel %vm433, %v3424, 0
      %v3514 = vsel %vm433, %v3425, 0
      %v3517 = vsel %vm433, %v3426, 0
      %v3520 = vsel %vm433, %v3427, 0
      %v3523 = vsel %vm433, %v3428, 0
      %v3526 = vsel %vm433, %v3429, 0
      %3528 = vmatprep.subr.mxu0 0.0
      %3529 = vmatpush1.msra.mxu0 0.0
      %3530 = vmatprep.subr.mxu0 0.0
      %3531 = vmatpush1.msra.mxu0 0.0
      %3532 = vmatprep.subr.mxu0 0.0
      %3533 = vmatpush1.msra.mxu0 0.0
      %3534 = vmatprep.subr.mxu0 0.0
      %3535 = vmatpush1.msra.mxu0 0.0
      %3536 = vmatprep.subr.mxu0 0.0
      %3537 = vmatpush1.msra.mxu0 0.0
      %3538 = vmatprep.subr.mxu0 0.0
      %3539 = vmatpush1.msra.mxu0 0.0
      %3540 = vmatprep.subr.mxu0 0.0
      %3541 = vmatpush1.msra.mxu0 0.0
      %3542 = vmatprep.subr.mxu0 0.0
      %3543 = vmatpush1.msra.mxu0 0.0
      %3544 = vmatprep.subr.mxu0 0.0
      %3545 = vmatpush1.msra.mxu0 0.0
      %3546 = vmatprep.subr.mxu0 0.0
      %3547 = vmatpush1.msra.mxu0 0.0
      %3548 = vmatprep.subr.mxu0 0.0
      %3549 = vmatpush1.msra.mxu0 0.0
      %3550 = vmatprep.subr.mxu0 0.0
      %3551 = vmatpush1.msra.mxu0 0.0
      %3552 = vmatprep.subr.mxu0 0.0
      %3553 = vmatpush1.msra.mxu0 0.0
      %3554 = vmatprep.subr.mxu0 0.0
      %3555 = vmatpush1.msra.mxu0 0.0
      %3556 = vmatprep.subr.mxu0 0.0
      %3557 = vmatpush1.msra.mxu0 0.0
      %3558 = vmatprep.subr.mxu0 0.0
      %3559 = vmatpush1.msra.mxu0 %v3431
      %3560 = vmatprep.subr.mxu0 0.0
      %3561 = vmatpush2.msra.mxu0 0.0
      %3562 = vmatprep.subr.mxu0 0.0
      %3563 = vmatpush2.msra.mxu0 0.0
      %3564 = vmatprep.subr.mxu0 0.0
      %3565 = vmatpush2.msra.mxu0 0.0
      %3566 = vmatprep.subr.mxu0 0.0
      %3567 = vmatpush2.msra.mxu0 0.0
      %3568 = vmatprep.subr.mxu0 0.0
      %3569 = vmatpush2.msra.mxu0 0.0
      %3570 = vmatprep.subr.mxu0 0.0
      %3571 = vmatpush2.msra.mxu0 0.0
      %3572 = vmatprep.subr.mxu0 0.0
      %3573 = vmatpush2.msra.mxu0 0.0
      %3574 = vmatprep.subr.mxu0 0.0
      %3575 = vmatpush2.msra.mxu0 0.0
      %3576 = vmatprep.subr.mxu0 0.0
      %3577 = vmatpush2.msra.mxu0 0.0
      %3578 = vmatprep.subr.mxu0 0.0
      %3579 = vmatpush2.msra.mxu0 0.0
      %3580 = vmatprep.subr.mxu0 0.0
      %3581 = vmatpush2.msra.mxu0 0.0
      %3582 = vmatprep.subr.mxu0 0.0
      %3583 = vmatpush2.msra.mxu0 0.0
      %3584 = vmatprep.subr.mxu0 0.0
      %3585 = vmatpush2.msra.mxu0 0.0
      %3586 = vmatprep.subr.mxu0 0.0
      %3587 = vmatpush2.msra.mxu0 0.0
      %3588 = vmatprep.subr.mxu0 0.0
      %3589 = vmatpush2.msra.mxu0 0.0
      %3590 = vmatprep.subr.mxu0 0.0
      %3591 = vmatpush2.msra.mxu0 0.0
      %3592 = vmatprep.mubr.f32.mxu0 0.0
      %3593 = vmatmul.mubr.f32.gmra.mxu0 %v3433
      %v3594 = vpop.f32.mrf.mxu0
      %v3595 = vadd.f32 0.0, %v3594
      %v3596 = vpop.f32.mrf.mxu0
      %3597 = vmatprep.mubr.f32.mxu0 0.0
      %3598 = vmatmul.mubr.f32.gmra.mxu0 %v3436
      %v3599 = vpop.f32.mrf.mxu0
      %v3600 = vadd.f32 0.0, %v3599
      %v3601 = vpop.f32.mrf.mxu0
      %3602 = vmatprep.mubr.f32.mxu0 0.0
      %3603 = vmatmul.mubr.f32.gmra.mxu0 %v3439
      %v3604 = vpop.f32.mrf.mxu0
      %v3605 = vadd.f32 0.0, %v3604
      %v3606 = vpop.f32.mrf.mxu0
      %3607 = vmatprep.mubr.f32.mxu0 0.0
      %3608 = vmatmul.mubr.f32.gmra.mxu0 %v3442
      %v3609 = vpop.f32.mrf.mxu0
      %v3610 = vadd.f32 0.0, %v3609
      %v3611 = vpop.f32.mrf.mxu0
      %3612 = vmatprep.mubr.f32.mxu0 0.0
      %3613 = vmatmul.mubr.f32.gmra.mxu0 %v3445
      %v3614 = vpop.f32.mrf.mxu0
      %v3615 = vadd.f32 0.0, %v3614
      %v3616 = vpop.f32.mrf.mxu0
      %3617 = vmatprep.mubr.f32.mxu0 0.0
      %3618 = vmatmul.mubr.f32.gmra.mxu0 %v3448
      %v3619 = vpop.f32.mrf.mxu0
      %v3620 = vadd.f32 0.0, %v3619
      %v3621 = vpop.f32.mrf.mxu0
      %3622 = vmatprep.mubr.f32.mxu0 0.0
      %3623 = vmatmul.mubr.f32.gmra.mxu0 %v3451
      %v3624 = vpop.f32.mrf.mxu0
      %v3625 = vadd.f32 0.0, %v3624
      %v3626 = vpop.f32.mrf.mxu0
      %3627 = vmatprep.mubr.f32.mxu0 0.0
      %3628 = vmatmul.mubr.f32.gmra.mxu0 %v3454
      %v3629 = vpop.f32.mrf.mxu0
      %v3630 = vadd.f32 0.0, %v3629
      %v3631 = vpop.f32.mrf.mxu0
      %3632 = vmatprep.mubr.f32.mxu0 0.0
      %3633 = vmatmul.mubr.f32.gmra.mxu0 %v3457
      %v3634 = vpop.f32.mrf.mxu0
      %v3635 = vadd.f32 0.0, %v3634
      %v3636 = vpop.f32.mrf.mxu0
      %3637 = vmatprep.mubr.f32.mxu0 0.0
      %3638 = vmatmul.mubr.f32.gmra.mxu0 %v3460
      %v3639 = vpop.f32.mrf.mxu0
      %v3640 = vadd.f32 0.0, %v3639
      %v3641 = vpop.f32.mrf.mxu0
      %3642 = vmatprep.mubr.f32.mxu0 0.0
      %3643 = vmatmul.mubr.f32.gmra.mxu0 %v3463
      %v3644 = vpop.f32.mrf.mxu0
      %v3645 = vadd.f32 0.0, %v3644
      %v3646 = vpop.f32.mrf.mxu0
      %3647 = vmatprep.mubr.f32.mxu0 0.0
      %3648 = vmatmul.mubr.f32.gmra.mxu0 %v3466
      %v3649 = vpop.f32.mrf.mxu0
      %v3650 = vadd.f32 0.0, %v3649
      %v3651 = vpop.f32.mrf.mxu0
      %3652 = vmatprep.mubr.f32.mxu0 0.0
      %3653 = vmatmul.mubr.f32.gmra.mxu0 %v3469
      %v3654 = vpop.f32.mrf.mxu0
      %v3655 = vadd.f32 0.0, %v3654
      %v3656 = vpop.f32.mrf.mxu0
      %3657 = vmatprep.mubr.f32.mxu0 0.0
      %3658 = vmatmul.mubr.f32.gmra.mxu0 %v3472
      %v3659 = vpop.f32.mrf.mxu0
      %v3660 = vadd.f32 0.0, %v3659
      %v3661 = vpop.f32.mrf.mxu0
      %3662 = vmatprep.mubr.f32.mxu0 0.0
      %3663 = vmatmul.mubr.f32.gmra.mxu0 %v3475
      %v3664 = vpop.f32.mrf.mxu0
      %v3665 = vadd.f32 0.0, %v3664
      %v3666 = vpop.f32.mrf.mxu0
      %3667 = vmatprep.mubr.f32.mxu0 0.0
      %3668 = vmatmul.mubr.f32.gmra.mxu0 %v3478
      %v3669 = vpop.f32.mrf.mxu0
      %v3670 = vadd.f32 0.0, %v3669
      %v3671 = vpop.f32.mrf.mxu0
      %3672 = vmatprep.mubr.f32.mxu0 0.0
      %3673 = vmatmul.mubr.f32.gmra.mxu0 %v3481
      %v3674 = vpop.f32.mrf.mxu0
      %v3675 = vadd.f32 0.0, %v3674
      %v3676 = vpop.f32.mrf.mxu0
      %3677 = vmatprep.mubr.f32.mxu0 0.0
      %3678 = vmatmul.mubr.f32.gmra.mxu0 %v3484
      %v3679 = vpop.f32.mrf.mxu0
      %v3680 = vadd.f32 0.0, %v3679
      %v3681 = vpop.f32.mrf.mxu0
      %3682 = vmatprep.mubr.f32.mxu0 0.0
      %3683 = vmatmul.mubr.f32.gmra.mxu0 %v3487
      %v3684 = vpop.f32.mrf.mxu0
      %v3685 = vadd.f32 0.0, %v3684
      %v3686 = vpop.f32.mrf.mxu0
      %3687 = vmatprep.mubr.f32.mxu0 0.0
      %3688 = vmatmul.mubr.f32.gmra.mxu0 %v3490
      %v3689 = vpop.f32.mrf.mxu0
      %v3690 = vadd.f32 0.0, %v3689
      %v3691 = vpop.f32.mrf.mxu0
      %3692 = vmatprep.mubr.f32.mxu0 0.0
      %3693 = vmatmul.mubr.f32.gmra.mxu0 %v3493
      %v3694 = vpop.f32.mrf.mxu0
      %v3695 = vadd.f32 0.0, %v3694
      %v3696 = vpop.f32.mrf.mxu0
      %3697 = vmatprep.mubr.f32.mxu0 0.0
      %3698 = vmatmul.mubr.f32.gmra.mxu0 %v3496
      %v3699 = vpop.f32.mrf.mxu0
      %v3700 = vadd.f32 0.0, %v3699
      %v3701 = vpop.f32.mrf.mxu0
      %3702 = vmatprep.mubr.f32.mxu0 0.0
      %3703 = vmatmul.mubr.f32.gmra.mxu0 %v3499
      %v3704 = vpop.f32.mrf.mxu0
      %v3705 = vadd.f32 0.0, %v3704
      %v3706 = vpop.f32.mrf.mxu0
      %3707 = vmatprep.mubr.f32.mxu0 0.0
      %3708 = vmatmul.mubr.f32.gmra.mxu0 %v3502
      %v3709 = vpop.f32.mrf.mxu0
      %v3710 = vadd.f32 0.0, %v3709
      %v3711 = vpop.f32.mrf.mxu0
      %3712 = vmatprep.mubr.f32.mxu0 0.0
      %3713 = vmatmul.mubr.f32.gmra.mxu0 %v3505
      %v3714 = vpop.f32.mrf.mxu0
      %v3715 = vadd.f32 0.0, %v3714
      %v3716 = vpop.f32.mrf.mxu0
      %3717 = vmatprep.mubr.f32.mxu0 0.0
      %3718 = vmatmul.mubr.f32.gmra.mxu0 %v3508
      %v3719 = vpop.f32.mrf.mxu0
      %v3720 = vadd.f32 0.0, %v3719
      %v3721 = vpop.f32.mrf.mxu0
      %3722 = vmatprep.mubr.f32.mxu0 0.0
      %3723 = vmatmul.mubr.f32.gmra.mxu0 %v3511
      %v3724 = vpop.f32.mrf.mxu0
      %v3725 = vadd.f32 0.0, %v3724
      %v3726 = vpop.f32.mrf.mxu0
      %3727 = vmatprep.mubr.f32.mxu0 0.0
      %3728 = vmatmul.mubr.f32.gmra.mxu0 %v3514
      %v3729 = vpop.f32.mrf.mxu0
      %v3730 = vadd.f32 0.0, %v3729
      %v3731 = vpop.f32.mrf.mxu0
      %3732 = vmatprep.mubr.f32.mxu0 0.0
      %3733 = vmatmul.mubr.f32.gmra.mxu0 %v3517
      %v3734 = vpop.f32.mrf.mxu0
      %v3735 = vadd.f32 0.0, %v3734
      %v3736 = vpop.f32.mrf.mxu0
      %3737 = vmatprep.mubr.f32.mxu0 0.0
      %3738 = vmatmul.mubr.f32.gmra.mxu0 %v3520
      %v3739 = vpop.f32.mrf.mxu0
      %v3740 = vadd.f32 0.0, %v3739
      %v3741 = vpop.f32.mrf.mxu0
      %3742 = vmatprep.mubr.f32.mxu0 0.0
      %3743 = vmatmul.mubr.f32.gmra.mxu0 %v3523
      %v3744 = vpop.f32.mrf.mxu0
      %v3745 = vadd.f32 0.0, %v3744
      %v3746 = vpop.f32.mrf.mxu0
      %3747 = vmatprep.mubr.f32.mxu0 0.0
      %3748 = vmatmul.mubr.f32.gmra.mxu0 %v3526
      %v3749 = vpop.f32.mrf.mxu0
      %v3750 = vadd.f32 0.0, %v3749
      %v3751 = vpop.f32.mrf.mxu0
      %3752 = vdwg.mxu0
      %v3753 = vadd.f32 %v3366, %v3595
      %v3754 = vadd.f32 %v3367, %v3600
      %v3755 = vadd.f32 %v3368, %v3605
      %v3756 = vadd.f32 %v3369, %v3610
      %v3757 = vadd.f32 %v3370, %v3615
      %v3758 = vadd.f32 %v3371, %v3620
      %v3759 = vadd.f32 %v3372, %v3625
      %v3760 = vadd.f32 %v3373, %v3630
      %v3761 = vadd.f32 %v3374, %v3635
      %v3762 = vadd.f32 %v3375, %v3640
      %v3763 = vadd.f32 %v3376, %v3645
      %v3764 = vadd.f32 %v3377, %v3650
      %v3765 = vadd.f32 %v3378, %v3655
      %v3766 = vadd.f32 %v3379, %v3660
      %v3767 = vadd.f32 %v3380, %v3665
      %v3768 = vadd.f32 %v3381, %v3670
      %v3769 = vadd.f32 %v3382, %v3675
      %v3770 = vadd.f32 %v3383, %v3680
      %v3771 = vadd.f32 %v3384, %v3685
      %v3772 = vadd.f32 %v3385, %v3690
      %v3773 = vadd.f32 %v3386, %v3695
      %v3774 = vadd.f32 %v3387, %v3700
      %v3775 = vadd.f32 %v3388, %v3705
      %v3776 = vadd.f32 %v3389, %v3710
      %v3777 = vadd.f32 %v3390, %v3715
      %v3778 = vadd.f32 %v3391, %v3720
      %v3779 = vadd.f32 %v3392, %v3725
      %v3780 = vadd.f32 %v3393, %v3730
      %v3781 = vadd.f32 %v3394, %v3735
      %v3782 = vadd.f32 %v3395, %v3740
      %v3783 = vadd.f32 %v3396, %v3745
      %v3784 = vadd.f32 %v3397, %v3750
      %3785 = vst [vmem:[%s357] sm:$0xff] %v3753
      %3786 = vst [vmem:[%s357 + $0x8] sm:$0xff] %v3754
      %3787 = vst [vmem:[%s357 + $0x10] sm:$0xff] %v3755
      %3788 = vst [vmem:[%s357 + $0x18] sm:$0xff] %v3756
      %3789 = vst [vmem:[%s357 + $0x20] sm:$0xff] %v3757
      %3790 = vst [vmem:[%s357 + $0x28] sm:$0xff] %v3758
      %3791 = vst [vmem:[%s357 + $0x30] sm:$0xff] %v3759
      %3792 = vst [vmem:[%s357 + $0x38] sm:$0xff] %v3760
      %3793 = vst [vmem:[%s357 + $0x40] sm:$0xff] %v3761
      %3794 = vst [vmem:[%s357 + $0x48] sm:$0xff] %v3762
      %3795 = vst [vmem:[%s357 + $0x50] sm:$0xff] %v3763
      %3796 = vst [vmem:[%s357 + $0x58] sm:$0xff] %v3764
      %3797 = vst [vmem:[%s357 + $0x60] sm:$0xff] %v3765
      %3798 = vst [vmem:[%s357 + $0x68] sm:$0xff] %v3766
      %3799 = vst [vmem:[%s357 + $0x70] sm:$0xff] %v3767
      %3800 = vst [vmem:[%s357 + $0x78] sm:$0xff] %v3768
      %3801 = vst [vmem:[%s357 + $0x80] sm:$0xff] %v3769
      %3802 = vst [vmem:[%s357 + $0x88] sm:$0xff] %v3770
      %3803 = vst [vmem:[%s357 + $0x90] sm:$0xff] %v3771
      %3804 = vst [vmem:[%s357 + $0x98] sm:$0xff] %v3772
      %3805 = vst [vmem:[%s357 + $0xa0] sm:$0xff] %v3773
      %3806 = vst [vmem:[%s357 + $0xa8] sm:$0xff] %v3774
      %3807 = vst [vmem:[%s357 + $0xb0] sm:$0xff] %v3775
      %3808 = vst [vmem:[%s357 + $0xb8] sm:$0xff] %v3776
      %3809 = vst [vmem:[%s357 + $0xc0] sm:$0xff] %v3777
      %3810 = vst [vmem:[%s357 + $0xc8] sm:$0xff] %v3778
      %3811 = vst [vmem:[%s357 + $0xd0] sm:$0xff] %v3779
      %3812 = vst [vmem:[%s357 + $0xd8] sm:$0xff] %v3780
      %3813 = vst [vmem:[%s357 + $0xe0] sm:$0xff] %v3781
      %3814 = vst [vmem:[%s357 + $0xe8] sm:$0xff] %v3782
      %3815 = vst [vmem:[%s357 + $0xf0] sm:$0xff] %v3783
      %3816 = vst [vmem:[%s357 + $0xf8] sm:$0xff] %v3784
      %3817 = vmatprep.subr.mxu0 0.0
      %3818 = vmatpush1.msra.mxu0 %v3768
      %3819 = vmatprep.subr.mxu0 0.0
      %3820 = vmatpush1.msra.mxu0 %v3767
      %3821 = vmatprep.subr.mxu0 0.0
      %3822 = vmatpush1.msra.mxu0 %v3766
      %3823 = vmatprep.subr.mxu0 0.0
      %3824 = vmatpush1.msra.mxu0 %v3765
      %3825 = vmatprep.subr.mxu0 0.0
      %3826 = vmatpush1.msra.mxu0 %v3764
      %3827 = vmatprep.subr.mxu0 0.0
      %3828 = vmatpush1.msra.mxu0 %v3763
      %3829 = vmatprep.subr.mxu0 0.0
      %3830 = vmatpush1.msra.mxu0 %v3762
      %3831 = vmatprep.subr.mxu0 0.0
      %3832 = vmatpush1.msra.mxu0 %v3761
      %3833 = vmatprep.subr.mxu0 0.0
      %3834 = vmatpush1.msra.mxu0 %v3760
      %3835 = vmatprep.subr.mxu0 0.0
      %3836 = vmatpush1.msra.mxu0 %v3759
      %3837 = vmatprep.subr.mxu0 0.0
      %3838 = vmatpush1.msra.mxu0 %v3758
      %3839 = vmatprep.subr.mxu0 0.0
      %3840 = vmatpush1.msra.mxu0 %v3757
      %3841 = vmatprep.subr.mxu0 0.0
      %3842 = vmatpush1.msra.mxu0 %v3756
      %3843 = vmatprep.subr.mxu0 0.0
      %3844 = vmatpush1.msra.mxu0 %v3755
      %3845 = vmatprep.subr.mxu0 0.0
      %3846 = vmatpush1.msra.mxu0 %v3754
      %3847 = vmatprep.subr.mxu0 0.0
      %3848 = vmatpush1.msra.mxu0 %v3753
      %3849 = vmatprep.subr.mxu0 0.0
      %3850 = vmatpush2.msra.mxu0 %v3784
      %3851 = vmatprep.subr.mxu0 0.0
      %3852 = vmatpush2.msra.mxu0 %v3783
      %3853 = vmatprep.subr.mxu0 0.0
      %3854 = vmatpush2.msra.mxu0 %v3782
      %3855 = vmatprep.subr.mxu0 0.0
      %3856 = vmatpush2.msra.mxu0 %v3781
      %3857 = vmatprep.subr.mxu0 0.0
      %3858 = vmatpush2.msra.mxu0 %v3780
      %3859 = vmatprep.subr.mxu0 0.0
      %3860 = vmatpush2.msra.mxu0 %v3779
      %3861 = vmatprep.subr.mxu0 0.0
      %3862 = vmatpush2.msra.mxu0 %v3778
      %3863 = vmatprep.subr.mxu0 0.0
      %3864 = vmatpush2.msra.mxu0 %v3777
      %3865 = vmatprep.subr.mxu0 0.0
      %3866 = vmatpush2.msra.mxu0 %v3776
      %3867 = vmatprep.subr.mxu0 0.0
      %3868 = vmatpush2.msra.mxu0 %v3775
      %3869 = vmatprep.subr.mxu0 0.0
      %3870 = vmatpush2.msra.mxu0 %v3774
      %3871 = vmatprep.subr.mxu0 0.0
      %3872 = vmatpush2.msra.mxu0 %v3773
      %3873 = vmatprep.subr.mxu0 0.0
      %3874 = vmatpush2.msra.mxu0 %v3772
      %3875 = vmatprep.subr.mxu0 0.0
      %3876 = vmatpush2.msra.mxu0 %v3771
      %3877 = vmatprep.subr.mxu0 0.0
      %3878 = vmatpush2.msra.mxu0 %v3770
      %3879 = vmatprep.subr.mxu0 0.0
      %3880 = vmatpush2.msra.mxu0 %v3769
      %3881 = vmatprep.mubr.f32.mxu0 1.0
      %3882 = vmatmul.mubr.f32.gmra.mxu0 1.0
      %v3883 = vpop.f32.mrf.mxu0
      %v3884 = vadd.f32 0.0, %v3883
      %v3885 = vpop.f32.mrf.mxu0
      %3886 = vdwg.mxu0
      %v3887 = vmul.f32 %v3753, %v3753
      %v3888 = vmul.f32 %v3754, %v3754
      %v3889 = vmul.f32 %v3755, %v3755
      %v3890 = vmul.f32 %v3756, %v3756
      %v3891 = vmul.f32 %v3757, %v3757
      %v3892 = vmul.f32 %v3758, %v3758
      %v3893 = vmul.f32 %v3759, %v3759
      %v3894 = vmul.f32 %v3760, %v3760
      %v3895 = vmul.f32 %v3761, %v3761
      %v3896 = vmul.f32 %v3762, %v3762
      %v3897 = vmul.f32 %v3763, %v3763
      %v3898 = vmul.f32 %v3764, %v3764
      %v3899 = vmul.f32 %v3765, %v3765
      %v3900 = vmul.f32 %v3766, %v3766
      %v3901 = vmul.f32 %v3767, %v3767
      %v3902 = vmul.f32 %v3768, %v3768
      %v3903 = vmul.f32 %v3769, %v3769
      %v3904 = vmul.f32 %v3770, %v3770
      %v3905 = vmul.f32 %v3771, %v3771
      %v3906 = vmul.f32 %v3772, %v3772
      %v3907 = vmul.f32 %v3773, %v3773
      %v3908 = vmul.f32 %v3774, %v3774
      %v3909 = vmul.f32 %v3775, %v3775
      %v3910 = vmul.f32 %v3776, %v3776
      %v3911 = vmul.f32 %v3777, %v3777
      %v3912 = vmul.f32 %v3778, %v3778
      %v3913 = vmul.f32 %v3779, %v3779
      %v3914 = vmul.f32 %v3780, %v3780
      %v3915 = vmul.f32 %v3781, %v3781
      %v3916 = vmul.f32 %v3782, %v3782
      %v3917 = vmul.f32 %v3783, %v3783
      %v3918 = vmul.f32 %v3784, %v3784
      %3919 = vmatprep.subr.mxu0 0.0
      %3920 = vmatpush1.msra.mxu0 %v3902
      %3921 = vmatprep.subr.mxu0 0.0
      %3922 = vmatpush1.msra.mxu0 %v3901
      %3923 = vmatprep.subr.mxu0 0.0
      %3924 = vmatpush1.msra.mxu0 %v3900
      %3925 = vmatprep.subr.mxu0 0.0
      %3926 = vmatpush1.msra.mxu0 %v3899
      %3927 = vmatprep.subr.mxu0 0.0
      %3928 = vmatpush1.msra.mxu0 %v3898
      %3929 = vmatprep.subr.mxu0 0.0
      %3930 = vmatpush1.msra.mxu0 %v3897
      %3931 = vmatprep.subr.mxu0 0.0
      %3932 = vmatpush1.msra.mxu0 %v3896
      %3933 = vmatprep.subr.mxu0 0.0
      %3934 = vmatpush1.msra.mxu0 %v3895
      %3935 = vmatprep.subr.mxu0 0.0
      %3936 = vmatpush1.msra.mxu0 %v3894
      %3937 = vmatprep.subr.mxu0 0.0
      %3938 = vmatpush1.msra.mxu0 %v3893
      %3939 = vmatprep.subr.mxu0 0.0
      %3940 = vmatpush1.msra.mxu0 %v3892
      %3941 = vmatprep.subr.mxu0 0.0
      %3942 = vmatpush1.msra.mxu0 %v3891
      %3943 = vmatprep.subr.mxu0 0.0
      %3944 = vmatpush1.msra.mxu0 %v3890
      %3945 = vmatprep.subr.mxu0 0.0
      %3946 = vmatpush1.msra.mxu0 %v3889
      %3947 = vmatprep.subr.mxu0 0.0
      %3948 = vmatpush1.msra.mxu0 %v3888
      %3949 = vmatprep.subr.mxu0 0.0
      %3950 = vmatpush1.msra.mxu0 %v3887
      %3951 = vmatprep.subr.mxu0 0.0
      %3952 = vmatpush2.msra.mxu0 %v3918
      %3953 = vmatprep.subr.mxu0 0.0
      %3954 = vmatpush2.msra.mxu0 %v3917
      %3955 = vmatprep.subr.mxu0 0.0
      %3956 = vmatpush2.msra.mxu0 %v3916
      %3957 = vmatprep.subr.mxu0 0.0
      %3958 = vmatpush2.msra.mxu0 %v3915
      %3959 = vmatprep.subr.mxu0 0.0
      %3960 = vmatpush2.msra.mxu0 %v3914
      %3961 = vmatprep.subr.mxu0 0.0
      %3962 = vmatpush2.msra.mxu0 %v3913
      %3963 = vmatprep.subr.mxu0 0.0
      %3964 = vmatpush2.msra.mxu0 %v3912
      %3965 = vmatprep.subr.mxu0 0.0
      %3966 = vmatpush2.msra.mxu0 %v3911
      %3967 = vmatprep.subr.mxu0 0.0
      %3968 = vmatpush2.msra.mxu0 %v3910
      %3969 = vmatprep.subr.mxu0 0.0
      %3970 = vmatpush2.msra.mxu0 %v3909
      %3971 = vmatprep.subr.mxu0 0.0
      %3972 = vmatpush2.msra.mxu0 %v3908
      %3973 = vmatprep.subr.mxu0 0.0
      %3974 = vmatpush2.msra.mxu0 %v3907
      %3975 = vmatprep.subr.mxu0 0.0
      %3976 = vmatpush2.msra.mxu0 %v3906
      %3977 = vmatprep.subr.mxu0 0.0
      %3978 = vmatpush2.msra.mxu0 %v3905
      %3979 = vmatprep.subr.mxu0 0.0
      %3980 = vmatpush2.msra.mxu0 %v3904
      %3981 = vmatprep.subr.mxu0 0.0
      %3982 = vmatpush2.msra.mxu0 %v3903
      %3983 = vmatprep.mubr.f32.mxu0 1.0
      %3984 = vmatmul.mubr.f32.gmra.mxu0 1.0
      %v3985 = vpop.f32.mrf.mxu0
      %v3986 = vadd.f32 0.0, %v3985
      %v3987 = vpop.f32.mrf.mxu0
      %3988 = vdwg.mxu0
      %v3990 = vrot.slane %v3986, 7
      %vm3992 = vcmask 1040384
      %v3993 = vsel %vm3992, %v3884, %v3990
      %3994 = vst [vmem:[%s365] sm:$0x3] %v3993
      %s3995 = smul.u32 16, %s22
      %p3996 = scmp.lt.s32.totalorder %s21, 1
      %s3997 = scalar_select %p3996, %s21, 1
      %p3998 = scmp.lt.s32.totalorder %s3995, 15
      %s3999 = scalar_select %p3998, %s3995, 15
      %s4000 = smul.addr %s3999, 2
      %s4001 = smul.addr %s3997, 32
      %s4002 = sadd.s32 %s4000, %s4001
      %s4003 = smul.addr %s4002, 8
      %s4004 = scalar_lea.vmem %s4, %s4003
      %p4005 = scmp.lt.s32.totalorder %s21, 1
      %s4006 = scalar_select %p4005, %s21, 1
      %p4007 = scmp.lt.s32.totalorder %s22, 0
      %s4008 = scalar_select %p4007, %s22, 0
      %s4009 = sadd.s32 %s4008, %s4006
      %s4010 = smul.addr %s4009, 2
      %s4011 = scalar_lea.vmem %s5, %s4010
      // Predicated region
      $region37: #{attention_refinement.4} parent=35 // pred_check
        %p4012 = pneg %p154
      $region38: #{attention_refinement.4} parent=35 // pred_check_branch
        %4014 = sbr.rel (%p4012) target = $region40
      $region39: #{attention_refinement.4} parent=35 // pred_region
        %s4015 = smul.u32 16, %s22
      $region40: #{attention_refinement.4} parent=35 // pred_fallthru
        _
      // Predicated region
      $region41: #{attention_refinement.4} parent=35 // pred_check
        %p4016 = pneg %p182
      $region42: #{attention_refinement.4} parent=35 // pred_check_branch
        %4018 = sbr.rel (%p4016) target = $region44
      $region43: #{attention_refinement.4} parent=35 // pred_region
        _
      $region44: #{attention_refinement.4} parent=35 // pred_fallthru
        _
    $region36: #{attention_refinement.4} parent=5 // pred_fallthru
      _
    %p4019 = scmp.le.s32.totalorder 2, %s12
    // Predicated region
    $region45: #{attention_refinement.4} parent=5 // pred_check
      %p4020 = pneg %p4019
    $region46: #{attention_refinement.4} parent=5 // pred_check_branch
      %4022 = sbr.rel (%p4020) target = $region48
    $region47: #{attention_refinement.4} parent=5 // pred_region
      %s4023 = ssub.s32 %s12, 2
      // Predicated region
      $region49: #{attention_refinement.4} parent=47 // pred_check
        %p4024 = pneg %p160
      $region50: #{attention_refinement.4} parent=47 // pred_check_branch
        %4026 = sbr.rel (%p4024) target = $region52
      $region51: #{attention_refinement.4} parent=47 // pred_region
        %s4027 = smul.u32 16, %s24
        %p4028 = scmp.lt.s32.totalorder %s23, 1
        %s4029 = scalar_select %p4028, %s23, 1
        %p4030 = scmp.lt.s32.totalorder %s4027, 15
        %s4031 = scalar_select %p4030, %s4027, 15
        %s4032 = smul.addr %s4031, 2
        %s4033 = smul.addr %s4029, 32
        %s4034 = sadd.s32 %s4032, %s4033
        %s4035 = smul.addr %s4034, 8
        %s4036 = scalar_lea.vmem %s4, %s4035
      $region52: #{attention_refinement.4} parent=47 // pred_fallthru
        _
      // Predicated region
      $region53: #{attention_refinement.4} parent=47 // pred_check
        %p4037 = pneg %p188
      $region54: #{attention_refinement.4} parent=47 // pred_check_branch
        %4039 = sbr.rel (%p4037) target = $region56
      $region55: #{attention_refinement.4} parent=47 // pred_region
        %p4040 = scmp.lt.s32.totalorder %s23, 1
        %s4041 = scalar_select %p4040, %s23, 1
        %p4042 = scmp.lt.s32.totalorder %s24, 0
        %s4043 = scalar_select %p4042, %s24, 0
        %s4044 = sadd.s32 %s4043, %s4041
        %s4045 = smul.addr %s4044, 2
        %s4046 = scalar_lea.vmem %s5, %s4045
      $region56: #{attention_refinement.4} parent=47 // pred_fallthru
        _
    $region48: #{attention_refinement.4} parent=5 // pred_fallthru
      _
  $region6: #{attention_refinement.4} parent=0 // loop_footer
    %s16 = sadd.s32 1, %s12
  $region7: #{attention_refinement.4} parent=0 // loop_footer_branch
    %11 = sbr.rel target = $region3
  $region8: #{attention_refinement.4} parent=0 // loop_exit
    _

</llo_original>
